<compile_context>
chip_gen: v6e
topology: v6e:2x2x1
jax: 0.10.0
libtpu: 0.0.40
codegen_flags: <defaults>
</compile_context>

<pallas_src>
import jax
import jax.numpy as jnp
from jax.experimental import pallas as pl
from jax.experimental.pallas import tpu as pltpu


def fc_kernel(x_ref, w_ref, b_ref, o_ref):
    # One reduction step over the full K: out = x @ W + b, f32 accumulation.
    xv = x_ref[...].astype(w_ref.dtype)  # in-kernel cast (f32 -> bf16) is free
    o_ref[...] = (
        jnp.dot(xv, w_ref[...], preferred_element_type=jnp.float32)
        + b_ref[...]
    )


def _default_col_splits():
    """2-way Z split only on dual-TensorCore chips (v7x); 1 tile otherwise."""
    try:
        kind = jax.devices()[0].device_kind.lower()
        if "v7" in kind or "7x" in kind or "tpu7" in kind:
            return 2
    except Exception:
        pass
    return 1


def prepare_fc_params(w, b, *, weight_dtype=jnp.bfloat16):
    """Cast weights ONCE at init (cached outside the per-call path).

    w: (K, Z) f32, b: (Z,) f32  ->  (w_c (K, Z) weight_dtype, b2d (1, Z) f32).
    Pass weight_dtype=jnp.float32 for bit-level parity with the f32 nn.Linear.
    """
    return w.astype(weight_dtype), b.astype(jnp.float32).reshape(1, -1)


def fc_forward(x, w_c, b2d, *, col_splits=None):
    """x: (B, K) f32; w_c: (K, Z); b2d: (1, Z) f32 -> (B, Z) f32."""
    B, K = x.shape
    K2, Z = w_c.shape
    assert K == K2 and b2d.shape == (1, Z)

    if col_splits is None:
        col_splits = _default_col_splits()

    if col_splits <= 1:
        tz = Z                     # one contiguous W DMA, grid = (1,)
    else:
        # Round the per-core column tile up to a lane multiple (128).
        tz = max(128, ((pl.cdiv(Z, col_splits) + 127) // 128) * 128)
        tz = min(tz, Z)
    grid_z = pl.cdiv(Z, tz)

    isz_w = jnp.dtype(w_c.dtype).itemsize
    cost = pl.CostEstimate(
        flops=2 * B * K * Z,
        transcendentals=0,
        bytes_accessed=K * Z * isz_w + B * K * 4 + B * Z * 4 + Z * 4,
    )

    return pl.pallas_call(
        fc_kernel,
        out_shape=jax.ShapeDtypeStruct((B, Z), jnp.float32),
        grid_spec=pltpu.PrefetchScalarGridSpec(
            num_scalar_prefetch=0,
            grid=(grid_z,),
            in_specs=[
                # x is tiny (32 KiB): one fetch, resident across Z tiles.
                pl.BlockSpec((B, K), lambda z: (0, 0)),
                # W: the dominant HBM traffic.
                pl.BlockSpec((K, tz), lambda z: (0, z)),
                # bias: per-Z-tile strip.
                pl.BlockSpec((1, tz), lambda z: (0, z)),
            ],
            out_specs=pl.BlockSpec((B, tz), lambda z: (0, z)),
        ),
        compiler_params=pltpu.CompilerParams(
            dimension_semantics=("parallel",),
        ),
        cost_estimate=cost,
    )(x, w_c, b2d)


if __name__ == "__main__":
    # Module defaults: input_size=4096, z_size=404. Small batch of 2.
    B, INPUT_SIZE, Z_SIZE = 2, 4096, 404

    key = jax.random.PRNGKey(0)
    kx, kw, kb = jax.random.split(key, 3)

    # Deterministic init mimicking nn.Linear (uniform +-1/sqrt(fan_in)).
    bound = 1.0 / (INPUT_SIZE ** 0.5)
    x = jax.random.normal(kx, (B, INPUT_SIZE), dtype=jnp.float32)
    w = jax.random.uniform(
        kw, (INPUT_SIZE, Z_SIZE), dtype=jnp.float32, minval=-bound, maxval=bound
    )
    b = jax.random.uniform(
        kb, (Z_SIZE,), dtype=jnp.float32, minval=-bound, maxval=bound
    )

    # Cast weights once (init-time), keep them cached across calls.
    w_c, b2d = prepare_fc_params(w, b)  # bf16 W, f32 bias

    fwd = jax.jit(fc_forward)
    out = jax.block_until_ready(fwd(x, w_c, b2d))
    assert out.shape == (B, Z_SIZE)
    assert out.dtype == jnp.float32

    # Tight check vs a reference using the same bf16-quantized weights
    # (isolates kernel correctness from the intentional bf16 weight cast).
    w_q = w.astype(jnp.bfloat16).astype(jnp.float32)
    x_q = x.astype(jnp.bfloat16).astype(jnp.float32)
    ref_q = jax.lax.dot_general(
        x_q, w_q, (((1,), (0,)), ((), ())), precision=jax.lax.Precision.HIGHEST
    ) + b
    assert jnp.allclose(out, ref_q, atol=1e-3, rtol=1e-3)

    # Loose sanity check vs the full-f32 nn.Linear reference.
    ref_f32 = jax.lax.dot_general(
        x, w, (((1,), (0,)), ((), ())), precision=jax.lax.Precision.HIGHEST
    ) + b
    assert jnp.allclose(out, ref_f32, atol=3e-2, rtol=3e-2)

    # Exact-parity path (f32 weights, no quantization) for completeness.
    w_f32, b2d_f32 = prepare_fc_params(w, b, weight_dtype=jnp.float32)
    out_f32 = jax.block_until_ready(fc_forward(x, w_f32, b2d_f32))
    assert jnp.allclose(out_f32, ref_f32, atol=1e-5, rtol=1e-5)

    print("KERNEL_OK")
</pallas_src>

<mosaic_0001>
module attributes {stable_mosaic.version = 11 : i64} {
  func.func @fc_kernel(%arg0: i32, %arg1: memref<2x4096xf32, #tpu.memory_space<vmem>>, %arg2: memref<4096x404xbf16, #tpu.memory_space<vmem>>, %arg3: memref<1x404xf32, #tpu.memory_space<vmem>>, %arg4: memref<2x404xf32, #tpu.memory_space<vmem>>) attributes {dimension_semantics = [#tpu.dimension_semantics<parallel>], iteration_bounds = array<i64: 1>, scalar_prefetch = 0 : i64, scratch_operands = 0 : i64, tpu.core_type = #tpu.core_type<tc>, window_params = [{pipeline_mode = #tpu.pipeline_mode<synchronous>, transform_indices = @transform_0, window_bounds = array<i64: 2, 4096>}, {transform_indices = @transform_1, window_bounds = array<i64: 4096, 404>}, {transform_indices = @transform_2, window_bounds = array<i64: 1, 404>}, {transform_indices = @transform_3, window_bounds = array<i64: 2, 404>}]} {
    %c0 = arith.constant 0 : index
    %c0_0 = arith.constant 0 : index
    %0 = vector.load %arg1[%c0, %c0_0] : memref<2x4096xf32, #tpu.memory_space<vmem>>, vector<2x4096xf32>
    %1 = arith.truncf %0 : vector<2x4096xf32> to vector<2x4096xbf16>
    %c0_1 = arith.constant 0 : index
    %c0_2 = arith.constant 0 : index
    %2 = vector.load %arg2[%c0_1, %c0_2] : memref<4096x404xbf16, #tpu.memory_space<vmem>>, vector<4096x404xbf16>
    %cst = arith.constant dense<0.000000e+00> : vector<2x404xf32>
    %3 = tpu.matmul %1, %2, %cst {dimension_numbers = #tpu.dot_dimension_numbers<[1], [0], [0], [1], [0, 0, 1, 1], [], []>} : vector<2x4096xbf16>, vector<4096x404xbf16>, vector<2x404xf32> -> vector<2x404xf32>
    %c0_3 = arith.constant 0 : index
    %c0_4 = arith.constant 0 : index
    %4 = vector.load %arg3[%c0_3, %c0_4] : memref<1x404xf32, #tpu.memory_space<vmem>>, vector<1x404xf32>
    %5 = vector.broadcast %4 : vector<1x404xf32> to vector<2x404xf32>
    %6 = arith.addf %3, %5 : vector<2x404xf32>
    %c0_5 = arith.constant 0 : index
    %c0_6 = arith.constant 0 : index
    %7 = vector.load %arg4[%c0_5, %c0_6] : memref<2x404xf32, #tpu.memory_space<vmem>>, vector<2x404xf32>
    tpu.vector_store %arg4[%c0_5, %c0_6], %6 {strides = array<i32>} : memref<2x404xf32, #tpu.memory_space<vmem>>, vector<2x404xf32>,
    return
  }
  func.func @transform_0(%arg0: i32) -> (i32, i32) {
    %c0_i32 = arith.constant 0 : i32
    %c0_i32_0 = arith.constant 0 : i32
    %c0_i32_1 = arith.constant 0 : i32
    return %c0_i32, %c0_i32_0 : i32, i32
  }
  func.func @transform_1(%arg0: i32) -> (i32, i32) {
    %c0_i32 = arith.constant 0 : i32
    %c0_i32_0 = arith.constant 0 : i32
    return %c0_i32, %arg0 : i32, i32
  }
  func.func @transform_2(%arg0: i32) -> (i32, i32) {
    %c0_i32 = arith.constant 0 : i32
    %c0_i32_0 = arith.constant 0 : i32
    return %c0_i32, %arg0 : i32, i32
  }
  func.func @transform_3(%arg0: i32) -> (i32, i32) {
    %c0_i32 = arith.constant 0 : i32
    %c0_i32_0 = arith.constant 0 : i32
    return %c0_i32, %arg0 : i32, i32
  }
}

</mosaic_0001>

<llo_original>
// kernel: fc_forward.1
$region0: #{fc_forward.1}
  #allocation0 [shape = 'u32[]', space=smem, size = 0x4, offset = 0x4, fixed_abs, tag = 'smem constant byte address 0x4 - core index']
  #allocation1 [shape = 'u32[144,128]{1,0:T(1,128)}', space=vmem, size = 0x12000, scoped, tag = 'internal scratch']
  %s0 = inlined_call_operand.vmem [shape: f32[2,4096], index: 0, kind: input, shape index: {}]
  %s1 = inlined_call_operand.vmem [shape: bf16[4096,404], index: 1, kind: input, shape index: {}]
  %s2 = inlined_call_operand.vmem [shape: f32[1,404], index: 2, kind: input, shape index: {}]
  %s3 = inlined_call_operand.hbm [shape: f32[2,404], index: 3, kind: output, shape index: {}]
  %s4 = sld [smem:[#allocation0]]
  $region22: #{fc_forward.1} parent=0
    _
  %s6 = ssub.s32 1, %s4
  %s7 = scalar_select 0, %s6, %s4
  $region1: #{fc_forward.1} parent=0
    #allocation2 [shape = 'u8[4096]{0}', space=vmem, size = 0x1000, scoped, tag = 'output window, operand 0, single buffered']
    #allocation3 [shape = 's32[1]{0}', space=sflag, size = 0x4, scoped, tag = 'scoped memory for fc_forward.1']
    %8 = vsyncpa [#allocation3], 0
    // Predicated region
    $region2: #{fc_forward.1} parent=1 // pred_check
      _
    $region3: #{fc_forward.1} parent=1 // pred_check_branch
      %10 = sbr.rel (0) target = $region5
    $region4: #{fc_forward.1} parent=1 // pred_region
      _
    $region5: #{fc_forward.1} parent=1 // pred_fallthru
      _
    // Predicated region
    $region6: #{fc_forward.1} parent=1 // pred_check
      _
    $region7: #{fc_forward.1} parent=1 // pred_check_branch
      %12 = sbr.rel (0) target = $region9
    $region8: #{fc_forward.1} parent=1 // pred_region
      _
    $region9: #{fc_forward.1} parent=1 // pred_fallthru
      _
    // Predicated region
    $region10: #{fc_forward.1} parent=1 // pred_check
      _
    $region11: #{fc_forward.1} parent=1 // pred_check_branch
      %14 = sbr.rel (0) target = $region13
    $region12: #{fc_forward.1} parent=1 // pred_region
      _
    $region13: #{fc_forward.1} parent=1 // pred_fallthru
      _
    %v15 = vld [vmem:[%s0] sm:$0xff]
    %v16 = vld [vmem:[%s0 + $0x8] sm:$0xff]
    %v17 = vld [vmem:[%s0 + $0x10] sm:$0xff]
    %v18 = vld [vmem:[%s0 + $0x18] sm:$0xff]
    %v19 = vld [vmem:[%s0 + $0x20] sm:$0xff]
    %v20 = vld [vmem:[%s0 + $0x28] sm:$0xff]
    %v21 = vld [vmem:[%s0 + $0x30] sm:$0xff]
    %v22 = vld [vmem:[%s0 + $0x38] sm:$0xff]
    %v31 = vcombine.high %v15, %v15
    %v33 = vunpack.c.l.s4 1983009808
    %v34 = vunpack.c.0.s8 %v33
    %v35 = vlaneseq
    %v36 = vshrl.u32 %v35, 7
    %v37 = vsub.s32 %v34, %v36
    %v38 = vrot.slane %v15, %v37
    %v40 = vunpack.c.l.s4 1983009808
    %v41 = vunpack.c.0.s8 %v40
    %v42 = vlaneseq
    %v43 = vshrl.u32 %v42, 7
    %v44 = vsub.s32 %v41, %v43
    %v45 = vrot.slane %v31, %v44
    %v46 = vcombine.high %v38, %v38
    %v47 = vcombine.high %v45, %v45
    %v48 = vcombine.high %v16, %v16
    %v50 = vunpack.c.l.s4 1983009808
    %v51 = vunpack.c.0.s8 %v50
    %v52 = vlaneseq
    %v53 = vshrl.u32 %v52, 7
    %v54 = vsub.s32 %v51, %v53
    %v55 = vrot.slane %v16, %v54
    %v57 = vunpack.c.l.s4 1983009808
    %v58 = vunpack.c.0.s8 %v57
    %v59 = vlaneseq
    %v60 = vshrl.u32 %v59, 7
    %v61 = vsub.s32 %v58, %v60
    %v62 = vrot.slane %v48, %v61
    %v63 = vcombine.high %v55, %v55
    %v64 = vcombine.high %v62, %v62
    %v65 = vcombine.high %v17, %v17
    %v67 = vunpack.c.l.s4 1983009808
    %v68 = vunpack.c.0.s8 %v67
    %v69 = vlaneseq
    %v70 = vshrl.u32 %v69, 7
    %v71 = vsub.s32 %v68, %v70
    %v72 = vrot.slane %v17, %v71
    %v74 = vunpack.c.l.s4 1983009808
    %v75 = vunpack.c.0.s8 %v74
    %v76 = vlaneseq
    %v77 = vshrl.u32 %v76, 7
    %v78 = vsub.s32 %v75, %v77
    %v79 = vrot.slane %v65, %v78
    %v80 = vcombine.high %v72, %v72
    %v81 = vcombine.high %v79, %v79
    %v82 = vcombine.high %v18, %v18
    %v84 = vunpack.c.l.s4 1983009808
    %v85 = vunpack.c.0.s8 %v84
    %v86 = vlaneseq
    %v87 = vshrl.u32 %v86, 7
    %v88 = vsub.s32 %v85, %v87
    %v89 = vrot.slane %v18, %v88
    %v91 = vunpack.c.l.s4 1983009808
    %v92 = vunpack.c.0.s8 %v91
    %v93 = vlaneseq
    %v94 = vshrl.u32 %v93, 7
    %v95 = vsub.s32 %v92, %v94
    %v96 = vrot.slane %v82, %v95
    %v97 = vcombine.high %v89, %v89
    %v98 = vcombine.high %v96, %v96
    %v99 = vcombine.high %v19, %v19
    %v101 = vunpack.c.l.s4 1983009808
    %v102 = vunpack.c.0.s8 %v101
    %v103 = vlaneseq
    %v104 = vshrl.u32 %v103, 7
    %v105 = vsub.s32 %v102, %v104
    %v106 = vrot.slane %v19, %v105
    %v108 = vunpack.c.l.s4 1983009808
    %v109 = vunpack.c.0.s8 %v108
    %v110 = vlaneseq
    %v111 = vshrl.u32 %v110, 7
    %v112 = vsub.s32 %v109, %v111
    %v113 = vrot.slane %v99, %v112
    %v114 = vcombine.high %v106, %v106
    %v115 = vcombine.high %v113, %v113
    %v116 = vcombine.high %v20, %v20
    %v118 = vunpack.c.l.s4 1983009808
    %v119 = vunpack.c.0.s8 %v118
    %v120 = vlaneseq
    %v121 = vshrl.u32 %v120, 7
    %v122 = vsub.s32 %v119, %v121
    %v123 = vrot.slane %v20, %v122
    %v125 = vunpack.c.l.s4 1983009808
    %v126 = vunpack.c.0.s8 %v125
    %v127 = vlaneseq
    %v128 = vshrl.u32 %v127, 7
    %v129 = vsub.s32 %v126, %v128
    %v130 = vrot.slane %v116, %v129
    %v131 = vcombine.high %v123, %v123
    %v132 = vcombine.high %v130, %v130
    %v133 = vcombine.high %v21, %v21
    %v135 = vunpack.c.l.s4 1983009808
    %v136 = vunpack.c.0.s8 %v135
    %v137 = vlaneseq
    %v138 = vshrl.u32 %v137, 7
    %v139 = vsub.s32 %v136, %v138
    %v140 = vrot.slane %v21, %v139
    %v142 = vunpack.c.l.s4 1983009808
    %v143 = vunpack.c.0.s8 %v142
    %v144 = vlaneseq
    %v145 = vshrl.u32 %v144, 7
    %v146 = vsub.s32 %v143, %v145
    %v147 = vrot.slane %v133, %v146
    %v148 = vcombine.high %v140, %v140
    %v149 = vcombine.high %v147, %v147
    %v150 = vcombine.high %v22, %v22
    %v152 = vunpack.c.l.s4 1983009808
    %v153 = vunpack.c.0.s8 %v152
    %v154 = vlaneseq
    %v155 = vshrl.u32 %v154, 7
    %v156 = vsub.s32 %v153, %v155
    %v157 = vrot.slane %v22, %v156
    %v159 = vunpack.c.l.s4 1983009808
    %v160 = vunpack.c.0.s8 %v159
    %v161 = vlaneseq
    %v162 = vshrl.u32 %v161, 7
    %v163 = vsub.s32 %v160, %v162
    %v164 = vrot.slane %v150, %v163
    %v165 = vcombine.high %v157, %v157
    %v166 = vcombine.high %v164, %v164
    %v199 = vpack.c.bf16 %v38, %v38
    %v200 = vpack.c.bf16 %v46, %v46
    %v201 = vpack.c.bf16 %v45, %v45
    %v202 = vpack.c.bf16 %v47, %v47
    %v203 = vpack.c.bf16 %v55, %v55
    %v204 = vpack.c.bf16 %v63, %v63
    %v205 = vpack.c.bf16 %v62, %v62
    %v206 = vpack.c.bf16 %v64, %v64
    %v207 = vpack.c.bf16 %v72, %v72
    %v208 = vpack.c.bf16 %v80, %v80
    %v209 = vpack.c.bf16 %v79, %v79
    %v210 = vpack.c.bf16 %v81, %v81
    %v211 = vpack.c.bf16 %v89, %v89
    %v212 = vpack.c.bf16 %v97, %v97
    %v213 = vpack.c.bf16 %v96, %v96
    %v214 = vpack.c.bf16 %v98, %v98
    %v215 = vpack.c.bf16 %v106, %v106
    %v216 = vpack.c.bf16 %v114, %v114
    %v217 = vpack.c.bf16 %v113, %v113
    %v218 = vpack.c.bf16 %v115, %v115
    %v219 = vpack.c.bf16 %v123, %v123
    %v220 = vpack.c.bf16 %v131, %v131
    %v221 = vpack.c.bf16 %v130, %v130
    %v222 = vpack.c.bf16 %v132, %v132
    %v223 = vpack.c.bf16 %v140, %v140
    %v224 = vpack.c.bf16 %v148, %v148
    %v225 = vpack.c.bf16 %v147, %v147
    %v226 = vpack.c.bf16 %v149, %v149
    %v227 = vpack.c.bf16 %v157, %v157
    %v228 = vpack.c.bf16 %v165, %v165
    %v229 = vpack.c.bf16 %v164, %v164
    %v230 = vpack.c.bf16 %v166, %v166
    %v231 = vld [vmem:[%s1] sm:$0xff]
    %v232 = vld [vmem:[%s1 + $0x8] sm:$0xff]
    %v233 = vld [vmem:[%s1 + $0x10] sm:$0xff]
    %v234 = vld [vmem:[%s1 + $0x18] sm:$0xff]
    %v235 = vld [vmem:[%s1 + $0x20] sm:$0xff]
    %v236 = vld [vmem:[%s1 + $0x28] sm:$0xff]
    %v237 = vld [vmem:[%s1 + $0x30] sm:$0xff]
    %v238 = vld [vmem:[%s1 + $0x38] sm:$0xff]
    %v239 = vld [vmem:[%s1 + $0x40] sm:$0xff]
    %v240 = vld [vmem:[%s1 + $0x48] sm:$0xff]
    %v241 = vld [vmem:[%s1 + $0x50] sm:$0xff]
    %v242 = vld [vmem:[%s1 + $0x58] sm:$0xff]
    %v243 = vld [vmem:[%s1 + $0x60] sm:$0xff]
    %v244 = vld [vmem:[%s1 + $0x68] sm:$0xff]
    %v245 = vld [vmem:[%s1 + $0x70] sm:$0xff]
    %v246 = vld [vmem:[%s1 + $0x78] sm:$0xff]
    %v247 = vld [vmem:[%s1 + $0x80] sm:$0xff]
    %v248 = vld [vmem:[%s1 + $0x88] sm:$0xff]
    %v249 = vld [vmem:[%s1 + $0x90] sm:$0xff]
    %v250 = vld [vmem:[%s1 + $0x98] sm:$0xff]
    %v251 = vld [vmem:[%s1 + $0xa0] sm:$0xff]
    %v252 = vld [vmem:[%s1 + $0xa8] sm:$0xff]
    %v253 = vld [vmem:[%s1 + $0xb0] sm:$0xff]
    %v254 = vld [vmem:[%s1 + $0xb8] sm:$0xff]
    %v255 = vld [vmem:[%s1 + $0xc0] sm:$0xff]
    %v256 = vld [vmem:[%s1 + $0xc8] sm:$0xff]
    %v257 = vld [vmem:[%s1 + $0xd0] sm:$0xff]
    %v258 = vld [vmem:[%s1 + $0xd8] sm:$0xff]
    %v259 = vld [vmem:[%s1 + $0xe0] sm:$0xff]
    %v260 = vld [vmem:[%s1 + $0xe8] sm:$0xff]
    %v261 = vld [vmem:[%s1 + $0xf0] sm:$0xff]
    %v262 = vld [vmem:[%s1 + $0xf8] sm:$0xff]
    %v263 = vld [vmem:[%s1 + $0x100] sm:$0xff]
    %v264 = vld [vmem:[%s1 + $0x108] sm:$0xff]
    %v265 = vld [vmem:[%s1 + $0x110] sm:$0xff]
    %v266 = vld [vmem:[%s1 + $0x118] sm:$0xff]
    %v267 = vld [vmem:[%s1 + $0x120] sm:$0xff]
    %v268 = vld [vmem:[%s1 + $0x128] sm:$0xff]
    %v269 = vld [vmem:[%s1 + $0x130] sm:$0xff]
    %v270 = vld [vmem:[%s1 + $0x138] sm:$0xff]
    %v271 = vld [vmem:[%s1 + $0x140] sm:$0xff]
    %v272 = vld [vmem:[%s1 + $0x148] sm:$0xff]
    %v273 = vld [vmem:[%s1 + $0x150] sm:$0xff]
    %v274 = vld [vmem:[%s1 + $0x158] sm:$0xff]
    %v275 = vld [vmem:[%s1 + $0x160] sm:$0xff]
    %v276 = vld [vmem:[%s1 + $0x168] sm:$0xff]
    %v277 = vld [vmem:[%s1 + $0x170] sm:$0xff]
    %v278 = vld [vmem:[%s1 + $0x178] sm:$0xff]
    %v279 = vld [vmem:[%s1 + $0x180] sm:$0xff]
    %v280 = vld [vmem:[%s1 + $0x188] sm:$0xff]
    %v281 = vld [vmem:[%s1 + $0x190] sm:$0xff]
    %v282 = vld [vmem:[%s1 + $0x198] sm:$0xff]
    %v283 = vld [vmem:[%s1 + $0x1a0] sm:$0xff]
    %v284 = vld [vmem:[%s1 + $0x1a8] sm:$0xff]
    %v285 = vld [vmem:[%s1 + $0x1b0] sm:$0xff]
    %v286 = vld [vmem:[%s1 + $0x1b8] sm:$0xff]
    %v287 = vld [vmem:[%s1 + $0x1c0] sm:$0xff]
    %v288 = vld [vmem:[%s1 + $0x1c8] sm:$0xff]
    %v289 = vld [vmem:[%s1 + $0x1d0] sm:$0xff]
    %v290 = vld [vmem:[%s1 + $0x1d8] sm:$0xff]
    %v291 = vld [vmem:[%s1 + $0x1e0] sm:$0xff]
    %v292 = vld [vmem:[%s1 + $0x1e8] sm:$0xff]
    %v293 = vld [vmem:[%s1 + $0x1f0] sm:$0xff]
    %v294 = vld [vmem:[%s1 + $0x1f8] sm:$0xff]
    %v295 = vld [vmem:[%s1 + $0x200] sm:$0xff]
    %v296 = vld [vmem:[%s1 + $0x208] sm:$0xff]
    %v297 = vld [vmem:[%s1 + $0x210] sm:$0xff]
    %v298 = vld [vmem:[%s1 + $0x218] sm:$0xff]
    %v299 = vld [vmem:[%s1 + $0x220] sm:$0xff]
    %v300 = vld [vmem:[%s1 + $0x228] sm:$0xff]
    %v301 = vld [vmem:[%s1 + $0x230] sm:$0xff]
    %v302 = vld [vmem:[%s1 + $0x238] sm:$0xff]
    %v303 = vld [vmem:[%s1 + $0x240] sm:$0xff]
    %v304 = vld [vmem:[%s1 + $0x248] sm:$0xff]
    %v305 = vld [vmem:[%s1 + $0x250] sm:$0xff]
    %v306 = vld [vmem:[%s1 + $0x258] sm:$0xff]
    %v307 = vld [vmem:[%s1 + $0x260] sm:$0xff]
    %v308 = vld [vmem:[%s1 + $0x268] sm:$0xff]
    %v309 = vld [vmem:[%s1 + $0x270] sm:$0xff]
    %v310 = vld [vmem:[%s1 + $0x278] sm:$0xff]
    %v311 = vld [vmem:[%s1 + $0x280] sm:$0xff]
    %v312 = vld [vmem:[%s1 + $0x288] sm:$0xff]
    %v313 = vld [vmem:[%s1 + $0x290] sm:$0xff]
    %v314 = vld [vmem:[%s1 + $0x298] sm:$0xff]
    %v315 = vld [vmem:[%s1 + $0x2a0] sm:$0xff]
    %v316 = vld [vmem:[%s1 + $0x2a8] sm:$0xff]
    %v317 = vld [vmem:[%s1 + $0x2b0] sm:$0xff]
    %v318 = vld [vmem:[%s1 + $0x2b8] sm:$0xff]
    %v319 = vld [vmem:[%s1 + $0x2c0] sm:$0xff]
    %v320 = vld [vmem:[%s1 + $0x2c8] sm:$0xff]
    %v321 = vld [vmem:[%s1 + $0x2d0] sm:$0xff]
    %v322 = vld [vmem:[%s1 + $0x2d8] sm:$0xff]
    %v323 = vld [vmem:[%s1 + $0x2e0] sm:$0xff]
    %v324 = vld [vmem:[%s1 + $0x2e8] sm:$0xff]
    %v325 = vld [vmem:[%s1 + $0x2f0] sm:$0xff]
    %v326 = vld [vmem:[%s1 + $0x2f8] sm:$0xff]
    %v327 = vld [vmem:[%s1 + $0x300] sm:$0xff]
    %v328 = vld [vmem:[%s1 + $0x308] sm:$0xff]
    %v329 = vld [vmem:[%s1 + $0x310] sm:$0xff]
    %v330 = vld [vmem:[%s1 + $0x318] sm:$0xff]
    %v331 = vld [vmem:[%s1 + $0x320] sm:$0xff]
    %v332 = vld [vmem:[%s1 + $0x328] sm:$0xff]
    %v333 = vld [vmem:[%s1 + $0x330] sm:$0xff]
    %v334 = vld [vmem:[%s1 + $0x338] sm:$0xff]
    %v335 = vld [vmem:[%s1 + $0x340] sm:$0xff]
    %v336 = vld [vmem:[%s1 + $0x348] sm:$0xff]
    %v337 = vld [vmem:[%s1 + $0x350] sm:$0xff]
    %v338 = vld [vmem:[%s1 + $0x358] sm:$0xff]
    %v339 = vld [vmem:[%s1 + $0x360] sm:$0xff]
    %v340 = vld [vmem:[%s1 + $0x368] sm:$0xff]
    %v341 = vld [vmem:[%s1 + $0x370] sm:$0xff]
    %v342 = vld [vmem:[%s1 + $0x378] sm:$0xff]
    %v343 = vld [vmem:[%s1 + $0x380] sm:$0xff]
    %v344 = vld [vmem:[%s1 + $0x388] sm:$0xff]
    %v345 = vld [vmem:[%s1 + $0x390] sm:$0xff]
    %v346 = vld [vmem:[%s1 + $0x398] sm:$0xff]
    %v347 = vld [vmem:[%s1 + $0x3a0] sm:$0xff]
    %v348 = vld [vmem:[%s1 + $0x3a8] sm:$0xff]
    %v349 = vld [vmem:[%s1 + $0x3b0] sm:$0xff]
    %v350 = vld [vmem:[%s1 + $0x3b8] sm:$0xff]
    %v351 = vld [vmem:[%s1 + $0x3c0] sm:$0xff]
    %v352 = vld [vmem:[%s1 + $0x3c8] sm:$0xff]
    %v353 = vld [vmem:[%s1 + $0x3d0] sm:$0xff]
    %v354 = vld [vmem:[%s1 + $0x3d8] sm:$0xff]
    %v355 = vld [vmem:[%s1 + $0x3e0] sm:$0xff]
    %v356 = vld [vmem:[%s1 + $0x3e8] sm:$0xff]
    %v357 = vld [vmem:[%s1 + $0x3f0] sm:$0xff]
    %v358 = vld [vmem:[%s1 + $0x3f8] sm:$0xff]
    %v359 = vld [vmem:[%s1 + $0x400] sm:$0xff]
    %v360 = vld [vmem:[%s1 + $0x408] sm:$0xff]
    %v361 = vld [vmem:[%s1 + $0x410] sm:$0xff]
    %v362 = vld [vmem:[%s1 + $0x418] sm:$0xff]
    %v363 = vld [vmem:[%s1 + $0x420] sm:$0xff]
    %v364 = vld [vmem:[%s1 + $0x428] sm:$0xff]
    %v365 = vld [vmem:[%s1 + $0x430] sm:$0xff]
    %v366 = vld [vmem:[%s1 + $0x438] sm:$0xff]
    %v367 = vld [vmem:[%s1 + $0x440] sm:$0xff]
    %v368 = vld [vmem:[%s1 + $0x448] sm:$0xff]
    %v369 = vld [vmem:[%s1 + $0x450] sm:$0xff]
    %v370 = vld [vmem:[%s1 + $0x458] sm:$0xff]
    %v371 = vld [vmem:[%s1 + $0x460] sm:$0xff]
    %v372 = vld [vmem:[%s1 + $0x468] sm:$0xff]
    %v373 = vld [vmem:[%s1 + $0x470] sm:$0xff]
    %v374 = vld [vmem:[%s1 + $0x478] sm:$0xff]
    %v375 = vld [vmem:[%s1 + $0x480] sm:$0xff]
    %v376 = vld [vmem:[%s1 + $0x488] sm:$0xff]
    %v377 = vld [vmem:[%s1 + $0x490] sm:$0xff]
    %v378 = vld [vmem:[%s1 + $0x498] sm:$0xff]
    %v379 = vld [vmem:[%s1 + $0x4a0] sm:$0xff]
    %v380 = vld [vmem:[%s1 + $0x4a8] sm:$0xff]
    %v381 = vld [vmem:[%s1 + $0x4b0] sm:$0xff]
    %v382 = vld [vmem:[%s1 + $0x4b8] sm:$0xff]
    %v383 = vld [vmem:[%s1 + $0x4c0] sm:$0xff]
    %v384 = vld [vmem:[%s1 + $0x4c8] sm:$0xff]
    %v385 = vld [vmem:[%s1 + $0x4d0] sm:$0xff]
    %v386 = vld [vmem:[%s1 + $0x4d8] sm:$0xff]
    %v387 = vld [vmem:[%s1 + $0x4e0] sm:$0xff]
    %v388 = vld [vmem:[%s1 + $0x4e8] sm:$0xff]
    %v389 = vld [vmem:[%s1 + $0x4f0] sm:$0xff]
    %v390 = vld [vmem:[%s1 + $0x4f8] sm:$0xff]
    %v391 = vld [vmem:[%s1 + $0x500] sm:$0xff]
    %v392 = vld [vmem:[%s1 + $0x508] sm:$0xff]
    %v393 = vld [vmem:[%s1 + $0x510] sm:$0xff]
    %v394 = vld [vmem:[%s1 + $0x518] sm:$0xff]
    %v395 = vld [vmem:[%s1 + $0x520] sm:$0xff]
    %v396 = vld [vmem:[%s1 + $0x528] sm:$0xff]
    %v397 = vld [vmem:[%s1 + $0x530] sm:$0xff]
    %v398 = vld [vmem:[%s1 + $0x538] sm:$0xff]
    %v399 = vld [vmem:[%s1 + $0x540] sm:$0xff]
    %v400 = vld [vmem:[%s1 + $0x548] sm:$0xff]
    %v401 = vld [vmem:[%s1 + $0x550] sm:$0xff]
    %v402 = vld [vmem:[%s1 + $0x558] sm:$0xff]
    %v403 = vld [vmem:[%s1 + $0x560] sm:$0xff]
    %v404 = vld [vmem:[%s1 + $0x568] sm:$0xff]
    %v405 = vld [vmem:[%s1 + $0x570] sm:$0xff]
    %v406 = vld [vmem:[%s1 + $0x578] sm:$0xff]
    %v407 = vld [vmem:[%s1 + $0x580] sm:$0xff]
    %v408 = vld [vmem:[%s1 + $0x588] sm:$0xff]
    %v409 = vld [vmem:[%s1 + $0x590] sm:$0xff]
    %v410 = vld [vmem:[%s1 + $0x598] sm:$0xff]
    %v411 = vld [vmem:[%s1 + $0x5a0] sm:$0xff]
    %v412 = vld [vmem:[%s1 + $0x5a8] sm:$0xff]
    %v413 = vld [vmem:[%s1 + $0x5b0] sm:$0xff]
    %v414 = vld [vmem:[%s1 + $0x5b8] sm:$0xff]
    %v415 = vld [vmem:[%s1 + $0x5c0] sm:$0xff]
    %v416 = vld [vmem:[%s1 + $0x5c8] sm:$0xff]
    %v417 = vld [vmem:[%s1 + $0x5d0] sm:$0xff]
    %v418 = vld [vmem:[%s1 + $0x5d8] sm:$0xff]
    %v419 = vld [vmem:[%s1 + $0x5e0] sm:$0xff]
    %v420 = vld [vmem:[%s1 + $0x5e8] sm:$0xff]
    %v421 = vld [vmem:[%s1 + $0x5f0] sm:$0xff]
    %v422 = vld [vmem:[%s1 + $0x5f8] sm:$0xff]
    %v423 = vld [vmem:[%s1 + $0x600] sm:$0xff]
    %v424 = vld [vmem:[%s1 + $0x608] sm:$0xff]
    %v425 = vld [vmem:[%s1 + $0x610] sm:$0xff]
    %v426 = vld [vmem:[%s1 + $0x618] sm:$0xff]
    %v427 = vld [vmem:[%s1 + $0x620] sm:$0xff]
    %v428 = vld [vmem:[%s1 + $0x628] sm:$0xff]
    %v429 = vld [vmem:[%s1 + $0x630] sm:$0xff]
    %v430 = vld [vmem:[%s1 + $0x638] sm:$0xff]
    %v431 = vld [vmem:[%s1 + $0x640] sm:$0xff]
    %v432 = vld [vmem:[%s1 + $0x648] sm:$0xff]
    %v433 = vld [vmem:[%s1 + $0x650] sm:$0xff]
    %v434 = vld [vmem:[%s1 + $0x658] sm:$0xff]
    %v435 = vld [vmem:[%s1 + $0x660] sm:$0xff]
    %v436 = vld [vmem:[%s1 + $0x668] sm:$0xff]
    %v437 = vld [vmem:[%s1 + $0x670] sm:$0xff]
    %v438 = vld [vmem:[%s1 + $0x678] sm:$0xff]
    %v439 = vld [vmem:[%s1 + $0x680] sm:$0xff]
    %v440 = vld [vmem:[%s1 + $0x688] sm:$0xff]
    %v441 = vld [vmem:[%s1 + $0x690] sm:$0xff]
    %v442 = vld [vmem:[%s1 + $0x698] sm:$0xff]
    %v443 = vld [vmem:[%s1 + $0x6a0] sm:$0xff]
    %v444 = vld [vmem:[%s1 + $0x6a8] sm:$0xff]
    %v445 = vld [vmem:[%s1 + $0x6b0] sm:$0xff]
    %v446 = vld [vmem:[%s1 + $0x6b8] sm:$0xff]
    %v447 = vld [vmem:[%s1 + $0x6c0] sm:$0xff]
    %v448 = vld [vmem:[%s1 + $0x6c8] sm:$0xff]
    %v449 = vld [vmem:[%s1 + $0x6d0] sm:$0xff]
    %v450 = vld [vmem:[%s1 + $0x6d8] sm:$0xff]
    %v451 = vld [vmem:[%s1 + $0x6e0] sm:$0xff]
    %v452 = vld [vmem:[%s1 + $0x6e8] sm:$0xff]
    %v453 = vld [vmem:[%s1 + $0x6f0] sm:$0xff]
    %v454 = vld [vmem:[%s1 + $0x6f8] sm:$0xff]
    %v455 = vld [vmem:[%s1 + $0x700] sm:$0xff]
    %v456 = vld [vmem:[%s1 + $0x708] sm:$0xff]
    %v457 = vld [vmem:[%s1 + $0x710] sm:$0xff]
    %v458 = vld [vmem:[%s1 + $0x718] sm:$0xff]
    %v459 = vld [vmem:[%s1 + $0x720] sm:$0xff]
    %v460 = vld [vmem:[%s1 + $0x728] sm:$0xff]
    %v461 = vld [vmem:[%s1 + $0x730] sm:$0xff]
    %v462 = vld [vmem:[%s1 + $0x738] sm:$0xff]
    %v463 = vld [vmem:[%s1 + $0x740] sm:$0xff]
    %v464 = vld [vmem:[%s1 + $0x748] sm:$0xff]
    %v465 = vld [vmem:[%s1 + $0x750] sm:$0xff]
    %v466 = vld [vmem:[%s1 + $0x758] sm:$0xff]
    %v467 = vld [vmem:[%s1 + $0x760] sm:$0xff]
    %v468 = vld [vmem:[%s1 + $0x768] sm:$0xff]
    %v469 = vld [vmem:[%s1 + $0x770] sm:$0xff]
    %v470 = vld [vmem:[%s1 + $0x778] sm:$0xff]
    %v471 = vld [vmem:[%s1 + $0x780] sm:$0xff]
    %v472 = vld [vmem:[%s1 + $0x788] sm:$0xff]
    %v473 = vld [vmem:[%s1 + $0x790] sm:$0xff]
    %v474 = vld [vmem:[%s1 + $0x798] sm:$0xff]
    %v475 = vld [vmem:[%s1 + $0x7a0] sm:$0xff]
    %v476 = vld [vmem:[%s1 + $0x7a8] sm:$0xff]
    %v477 = vld [vmem:[%s1 + $0x7b0] sm:$0xff]
    %v478 = vld [vmem:[%s1 + $0x7b8] sm:$0xff]
    %v479 = vld [vmem:[%s1 + $0x7c0] sm:$0xff]
    %v480 = vld [vmem:[%s1 + $0x7c8] sm:$0xff]
    %v481 = vld [vmem:[%s1 + $0x7d0] sm:$0xff]
    %v482 = vld [vmem:[%s1 + $0x7d8] sm:$0xff]
    %v483 = vld [vmem:[%s1 + $0x7e0] sm:$0xff]
    %v484 = vld [vmem:[%s1 + $0x7e8] sm:$0xff]
    %v485 = vld [vmem:[%s1 + $0x7f0] sm:$0xff]
    %v486 = vld [vmem:[%s1 + $0x7f8] sm:$0xff]
    %v487 = vld [vmem:[%s1 + $0x800] sm:$0xff]
    %v488 = vld [vmem:[%s1 + $0x808] sm:$0xff]
    %v489 = vld [vmem:[%s1 + $0x810] sm:$0xff]
    %v490 = vld [vmem:[%s1 + $0x818] sm:$0xff]
    %v491 = vld [vmem:[%s1 + $0x820] sm:$0xff]
    %v492 = vld [vmem:[%s1 + $0x828] sm:$0xff]
    %v493 = vld [vmem:[%s1 + $0x830] sm:$0xff]
    %v494 = vld [vmem:[%s1 + $0x838] sm:$0xff]
    %v495 = vld [vmem:[%s1 + $0x840] sm:$0xff]
    %v496 = vld [vmem:[%s1 + $0x848] sm:$0xff]
    %v497 = vld [vmem:[%s1 + $0x850] sm:$0xff]
    %v498 = vld [vmem:[%s1 + $0x858] sm:$0xff]
    %v499 = vld [vmem:[%s1 + $0x860] sm:$0xff]
    %v500 = vld [vmem:[%s1 + $0x868] sm:$0xff]
    %v501 = vld [vmem:[%s1 + $0x870] sm:$0xff]
    %v502 = vld [vmem:[%s1 + $0x878] sm:$0xff]
    %v503 = vld [vmem:[%s1 + $0x880] sm:$0xff]
    %v504 = vld [vmem:[%s1 + $0x888] sm:$0xff]
    %v505 = vld [vmem:[%s1 + $0x890] sm:$0xff]
    %v506 = vld [vmem:[%s1 + $0x898] sm:$0xff]
    %v507 = vld [vmem:[%s1 + $0x8a0] sm:$0xff]
    %v508 = vld [vmem:[%s1 + $0x8a8] sm:$0xff]
    %v509 = vld [vmem:[%s1 + $0x8b0] sm:$0xff]
    %v510 = vld [vmem:[%s1 + $0x8b8] sm:$0xff]
    %v511 = vld [vmem:[%s1 + $0x8c0] sm:$0xff]
    %v512 = vld [vmem:[%s1 + $0x8c8] sm:$0xff]
    %v513 = vld [vmem:[%s1 + $0x8d0] sm:$0xff]
    %v514 = vld [vmem:[%s1 + $0x8d8] sm:$0xff]
    %v515 = vld [vmem:[%s1 + $0x8e0] sm:$0xff]
    %v516 = vld [vmem:[%s1 + $0x8e8] sm:$0xff]
    %v517 = vld [vmem:[%s1 + $0x8f0] sm:$0xff]
    %v518 = vld [vmem:[%s1 + $0x8f8] sm:$0xff]
    %v519 = vld [vmem:[%s1 + $0x900] sm:$0xff]
    %v520 = vld [vmem:[%s1 + $0x908] sm:$0xff]
    %v521 = vld [vmem:[%s1 + $0x910] sm:$0xff]
    %v522 = vld [vmem:[%s1 + $0x918] sm:$0xff]
    %v523 = vld [vmem:[%s1 + $0x920] sm:$0xff]
    %v524 = vld [vmem:[%s1 + $0x928] sm:$0xff]
    %v525 = vld [vmem:[%s1 + $0x930] sm:$0xff]
    %v526 = vld [vmem:[%s1 + $0x938] sm:$0xff]
    %v527 = vld [vmem:[%s1 + $0x940] sm:$0xff]
    %v528 = vld [vmem:[%s1 + $0x948] sm:$0xff]
    %v529 = vld [vmem:[%s1 + $0x950] sm:$0xff]
    %v530 = vld [vmem:[%s1 + $0x958] sm:$0xff]
    %v531 = vld [vmem:[%s1 + $0x960] sm:$0xff]
    %v532 = vld [vmem:[%s1 + $0x968] sm:$0xff]
    %v533 = vld [vmem:[%s1 + $0x970] sm:$0xff]
    %v534 = vld [vmem:[%s1 + $0x978] sm:$0xff]
    %v535 = vld [vmem:[%s1 + $0x980] sm:$0xff]
    %v536 = vld [vmem:[%s1 + $0x988] sm:$0xff]
    %v537 = vld [vmem:[%s1 + $0x990] sm:$0xff]
    %v538 = vld [vmem:[%s1 + $0x998] sm:$0xff]
    %v539 = vld [vmem:[%s1 + $0x9a0] sm:$0xff]
    %v540 = vld [vmem:[%s1 + $0x9a8] sm:$0xff]
    %v541 = vld [vmem:[%s1 + $0x9b0] sm:$0xff]
    %v542 = vld [vmem:[%s1 + $0x9b8] sm:$0xff]
    %v543 = vld [vmem:[%s1 + $0x9c0] sm:$0xff]
    %v544 = vld [vmem:[%s1 + $0x9c8] sm:$0xff]
    %v545 = vld [vmem:[%s1 + $0x9d0] sm:$0xff]
    %v546 = vld [vmem:[%s1 + $0x9d8] sm:$0xff]
    %v547 = vld [vmem:[%s1 + $0x9e0] sm:$0xff]
    %v548 = vld [vmem:[%s1 + $0x9e8] sm:$0xff]
    %v549 = vld [vmem:[%s1 + $0x9f0] sm:$0xff]
    %v550 = vld [vmem:[%s1 + $0x9f8] sm:$0xff]
    %v551 = vld [vmem:[%s1 + $0xa00] sm:$0xff]
    %v552 = vld [vmem:[%s1 + $0xa08] sm:$0xff]
    %v553 = vld [vmem:[%s1 + $0xa10] sm:$0xff]
    %v554 = vld [vmem:[%s1 + $0xa18] sm:$0xff]
    %v555 = vld [vmem:[%s1 + $0xa20] sm:$0xff]
    %v556 = vld [vmem:[%s1 + $0xa28] sm:$0xff]
    %v557 = vld [vmem:[%s1 + $0xa30] sm:$0xff]
    %v558 = vld [vmem:[%s1 + $0xa38] sm:$0xff]
    %v559 = vld [vmem:[%s1 + $0xa40] sm:$0xff]
    %v560 = vld [vmem:[%s1 + $0xa48] sm:$0xff]
    %v561 = vld [vmem:[%s1 + $0xa50] sm:$0xff]
    %v562 = vld [vmem:[%s1 + $0xa58] sm:$0xff]
    %v563 = vld [vmem:[%s1 + $0xa60] sm:$0xff]
    %v564 = vld [vmem:[%s1 + $0xa68] sm:$0xff]
    %v565 = vld [vmem:[%s1 + $0xa70] sm:$0xff]
    %v566 = vld [vmem:[%s1 + $0xa78] sm:$0xff]
    %v567 = vld [vmem:[%s1 + $0xa80] sm:$0xff]
    %v568 = vld [vmem:[%s1 + $0xa88] sm:$0xff]
    %v569 = vld [vmem:[%s1 + $0xa90] sm:$0xff]
    %v570 = vld [vmem:[%s1 + $0xa98] sm:$0xff]
    %v571 = vld [vmem:[%s1 + $0xaa0] sm:$0xff]
    %v572 = vld [vmem:[%s1 + $0xaa8] sm:$0xff]
    %v573 = vld [vmem:[%s1 + $0xab0] sm:$0xff]
    %v574 = vld [vmem:[%s1 + $0xab8] sm:$0xff]
    %v575 = vld [vmem:[%s1 + $0xac0] sm:$0xff]
    %v576 = vld [vmem:[%s1 + $0xac8] sm:$0xff]
    %v577 = vld [vmem:[%s1 + $0xad0] sm:$0xff]
    %v578 = vld [vmem:[%s1 + $0xad8] sm:$0xff]
    %v579 = vld [vmem:[%s1 + $0xae0] sm:$0xff]
    %v580 = vld [vmem:[%s1 + $0xae8] sm:$0xff]
    %v581 = vld [vmem:[%s1 + $0xaf0] sm:$0xff]
    %v582 = vld [vmem:[%s1 + $0xaf8] sm:$0xff]
    %v583 = vld [vmem:[%s1 + $0xb00] sm:$0xff]
    %v584 = vld [vmem:[%s1 + $0xb08] sm:$0xff]
    %v585 = vld [vmem:[%s1 + $0xb10] sm:$0xff]
    %v586 = vld [vmem:[%s1 + $0xb18] sm:$0xff]
    %v587 = vld [vmem:[%s1 + $0xb20] sm:$0xff]
    %v588 = vld [vmem:[%s1 + $0xb28] sm:$0xff]
    %v589 = vld [vmem:[%s1 + $0xb30] sm:$0xff]
    %v590 = vld [vmem:[%s1 + $0xb38] sm:$0xff]
    %v591 = vld [vmem:[%s1 + $0xb40] sm:$0xff]
    %v592 = vld [vmem:[%s1 + $0xb48] sm:$0xff]
    %v593 = vld [vmem:[%s1 + $0xb50] sm:$0xff]
    %v594 = vld [vmem:[%s1 + $0xb58] sm:$0xff]
    %v595 = vld [vmem:[%s1 + $0xb60] sm:$0xff]
    %v596 = vld [vmem:[%s1 + $0xb68] sm:$0xff]
    %v597 = vld [vmem:[%s1 + $0xb70] sm:$0xff]
    %v598 = vld [vmem:[%s1 + $0xb78] sm:$0xff]
    %v599 = vld [vmem:[%s1 + $0xb80] sm:$0xff]
    %v600 = vld [vmem:[%s1 + $0xb88] sm:$0xff]
    %v601 = vld [vmem:[%s1 + $0xb90] sm:$0xff]
    %v602 = vld [vmem:[%s1 + $0xb98] sm:$0xff]
    %v603 = vld [vmem:[%s1 + $0xba0] sm:$0xff]
    %v604 = vld [vmem:[%s1 + $0xba8] sm:$0xff]
    %v605 = vld [vmem:[%s1 + $0xbb0] sm:$0xff]
    %v606 = vld [vmem:[%s1 + $0xbb8] sm:$0xff]
    %v607 = vld [vmem:[%s1 + $0xbc0] sm:$0xff]
    %v608 = vld [vmem:[%s1 + $0xbc8] sm:$0xff]
    %v609 = vld [vmem:[%s1 + $0xbd0] sm:$0xff]
    %v610 = vld [vmem:[%s1 + $0xbd8] sm:$0xff]
    %v611 = vld [vmem:[%s1 + $0xbe0] sm:$0xff]
    %v612 = vld [vmem:[%s1 + $0xbe8] sm:$0xff]
    %v613 = vld [vmem:[%s1 + $0xbf0] sm:$0xff]
    %v614 = vld [vmem:[%s1 + $0xbf8] sm:$0xff]
    %v615 = vld [vmem:[%s1 + $0xc00] sm:$0xff]
    %v616 = vld [vmem:[%s1 + $0xc08] sm:$0xff]
    %v617 = vld [vmem:[%s1 + $0xc10] sm:$0xff]
    %v618 = vld [vmem:[%s1 + $0xc18] sm:$0xff]
    %v619 = vld [vmem:[%s1 + $0xc20] sm:$0xff]
    %v620 = vld [vmem:[%s1 + $0xc28] sm:$0xff]
    %v621 = vld [vmem:[%s1 + $0xc30] sm:$0xff]
    %v622 = vld [vmem:[%s1 + $0xc38] sm:$0xff]
    %v623 = vld [vmem:[%s1 + $0xc40] sm:$0xff]
    %v624 = vld [vmem:[%s1 + $0xc48] sm:$0xff]
    %v625 = vld [vmem:[%s1 + $0xc50] sm:$0xff]
    %v626 = vld [vmem:[%s1 + $0xc58] sm:$0xff]
    %v627 = vld [vmem:[%s1 + $0xc60] sm:$0xff]
    %v628 = vld [vmem:[%s1 + $0xc68] sm:$0xff]
    %v629 = vld [vmem:[%s1 + $0xc70] sm:$0xff]
    %v630 = vld [vmem:[%s1 + $0xc78] sm:$0xff]
    %v631 = vld [vmem:[%s1 + $0xc80] sm:$0xff]
    %v632 = vld [vmem:[%s1 + $0xc88] sm:$0xff]
    %v633 = vld [vmem:[%s1 + $0xc90] sm:$0xff]
    %v634 = vld [vmem:[%s1 + $0xc98] sm:$0xff]
    %v635 = vld [vmem:[%s1 + $0xca0] sm:$0xff]
    %v636 = vld [vmem:[%s1 + $0xca8] sm:$0xff]
    %v637 = vld [vmem:[%s1 + $0xcb0] sm:$0xff]
    %v638 = vld [vmem:[%s1 + $0xcb8] sm:$0xff]
    %v639 = vld [vmem:[%s1 + $0xcc0] sm:$0xff]
    %v640 = vld [vmem:[%s1 + $0xcc8] sm:$0xff]
    %v641 = vld [vmem:[%s1 + $0xcd0] sm:$0xff]
    %v642 = vld [vmem:[%s1 + $0xcd8] sm:$0xff]
    %v643 = vld [vmem:[%s1 + $0xce0] sm:$0xff]
    %v644 = vld [vmem:[%s1 + $0xce8] sm:$0xff]
    %v645 = vld [vmem:[%s1 + $0xcf0] sm:$0xff]
    %v646 = vld [vmem:[%s1 + $0xcf8] sm:$0xff]
    %v647 = vld [vmem:[%s1 + $0xd00] sm:$0xff]
    %v648 = vld [vmem:[%s1 + $0xd08] sm:$0xff]
    %v649 = vld [vmem:[%s1 + $0xd10] sm:$0xff]
    %v650 = vld [vmem:[%s1 + $0xd18] sm:$0xff]
    %v651 = vld [vmem:[%s1 + $0xd20] sm:$0xff]
    %v652 = vld [vmem:[%s1 + $0xd28] sm:$0xff]
    %v653 = vld [vmem:[%s1 + $0xd30] sm:$0xff]
    %v654 = vld [vmem:[%s1 + $0xd38] sm:$0xff]
    %v655 = vld [vmem:[%s1 + $0xd40] sm:$0xff]
    %v656 = vld [vmem:[%s1 + $0xd48] sm:$0xff]
    %v657 = vld [vmem:[%s1 + $0xd50] sm:$0xff]
    %v658 = vld [vmem:[%s1 + $0xd58] sm:$0xff]
    %v659 = vld [vmem:[%s1 + $0xd60] sm:$0xff]
    %v660 = vld [vmem:[%s1 + $0xd68] sm:$0xff]
    %v661 = vld [vmem:[%s1 + $0xd70] sm:$0xff]
    %v662 = vld [vmem:[%s1 + $0xd78] sm:$0xff]
    %v663 = vld [vmem:[%s1 + $0xd80] sm:$0xff]
    %v664 = vld [vmem:[%s1 + $0xd88] sm:$0xff]
    %v665 = vld [vmem:[%s1 + $0xd90] sm:$0xff]
    %v666 = vld [vmem:[%s1 + $0xd98] sm:$0xff]
    %v667 = vld [vmem:[%s1 + $0xda0] sm:$0xff]
    %v668 = vld [vmem:[%s1 + $0xda8] sm:$0xff]
    %v669 = vld [vmem:[%s1 + $0xdb0] sm:$0xff]
    %v670 = vld [vmem:[%s1 + $0xdb8] sm:$0xff]
    %v671 = vld [vmem:[%s1 + $0xdc0] sm:$0xff]
    %v672 = vld [vmem:[%s1 + $0xdc8] sm:$0xff]
    %v673 = vld [vmem:[%s1 + $0xdd0] sm:$0xff]
    %v674 = vld [vmem:[%s1 + $0xdd8] sm:$0xff]
    %v675 = vld [vmem:[%s1 + $0xde0] sm:$0xff]
    %v676 = vld [vmem:[%s1 + $0xde8] sm:$0xff]
    %v677 = vld [vmem:[%s1 + $0xdf0] sm:$0xff]
    %v678 = vld [vmem:[%s1 + $0xdf8] sm:$0xff]
    %v679 = vld [vmem:[%s1 + $0xe00] sm:$0xff]
    %v680 = vld [vmem:[%s1 + $0xe08] sm:$0xff]
    %v681 = vld [vmem:[%s1 + $0xe10] sm:$0xff]
    %v682 = vld [vmem:[%s1 + $0xe18] sm:$0xff]
    %v683 = vld [vmem:[%s1 + $0xe20] sm:$0xff]
    %v684 = vld [vmem:[%s1 + $0xe28] sm:$0xff]
    %v685 = vld [vmem:[%s1 + $0xe30] sm:$0xff]
    %v686 = vld [vmem:[%s1 + $0xe38] sm:$0xff]
    %v687 = vld [vmem:[%s1 + $0xe40] sm:$0xff]
    %v688 = vld [vmem:[%s1 + $0xe48] sm:$0xff]
    %v689 = vld [vmem:[%s1 + $0xe50] sm:$0xff]
    %v690 = vld [vmem:[%s1 + $0xe58] sm:$0xff]
    %v691 = vld [vmem:[%s1 + $0xe60] sm:$0xff]
    %v692 = vld [vmem:[%s1 + $0xe68] sm:$0xff]
    %v693 = vld [vmem:[%s1 + $0xe70] sm:$0xff]
    %v694 = vld [vmem:[%s1 + $0xe78] sm:$0xff]
    %v695 = vld [vmem:[%s1 + $0xe80] sm:$0xff]
    %v696 = vld [vmem:[%s1 + $0xe88] sm:$0xff]
    %v697 = vld [vmem:[%s1 + $0xe90] sm:$0xff]
    %v698 = vld [vmem:[%s1 + $0xe98] sm:$0xff]
    %v699 = vld [vmem:[%s1 + $0xea0] sm:$0xff]
    %v700 = vld [vmem:[%s1 + $0xea8] sm:$0xff]
    %v701 = vld [vmem:[%s1 + $0xeb0] sm:$0xff]
    %v702 = vld [vmem:[%s1 + $0xeb8] sm:$0xff]
    %v703 = vld [vmem:[%s1 + $0xec0] sm:$0xff]
    %v704 = vld [vmem:[%s1 + $0xec8] sm:$0xff]
    %v705 = vld [vmem:[%s1 + $0xed0] sm:$0xff]
    %v706 = vld [vmem:[%s1 + $0xed8] sm:$0xff]
    %v707 = vld [vmem:[%s1 + $0xee0] sm:$0xff]
    %v708 = vld [vmem:[%s1 + $0xee8] sm:$0xff]
    %v709 = vld [vmem:[%s1 + $0xef0] sm:$0xff]
    %v710 = vld [vmem:[%s1 + $0xef8] sm:$0xff]
    %v711 = vld [vmem:[%s1 + $0xf00] sm:$0xff]
    %v712 = vld [vmem:[%s1 + $0xf08] sm:$0xff]
    %v713 = vld [vmem:[%s1 + $0xf10] sm:$0xff]
    %v714 = vld [vmem:[%s1 + $0xf18] sm:$0xff]
    %v715 = vld [vmem:[%s1 + $0xf20] sm:$0xff]
    %v716 = vld [vmem:[%s1 + $0xf28] sm:$0xff]
    %v717 = vld [vmem:[%s1 + $0xf30] sm:$0xff]
    %v718 = vld [vmem:[%s1 + $0xf38] sm:$0xff]
    %v719 = vld [vmem:[%s1 + $0xf40] sm:$0xff]
    %v720 = vld [vmem:[%s1 + $0xf48] sm:$0xff]
    %v721 = vld [vmem:[%s1 + $0xf50] sm:$0xff]
    %v722 = vld [vmem:[%s1 + $0xf58] sm:$0xff]
    %v723 = vld [vmem:[%s1 + $0xf60] sm:$0xff]
    %v724 = vld [vmem:[%s1 + $0xf68] sm:$0xff]
    %v725 = vld [vmem:[%s1 + $0xf70] sm:$0xff]
    %v726 = vld [vmem:[%s1 + $0xf78] sm:$0xff]
    %v727 = vld [vmem:[%s1 + $0xf80] sm:$0xff]
    %v728 = vld [vmem:[%s1 + $0xf88] sm:$0xff]
    %v729 = vld [vmem:[%s1 + $0xf90] sm:$0xff]
    %v730 = vld [vmem:[%s1 + $0xf98] sm:$0xff]
    %v731 = vld [vmem:[%s1 + $0xfa0] sm:$0xff]
    %v732 = vld [vmem:[%s1 + $0xfa8] sm:$0xff]
    %v733 = vld [vmem:[%s1 + $0xfb0] sm:$0xff]
    %v734 = vld [vmem:[%s1 + $0xfb8] sm:$0xff]
    %v735 = vld [vmem:[%s1 + $0xfc0] sm:$0xff]
    %v736 = vld [vmem:[%s1 + $0xfc8] sm:$0xff]
    %v737 = vld [vmem:[%s1 + $0xfd0] sm:$0xff]
    %v738 = vld [vmem:[%s1 + $0xfd8] sm:$0xff]
    %v739 = vld [vmem:[%s1 + $0xfe0] sm:$0xff]
    %v740 = vld [vmem:[%s1 + $0xfe8] sm:$0xff]
    %v741 = vld [vmem:[%s1 + $0xff0] sm:$0xff]
    %v742 = vld [vmem:[%s1 + $0xff8] sm:$0xff]
    %v743 = vld [vmem:[%s1 + $0x1000] sm:$0xff]
    %v744 = vld [vmem:[%s1 + $0x1008] sm:$0xff]
    %v745 = vld [vmem:[%s1 + $0x1010] sm:$0xff]
    %v746 = vld [vmem:[%s1 + $0x1018] sm:$0xff]
    %v747 = vld [vmem:[%s1 + $0x1020] sm:$0xff]
    %v748 = vld [vmem:[%s1 + $0x1028] sm:$0xff]
    %v749 = vld [vmem:[%s1 + $0x1030] sm:$0xff]
    %v750 = vld [vmem:[%s1 + $0x1038] sm:$0xff]
    %v751 = vld [vmem:[%s1 + $0x1040] sm:$0xff]
    %v752 = vld [vmem:[%s1 + $0x1048] sm:$0xff]
    %v753 = vld [vmem:[%s1 + $0x1050] sm:$0xff]
    %v754 = vld [vmem:[%s1 + $0x1058] sm:$0xff]
    %v755 = vld [vmem:[%s1 + $0x1060] sm:$0xff]
    %v756 = vld [vmem:[%s1 + $0x1068] sm:$0xff]
    %v757 = vld [vmem:[%s1 + $0x1070] sm:$0xff]
    %v758 = vld [vmem:[%s1 + $0x1078] sm:$0xff]
    %v759 = vld [vmem:[%s1 + $0x1080] sm:$0xff]
    %v760 = vld [vmem:[%s1 + $0x1088] sm:$0xff]
    %v761 = vld [vmem:[%s1 + $0x1090] sm:$0xff]
    %v762 = vld [vmem:[%s1 + $0x1098] sm:$0xff]
    %v763 = vld [vmem:[%s1 + $0x10a0] sm:$0xff]
    %v764 = vld [vmem:[%s1 + $0x10a8] sm:$0xff]
    %v765 = vld [vmem:[%s1 + $0x10b0] sm:$0xff]
    %v766 = vld [vmem:[%s1 + $0x10b8] sm:$0xff]
    %v767 = vld [vmem:[%s1 + $0x10c0] sm:$0xff]
    %v768 = vld [vmem:[%s1 + $0x10c8] sm:$0xff]
    %v769 = vld [vmem:[%s1 + $0x10d0] sm:$0xff]
    %v770 = vld [vmem:[%s1 + $0x10d8] sm:$0xff]
    %v771 = vld [vmem:[%s1 + $0x10e0] sm:$0xff]
    %v772 = vld [vmem:[%s1 + $0x10e8] sm:$0xff]
    %v773 = vld [vmem:[%s1 + $0x10f0] sm:$0xff]
    %v774 = vld [vmem:[%s1 + $0x10f8] sm:$0xff]
    %v775 = vld [vmem:[%s1 + $0x1100] sm:$0xff]
    %v776 = vld [vmem:[%s1 + $0x1108] sm:$0xff]
    %v777 = vld [vmem:[%s1 + $0x1110] sm:$0xff]
    %v778 = vld [vmem:[%s1 + $0x1118] sm:$0xff]
    %v779 = vld [vmem:[%s1 + $0x1120] sm:$0xff]
    %v780 = vld [vmem:[%s1 + $0x1128] sm:$0xff]
    %v781 = vld [vmem:[%s1 + $0x1130] sm:$0xff]
    %v782 = vld [vmem:[%s1 + $0x1138] sm:$0xff]
    %v783 = vld [vmem:[%s1 + $0x1140] sm:$0xff]
    %v784 = vld [vmem:[%s1 + $0x1148] sm:$0xff]
    %v785 = vld [vmem:[%s1 + $0x1150] sm:$0xff]
    %v786 = vld [vmem:[%s1 + $0x1158] sm:$0xff]
    %v787 = vld [vmem:[%s1 + $0x1160] sm:$0xff]
    %v788 = vld [vmem:[%s1 + $0x1168] sm:$0xff]
    %v789 = vld [vmem:[%s1 + $0x1170] sm:$0xff]
    %v790 = vld [vmem:[%s1 + $0x1178] sm:$0xff]
    %v791 = vld [vmem:[%s1 + $0x1180] sm:$0xff]
    %v792 = vld [vmem:[%s1 + $0x1188] sm:$0xff]
    %v793 = vld [vmem:[%s1 + $0x1190] sm:$0xff]
    %v794 = vld [vmem:[%s1 + $0x1198] sm:$0xff]
    %v795 = vld [vmem:[%s1 + $0x11a0] sm:$0xff]
    %v796 = vld [vmem:[%s1 + $0x11a8] sm:$0xff]
    %v797 = vld [vmem:[%s1 + $0x11b0] sm:$0xff]
    %v798 = vld [vmem:[%s1 + $0x11b8] sm:$0xff]
    %v799 = vld [vmem:[%s1 + $0x11c0] sm:$0xff]
    %v800 = vld [vmem:[%s1 + $0x11c8] sm:$0xff]
    %v801 = vld [vmem:[%s1 + $0x11d0] sm:$0xff]
    %v802 = vld [vmem:[%s1 + $0x11d8] sm:$0xff]
    %v803 = vld [vmem:[%s1 + $0x11e0] sm:$0xff]
    %v804 = vld [vmem:[%s1 + $0x11e8] sm:$0xff]
    %v805 = vld [vmem:[%s1 + $0x11f0] sm:$0xff]
    %v806 = vld [vmem:[%s1 + $0x11f8] sm:$0xff]
    %v807 = vld [vmem:[%s1 + $0x1200] sm:$0xff]
    %v808 = vld [vmem:[%s1 + $0x1208] sm:$0xff]
    %v809 = vld [vmem:[%s1 + $0x1210] sm:$0xff]
    %v810 = vld [vmem:[%s1 + $0x1218] sm:$0xff]
    %v811 = vld [vmem:[%s1 + $0x1220] sm:$0xff]
    %v812 = vld [vmem:[%s1 + $0x1228] sm:$0xff]
    %v813 = vld [vmem:[%s1 + $0x1230] sm:$0xff]
    %v814 = vld [vmem:[%s1 + $0x1238] sm:$0xff]
    %v815 = vld [vmem:[%s1 + $0x1240] sm:$0xff]
    %v816 = vld [vmem:[%s1 + $0x1248] sm:$0xff]
    %v817 = vld [vmem:[%s1 + $0x1250] sm:$0xff]
    %v818 = vld [vmem:[%s1 + $0x1258] sm:$0xff]
    %v819 = vld [vmem:[%s1 + $0x1260] sm:$0xff]
    %v820 = vld [vmem:[%s1 + $0x1268] sm:$0xff]
    %v821 = vld [vmem:[%s1 + $0x1270] sm:$0xff]
    %v822 = vld [vmem:[%s1 + $0x1278] sm:$0xff]
    %v823 = vld [vmem:[%s1 + $0x1280] sm:$0xff]
    %v824 = vld [vmem:[%s1 + $0x1288] sm:$0xff]
    %v825 = vld [vmem:[%s1 + $0x1290] sm:$0xff]
    %v826 = vld [vmem:[%s1 + $0x1298] sm:$0xff]
    %v827 = vld [vmem:[%s1 + $0x12a0] sm:$0xff]
    %v828 = vld [vmem:[%s1 + $0x12a8] sm:$0xff]
    %v829 = vld [vmem:[%s1 + $0x12b0] sm:$0xff]
    %v830 = vld [vmem:[%s1 + $0x12b8] sm:$0xff]
    %v831 = vld [vmem:[%s1 + $0x12c0] sm:$0xff]
    %v832 = vld [vmem:[%s1 + $0x12c8] sm:$0xff]
    %v833 = vld [vmem:[%s1 + $0x12d0] sm:$0xff]
    %v834 = vld [vmem:[%s1 + $0x12d8] sm:$0xff]
    %v835 = vld [vmem:[%s1 + $0x12e0] sm:$0xff]
    %v836 = vld [vmem:[%s1 + $0x12e8] sm:$0xff]
    %v837 = vld [vmem:[%s1 + $0x12f0] sm:$0xff]
    %v838 = vld [vmem:[%s1 + $0x12f8] sm:$0xff]
    %v839 = vld [vmem:[%s1 + $0x1300] sm:$0xff]
    %v840 = vld [vmem:[%s1 + $0x1308] sm:$0xff]
    %v841 = vld [vmem:[%s1 + $0x1310] sm:$0xff]
    %v842 = vld [vmem:[%s1 + $0x1318] sm:$0xff]
    %v843 = vld [vmem:[%s1 + $0x1320] sm:$0xff]
    %v844 = vld [vmem:[%s1 + $0x1328] sm:$0xff]
    %v845 = vld [vmem:[%s1 + $0x1330] sm:$0xff]
    %v846 = vld [vmem:[%s1 + $0x1338] sm:$0xff]
    %v847 = vld [vmem:[%s1 + $0x1340] sm:$0xff]
    %v848 = vld [vmem:[%s1 + $0x1348] sm:$0xff]
    %v849 = vld [vmem:[%s1 + $0x1350] sm:$0xff]
    %v850 = vld [vmem:[%s1 + $0x1358] sm:$0xff]
    %v851 = vld [vmem:[%s1 + $0x1360] sm:$0xff]
    %v852 = vld [vmem:[%s1 + $0x1368] sm:$0xff]
    %v853 = vld [vmem:[%s1 + $0x1370] sm:$0xff]
    %v854 = vld [vmem:[%s1 + $0x1378] sm:$0xff]
    %v855 = vld [vmem:[%s1 + $0x1380] sm:$0xff]
    %v856 = vld [vmem:[%s1 + $0x1388] sm:$0xff]
    %v857 = vld [vmem:[%s1 + $0x1390] sm:$0xff]
    %v858 = vld [vmem:[%s1 + $0x1398] sm:$0xff]
    %v859 = vld [vmem:[%s1 + $0x13a0] sm:$0xff]
    %v860 = vld [vmem:[%s1 + $0x13a8] sm:$0xff]
    %v861 = vld [vmem:[%s1 + $0x13b0] sm:$0xff]
    %v862 = vld [vmem:[%s1 + $0x13b8] sm:$0xff]
    %v863 = vld [vmem:[%s1 + $0x13c0] sm:$0xff]
    %v864 = vld [vmem:[%s1 + $0x13c8] sm:$0xff]
    %v865 = vld [vmem:[%s1 + $0x13d0] sm:$0xff]
    %v866 = vld [vmem:[%s1 + $0x13d8] sm:$0xff]
    %v867 = vld [vmem:[%s1 + $0x13e0] sm:$0xff]
    %v868 = vld [vmem:[%s1 + $0x13e8] sm:$0xff]
    %v869 = vld [vmem:[%s1 + $0x13f0] sm:$0xff]
    %v870 = vld [vmem:[%s1 + $0x13f8] sm:$0xff]
    %v871 = vld [vmem:[%s1 + $0x1400] sm:$0xff]
    %v872 = vld [vmem:[%s1 + $0x1408] sm:$0xff]
    %v873 = vld [vmem:[%s1 + $0x1410] sm:$0xff]
    %v874 = vld [vmem:[%s1 + $0x1418] sm:$0xff]
    %v875 = vld [vmem:[%s1 + $0x1420] sm:$0xff]
    %v876 = vld [vmem:[%s1 + $0x1428] sm:$0xff]
    %v877 = vld [vmem:[%s1 + $0x1430] sm:$0xff]
    %v878 = vld [vmem:[%s1 + $0x1438] sm:$0xff]
    %v879 = vld [vmem:[%s1 + $0x1440] sm:$0xff]
    %v880 = vld [vmem:[%s1 + $0x1448] sm:$0xff]
    %v881 = vld [vmem:[%s1 + $0x1450] sm:$0xff]
    %v882 = vld [vmem:[%s1 + $0x1458] sm:$0xff]
    %v883 = vld [vmem:[%s1 + $0x1460] sm:$0xff]
    %v884 = vld [vmem:[%s1 + $0x1468] sm:$0xff]
    %v885 = vld [vmem:[%s1 + $0x1470] sm:$0xff]
    %v886 = vld [vmem:[%s1 + $0x1478] sm:$0xff]
    %v887 = vld [vmem:[%s1 + $0x1480] sm:$0xff]
    %v888 = vld [vmem:[%s1 + $0x1488] sm:$0xff]
    %v889 = vld [vmem:[%s1 + $0x1490] sm:$0xff]
    %v890 = vld [vmem:[%s1 + $0x1498] sm:$0xff]
    %v891 = vld [vmem:[%s1 + $0x14a0] sm:$0xff]
    %v892 = vld [vmem:[%s1 + $0x14a8] sm:$0xff]
    %v893 = vld [vmem:[%s1 + $0x14b0] sm:$0xff]
    %v894 = vld [vmem:[%s1 + $0x14b8] sm:$0xff]
    %v895 = vld [vmem:[%s1 + $0x14c0] sm:$0xff]
    %v896 = vld [vmem:[%s1 + $0x14c8] sm:$0xff]
    %v897 = vld [vmem:[%s1 + $0x14d0] sm:$0xff]
    %v898 = vld [vmem:[%s1 + $0x14d8] sm:$0xff]
    %v899 = vld [vmem:[%s1 + $0x14e0] sm:$0xff]
    %v900 = vld [vmem:[%s1 + $0x14e8] sm:$0xff]
    %v901 = vld [vmem:[%s1 + $0x14f0] sm:$0xff]
    %v902 = vld [vmem:[%s1 + $0x14f8] sm:$0xff]
    %v903 = vld [vmem:[%s1 + $0x1500] sm:$0xff]
    %v904 = vld [vmem:[%s1 + $0x1508] sm:$0xff]
    %v905 = vld [vmem:[%s1 + $0x1510] sm:$0xff]
    %v906 = vld [vmem:[%s1 + $0x1518] sm:$0xff]
    %v907 = vld [vmem:[%s1 + $0x1520] sm:$0xff]
    %v908 = vld [vmem:[%s1 + $0x1528] sm:$0xff]
    %v909 = vld [vmem:[%s1 + $0x1530] sm:$0xff]
    %v910 = vld [vmem:[%s1 + $0x1538] sm:$0xff]
    %v911 = vld [vmem:[%s1 + $0x1540] sm:$0xff]
    %v912 = vld [vmem:[%s1 + $0x1548] sm:$0xff]
    %v913 = vld [vmem:[%s1 + $0x1550] sm:$0xff]
    %v914 = vld [vmem:[%s1 + $0x1558] sm:$0xff]
    %v915 = vld [vmem:[%s1 + $0x1560] sm:$0xff]
    %v916 = vld [vmem:[%s1 + $0x1568] sm:$0xff]
    %v917 = vld [vmem:[%s1 + $0x1570] sm:$0xff]
    %v918 = vld [vmem:[%s1 + $0x1578] sm:$0xff]
    %v919 = vld [vmem:[%s1 + $0x1580] sm:$0xff]
    %v920 = vld [vmem:[%s1 + $0x1588] sm:$0xff]
    %v921 = vld [vmem:[%s1 + $0x1590] sm:$0xff]
    %v922 = vld [vmem:[%s1 + $0x1598] sm:$0xff]
    %v923 = vld [vmem:[%s1 + $0x15a0] sm:$0xff]
    %v924 = vld [vmem:[%s1 + $0x15a8] sm:$0xff]
    %v925 = vld [vmem:[%s1 + $0x15b0] sm:$0xff]
    %v926 = vld [vmem:[%s1 + $0x15b8] sm:$0xff]
    %v927 = vld [vmem:[%s1 + $0x15c0] sm:$0xff]
    %v928 = vld [vmem:[%s1 + $0x15c8] sm:$0xff]
    %v929 = vld [vmem:[%s1 + $0x15d0] sm:$0xff]
    %v930 = vld [vmem:[%s1 + $0x15d8] sm:$0xff]
    %v931 = vld [vmem:[%s1 + $0x15e0] sm:$0xff]
    %v932 = vld [vmem:[%s1 + $0x15e8] sm:$0xff]
    %v933 = vld [vmem:[%s1 + $0x15f0] sm:$0xff]
    %v934 = vld [vmem:[%s1 + $0x15f8] sm:$0xff]
    %v935 = vld [vmem:[%s1 + $0x1600] sm:$0xff]
    %v936 = vld [vmem:[%s1 + $0x1608] sm:$0xff]
    %v937 = vld [vmem:[%s1 + $0x1610] sm:$0xff]
    %v938 = vld [vmem:[%s1 + $0x1618] sm:$0xff]
    %v939 = vld [vmem:[%s1 + $0x1620] sm:$0xff]
    %v940 = vld [vmem:[%s1 + $0x1628] sm:$0xff]
    %v941 = vld [vmem:[%s1 + $0x1630] sm:$0xff]
    %v942 = vld [vmem:[%s1 + $0x1638] sm:$0xff]
    %v943 = vld [vmem:[%s1 + $0x1640] sm:$0xff]
    %v944 = vld [vmem:[%s1 + $0x1648] sm:$0xff]
    %v945 = vld [vmem:[%s1 + $0x1650] sm:$0xff]
    %v946 = vld [vmem:[%s1 + $0x1658] sm:$0xff]
    %v947 = vld [vmem:[%s1 + $0x1660] sm:$0xff]
    %v948 = vld [vmem:[%s1 + $0x1668] sm:$0xff]
    %v949 = vld [vmem:[%s1 + $0x1670] sm:$0xff]
    %v950 = vld [vmem:[%s1 + $0x1678] sm:$0xff]
    %v951 = vld [vmem:[%s1 + $0x1680] sm:$0xff]
    %v952 = vld [vmem:[%s1 + $0x1688] sm:$0xff]
    %v953 = vld [vmem:[%s1 + $0x1690] sm:$0xff]
    %v954 = vld [vmem:[%s1 + $0x1698] sm:$0xff]
    %v955 = vld [vmem:[%s1 + $0x16a0] sm:$0xff]
    %v956 = vld [vmem:[%s1 + $0x16a8] sm:$0xff]
    %v957 = vld [vmem:[%s1 + $0x16b0] sm:$0xff]
    %v958 = vld [vmem:[%s1 + $0x16b8] sm:$0xff]
    %v959 = vld [vmem:[%s1 + $0x16c0] sm:$0xff]
    %v960 = vld [vmem:[%s1 + $0x16c8] sm:$0xff]
    %v961 = vld [vmem:[%s1 + $0x16d0] sm:$0xff]
    %v962 = vld [vmem:[%s1 + $0x16d8] sm:$0xff]
    %v963 = vld [vmem:[%s1 + $0x16e0] sm:$0xff]
    %v964 = vld [vmem:[%s1 + $0x16e8] sm:$0xff]
    %v965 = vld [vmem:[%s1 + $0x16f0] sm:$0xff]
    %v966 = vld [vmem:[%s1 + $0x16f8] sm:$0xff]
    %v967 = vld [vmem:[%s1 + $0x1700] sm:$0xff]
    %v968 = vld [vmem:[%s1 + $0x1708] sm:$0xff]
    %v969 = vld [vmem:[%s1 + $0x1710] sm:$0xff]
    %v970 = vld [vmem:[%s1 + $0x1718] sm:$0xff]
    %v971 = vld [vmem:[%s1 + $0x1720] sm:$0xff]
    %v972 = vld [vmem:[%s1 + $0x1728] sm:$0xff]
    %v973 = vld [vmem:[%s1 + $0x1730] sm:$0xff]
    %v974 = vld [vmem:[%s1 + $0x1738] sm:$0xff]
    %v975 = vld [vmem:[%s1 + $0x1740] sm:$0xff]
    %v976 = vld [vmem:[%s1 + $0x1748] sm:$0xff]
    %v977 = vld [vmem:[%s1 + $0x1750] sm:$0xff]
    %v978 = vld [vmem:[%s1 + $0x1758] sm:$0xff]
    %v979 = vld [vmem:[%s1 + $0x1760] sm:$0xff]
    %v980 = vld [vmem:[%s1 + $0x1768] sm:$0xff]
    %v981 = vld [vmem:[%s1 + $0x1770] sm:$0xff]
    %v982 = vld [vmem:[%s1 + $0x1778] sm:$0xff]
    %v983 = vld [vmem:[%s1 + $0x1780] sm:$0xff]
    %v984 = vld [vmem:[%s1 + $0x1788] sm:$0xff]
    %v985 = vld [vmem:[%s1 + $0x1790] sm:$0xff]
    %v986 = vld [vmem:[%s1 + $0x1798] sm:$0xff]
    %v987 = vld [vmem:[%s1 + $0x17a0] sm:$0xff]
    %v988 = vld [vmem:[%s1 + $0x17a8] sm:$0xff]
    %v989 = vld [vmem:[%s1 + $0x17b0] sm:$0xff]
    %v990 = vld [vmem:[%s1 + $0x17b8] sm:$0xff]
    %v991 = vld [vmem:[%s1 + $0x17c0] sm:$0xff]
    %v992 = vld [vmem:[%s1 + $0x17c8] sm:$0xff]
    %v993 = vld [vmem:[%s1 + $0x17d0] sm:$0xff]
    %v994 = vld [vmem:[%s1 + $0x17d8] sm:$0xff]
    %v995 = vld [vmem:[%s1 + $0x17e0] sm:$0xff]
    %v996 = vld [vmem:[%s1 + $0x17e8] sm:$0xff]
    %v997 = vld [vmem:[%s1 + $0x17f0] sm:$0xff]
    %v998 = vld [vmem:[%s1 + $0x17f8] sm:$0xff]
    %v999 = vld [vmem:[%s1 + $0x1800] sm:$0xff]
    %v1000 = vld [vmem:[%s1 + $0x1808] sm:$0xff]
    %v1001 = vld [vmem:[%s1 + $0x1810] sm:$0xff]
    %v1002 = vld [vmem:[%s1 + $0x1818] sm:$0xff]
    %v1003 = vld [vmem:[%s1 + $0x1820] sm:$0xff]
    %v1004 = vld [vmem:[%s1 + $0x1828] sm:$0xff]
    %v1005 = vld [vmem:[%s1 + $0x1830] sm:$0xff]
    %v1006 = vld [vmem:[%s1 + $0x1838] sm:$0xff]
    %v1007 = vld [vmem:[%s1 + $0x1840] sm:$0xff]
    %v1008 = vld [vmem:[%s1 + $0x1848] sm:$0xff]
    %v1009 = vld [vmem:[%s1 + $0x1850] sm:$0xff]
    %v1010 = vld [vmem:[%s1 + $0x1858] sm:$0xff]
    %v1011 = vld [vmem:[%s1 + $0x1860] sm:$0xff]
    %v1012 = vld [vmem:[%s1 + $0x1868] sm:$0xff]
    %v1013 = vld [vmem:[%s1 + $0x1870] sm:$0xff]
    %v1014 = vld [vmem:[%s1 + $0x1878] sm:$0xff]
    %v1015 = vld [vmem:[%s1 + $0x1880] sm:$0xff]
    %v1016 = vld [vmem:[%s1 + $0x1888] sm:$0xff]
    %v1017 = vld [vmem:[%s1 + $0x1890] sm:$0xff]
    %v1018 = vld [vmem:[%s1 + $0x1898] sm:$0xff]
    %v1019 = vld [vmem:[%s1 + $0x18a0] sm:$0xff]
    %v1020 = vld [vmem:[%s1 + $0x18a8] sm:$0xff]
    %v1021 = vld [vmem:[%s1 + $0x18b0] sm:$0xff]
    %v1022 = vld [vmem:[%s1 + $0x18b8] sm:$0xff]
    %v1023 = vld [vmem:[%s1 + $0x18c0] sm:$0xff]
    %v1024 = vld [vmem:[%s1 + $0x18c8] sm:$0xff]
    %v1025 = vld [vmem:[%s1 + $0x18d0] sm:$0xff]
    %v1026 = vld [vmem:[%s1 + $0x18d8] sm:$0xff]
    %v1027 = vld [vmem:[%s1 + $0x18e0] sm:$0xff]
    %v1028 = vld [vmem:[%s1 + $0x18e8] sm:$0xff]
    %v1029 = vld [vmem:[%s1 + $0x18f0] sm:$0xff]
    %v1030 = vld [vmem:[%s1 + $0x18f8] sm:$0xff]
    %v1031 = vld [vmem:[%s1 + $0x1900] sm:$0xff]
    %v1032 = vld [vmem:[%s1 + $0x1908] sm:$0xff]
    %v1033 = vld [vmem:[%s1 + $0x1910] sm:$0xff]
    %v1034 = vld [vmem:[%s1 + $0x1918] sm:$0xff]
    %v1035 = vld [vmem:[%s1 + $0x1920] sm:$0xff]
    %v1036 = vld [vmem:[%s1 + $0x1928] sm:$0xff]
    %v1037 = vld [vmem:[%s1 + $0x1930] sm:$0xff]
    %v1038 = vld [vmem:[%s1 + $0x1938] sm:$0xff]
    %v1039 = vld [vmem:[%s1 + $0x1940] sm:$0xff]
    %v1040 = vld [vmem:[%s1 + $0x1948] sm:$0xff]
    %v1041 = vld [vmem:[%s1 + $0x1950] sm:$0xff]
    %v1042 = vld [vmem:[%s1 + $0x1958] sm:$0xff]
    %v1043 = vld [vmem:[%s1 + $0x1960] sm:$0xff]
    %v1044 = vld [vmem:[%s1 + $0x1968] sm:$0xff]
    %v1045 = vld [vmem:[%s1 + $0x1970] sm:$0xff]
    %v1046 = vld [vmem:[%s1 + $0x1978] sm:$0xff]
    %v1047 = vld [vmem:[%s1 + $0x1980] sm:$0xff]
    %v1048 = vld [vmem:[%s1 + $0x1988] sm:$0xff]
    %v1049 = vld [vmem:[%s1 + $0x1990] sm:$0xff]
    %v1050 = vld [vmem:[%s1 + $0x1998] sm:$0xff]
    %v1051 = vld [vmem:[%s1 + $0x19a0] sm:$0xff]
    %v1052 = vld [vmem:[%s1 + $0x19a8] sm:$0xff]
    %v1053 = vld [vmem:[%s1 + $0x19b0] sm:$0xff]
    %v1054 = vld [vmem:[%s1 + $0x19b8] sm:$0xff]
    %v1055 = vld [vmem:[%s1 + $0x19c0] sm:$0xff]
    %v1056 = vld [vmem:[%s1 + $0x19c8] sm:$0xff]
    %v1057 = vld [vmem:[%s1 + $0x19d0] sm:$0xff]
    %v1058 = vld [vmem:[%s1 + $0x19d8] sm:$0xff]
    %v1059 = vld [vmem:[%s1 + $0x19e0] sm:$0xff]
    %v1060 = vld [vmem:[%s1 + $0x19e8] sm:$0xff]
    %v1061 = vld [vmem:[%s1 + $0x19f0] sm:$0xff]
    %v1062 = vld [vmem:[%s1 + $0x19f8] sm:$0xff]
    %v1063 = vld [vmem:[%s1 + $0x1a00] sm:$0xff]
    %v1064 = vld [vmem:[%s1 + $0x1a08] sm:$0xff]
    %v1065 = vld [vmem:[%s1 + $0x1a10] sm:$0xff]
    %v1066 = vld [vmem:[%s1 + $0x1a18] sm:$0xff]
    %v1067 = vld [vmem:[%s1 + $0x1a20] sm:$0xff]
    %v1068 = vld [vmem:[%s1 + $0x1a28] sm:$0xff]
    %v1069 = vld [vmem:[%s1 + $0x1a30] sm:$0xff]
    %v1070 = vld [vmem:[%s1 + $0x1a38] sm:$0xff]
    %v1071 = vld [vmem:[%s1 + $0x1a40] sm:$0xff]
    %v1072 = vld [vmem:[%s1 + $0x1a48] sm:$0xff]
    %v1073 = vld [vmem:[%s1 + $0x1a50] sm:$0xff]
    %v1074 = vld [vmem:[%s1 + $0x1a58] sm:$0xff]
    %v1075 = vld [vmem:[%s1 + $0x1a60] sm:$0xff]
    %v1076 = vld [vmem:[%s1 + $0x1a68] sm:$0xff]
    %v1077 = vld [vmem:[%s1 + $0x1a70] sm:$0xff]
    %v1078 = vld [vmem:[%s1 + $0x1a78] sm:$0xff]
    %v1079 = vld [vmem:[%s1 + $0x1a80] sm:$0xff]
    %v1080 = vld [vmem:[%s1 + $0x1a88] sm:$0xff]
    %v1081 = vld [vmem:[%s1 + $0x1a90] sm:$0xff]
    %v1082 = vld [vmem:[%s1 + $0x1a98] sm:$0xff]
    %v1083 = vld [vmem:[%s1 + $0x1aa0] sm:$0xff]
    %v1084 = vld [vmem:[%s1 + $0x1aa8] sm:$0xff]
    %v1085 = vld [vmem:[%s1 + $0x1ab0] sm:$0xff]
    %v1086 = vld [vmem:[%s1 + $0x1ab8] sm:$0xff]
    %v1087 = vld [vmem:[%s1 + $0x1ac0] sm:$0xff]
    %v1088 = vld [vmem:[%s1 + $0x1ac8] sm:$0xff]
    %v1089 = vld [vmem:[%s1 + $0x1ad0] sm:$0xff]
    %v1090 = vld [vmem:[%s1 + $0x1ad8] sm:$0xff]
    %v1091 = vld [vmem:[%s1 + $0x1ae0] sm:$0xff]
    %v1092 = vld [vmem:[%s1 + $0x1ae8] sm:$0xff]
    %v1093 = vld [vmem:[%s1 + $0x1af0] sm:$0xff]
    %v1094 = vld [vmem:[%s1 + $0x1af8] sm:$0xff]
    %v1095 = vld [vmem:[%s1 + $0x1b00] sm:$0xff]
    %v1096 = vld [vmem:[%s1 + $0x1b08] sm:$0xff]
    %v1097 = vld [vmem:[%s1 + $0x1b10] sm:$0xff]
    %v1098 = vld [vmem:[%s1 + $0x1b18] sm:$0xff]
    %v1099 = vld [vmem:[%s1 + $0x1b20] sm:$0xff]
    %v1100 = vld [vmem:[%s1 + $0x1b28] sm:$0xff]
    %v1101 = vld [vmem:[%s1 + $0x1b30] sm:$0xff]
    %v1102 = vld [vmem:[%s1 + $0x1b38] sm:$0xff]
    %v1103 = vld [vmem:[%s1 + $0x1b40] sm:$0xff]
    %v1104 = vld [vmem:[%s1 + $0x1b48] sm:$0xff]
    %v1105 = vld [vmem:[%s1 + $0x1b50] sm:$0xff]
    %v1106 = vld [vmem:[%s1 + $0x1b58] sm:$0xff]
    %v1107 = vld [vmem:[%s1 + $0x1b60] sm:$0xff]
    %v1108 = vld [vmem:[%s1 + $0x1b68] sm:$0xff]
    %v1109 = vld [vmem:[%s1 + $0x1b70] sm:$0xff]
    %v1110 = vld [vmem:[%s1 + $0x1b78] sm:$0xff]
    %v1111 = vld [vmem:[%s1 + $0x1b80] sm:$0xff]
    %v1112 = vld [vmem:[%s1 + $0x1b88] sm:$0xff]
    %v1113 = vld [vmem:[%s1 + $0x1b90] sm:$0xff]
    %v1114 = vld [vmem:[%s1 + $0x1b98] sm:$0xff]
    %v1115 = vld [vmem:[%s1 + $0x1ba0] sm:$0xff]
    %v1116 = vld [vmem:[%s1 + $0x1ba8] sm:$0xff]
    %v1117 = vld [vmem:[%s1 + $0x1bb0] sm:$0xff]
    %v1118 = vld [vmem:[%s1 + $0x1bb8] sm:$0xff]
    %v1119 = vld [vmem:[%s1 + $0x1bc0] sm:$0xff]
    %v1120 = vld [vmem:[%s1 + $0x1bc8] sm:$0xff]
    %v1121 = vld [vmem:[%s1 + $0x1bd0] sm:$0xff]
    %v1122 = vld [vmem:[%s1 + $0x1bd8] sm:$0xff]
    %v1123 = vld [vmem:[%s1 + $0x1be0] sm:$0xff]
    %v1124 = vld [vmem:[%s1 + $0x1be8] sm:$0xff]
    %v1125 = vld [vmem:[%s1 + $0x1bf0] sm:$0xff]
    %v1126 = vld [vmem:[%s1 + $0x1bf8] sm:$0xff]
    %v1127 = vld [vmem:[%s1 + $0x1c00] sm:$0xff]
    %v1128 = vld [vmem:[%s1 + $0x1c08] sm:$0xff]
    %v1129 = vld [vmem:[%s1 + $0x1c10] sm:$0xff]
    %v1130 = vld [vmem:[%s1 + $0x1c18] sm:$0xff]
    %v1131 = vld [vmem:[%s1 + $0x1c20] sm:$0xff]
    %v1132 = vld [vmem:[%s1 + $0x1c28] sm:$0xff]
    %v1133 = vld [vmem:[%s1 + $0x1c30] sm:$0xff]
    %v1134 = vld [vmem:[%s1 + $0x1c38] sm:$0xff]
    %v1135 = vld [vmem:[%s1 + $0x1c40] sm:$0xff]
    %v1136 = vld [vmem:[%s1 + $0x1c48] sm:$0xff]
    %v1137 = vld [vmem:[%s1 + $0x1c50] sm:$0xff]
    %v1138 = vld [vmem:[%s1 + $0x1c58] sm:$0xff]
    %v1139 = vld [vmem:[%s1 + $0x1c60] sm:$0xff]
    %v1140 = vld [vmem:[%s1 + $0x1c68] sm:$0xff]
    %v1141 = vld [vmem:[%s1 + $0x1c70] sm:$0xff]
    %v1142 = vld [vmem:[%s1 + $0x1c78] sm:$0xff]
    %v1143 = vld [vmem:[%s1 + $0x1c80] sm:$0xff]
    %v1144 = vld [vmem:[%s1 + $0x1c88] sm:$0xff]
    %v1145 = vld [vmem:[%s1 + $0x1c90] sm:$0xff]
    %v1146 = vld [vmem:[%s1 + $0x1c98] sm:$0xff]
    %v1147 = vld [vmem:[%s1 + $0x1ca0] sm:$0xff]
    %v1148 = vld [vmem:[%s1 + $0x1ca8] sm:$0xff]
    %v1149 = vld [vmem:[%s1 + $0x1cb0] sm:$0xff]
    %v1150 = vld [vmem:[%s1 + $0x1cb8] sm:$0xff]
    %v1151 = vld [vmem:[%s1 + $0x1cc0] sm:$0xff]
    %v1152 = vld [vmem:[%s1 + $0x1cc8] sm:$0xff]
    %v1153 = vld [vmem:[%s1 + $0x1cd0] sm:$0xff]
    %v1154 = vld [vmem:[%s1 + $0x1cd8] sm:$0xff]
    %v1155 = vld [vmem:[%s1 + $0x1ce0] sm:$0xff]
    %v1156 = vld [vmem:[%s1 + $0x1ce8] sm:$0xff]
    %v1157 = vld [vmem:[%s1 + $0x1cf0] sm:$0xff]
    %v1158 = vld [vmem:[%s1 + $0x1cf8] sm:$0xff]
    %v1159 = vld [vmem:[%s1 + $0x1d00] sm:$0xff]
    %v1160 = vld [vmem:[%s1 + $0x1d08] sm:$0xff]
    %v1161 = vld [vmem:[%s1 + $0x1d10] sm:$0xff]
    %v1162 = vld [vmem:[%s1 + $0x1d18] sm:$0xff]
    %v1163 = vld [vmem:[%s1 + $0x1d20] sm:$0xff]
    %v1164 = vld [vmem:[%s1 + $0x1d28] sm:$0xff]
    %v1165 = vld [vmem:[%s1 + $0x1d30] sm:$0xff]
    %v1166 = vld [vmem:[%s1 + $0x1d38] sm:$0xff]
    %v1167 = vld [vmem:[%s1 + $0x1d40] sm:$0xff]
    %v1168 = vld [vmem:[%s1 + $0x1d48] sm:$0xff]
    %v1169 = vld [vmem:[%s1 + $0x1d50] sm:$0xff]
    %v1170 = vld [vmem:[%s1 + $0x1d58] sm:$0xff]
    %v1171 = vld [vmem:[%s1 + $0x1d60] sm:$0xff]
    %v1172 = vld [vmem:[%s1 + $0x1d68] sm:$0xff]
    %v1173 = vld [vmem:[%s1 + $0x1d70] sm:$0xff]
    %v1174 = vld [vmem:[%s1 + $0x1d78] sm:$0xff]
    %v1175 = vld [vmem:[%s1 + $0x1d80] sm:$0xff]
    %v1176 = vld [vmem:[%s1 + $0x1d88] sm:$0xff]
    %v1177 = vld [vmem:[%s1 + $0x1d90] sm:$0xff]
    %v1178 = vld [vmem:[%s1 + $0x1d98] sm:$0xff]
    %v1179 = vld [vmem:[%s1 + $0x1da0] sm:$0xff]
    %v1180 = vld [vmem:[%s1 + $0x1da8] sm:$0xff]
    %v1181 = vld [vmem:[%s1 + $0x1db0] sm:$0xff]
    %v1182 = vld [vmem:[%s1 + $0x1db8] sm:$0xff]
    %v1183 = vld [vmem:[%s1 + $0x1dc0] sm:$0xff]
    %v1184 = vld [vmem:[%s1 + $0x1dc8] sm:$0xff]
    %v1185 = vld [vmem:[%s1 + $0x1dd0] sm:$0xff]
    %v1186 = vld [vmem:[%s1 + $0x1dd8] sm:$0xff]
    %v1187 = vld [vmem:[%s1 + $0x1de0] sm:$0xff]
    %v1188 = vld [vmem:[%s1 + $0x1de8] sm:$0xff]
    %v1189 = vld [vmem:[%s1 + $0x1df0] sm:$0xff]
    %v1190 = vld [vmem:[%s1 + $0x1df8] sm:$0xff]
    %v1191 = vld [vmem:[%s1 + $0x1e00] sm:$0xff]
    %v1192 = vld [vmem:[%s1 + $0x1e08] sm:$0xff]
    %v1193 = vld [vmem:[%s1 + $0x1e10] sm:$0xff]
    %v1194 = vld [vmem:[%s1 + $0x1e18] sm:$0xff]
    %v1195 = vld [vmem:[%s1 + $0x1e20] sm:$0xff]
    %v1196 = vld [vmem:[%s1 + $0x1e28] sm:$0xff]
    %v1197 = vld [vmem:[%s1 + $0x1e30] sm:$0xff]
    %v1198 = vld [vmem:[%s1 + $0x1e38] sm:$0xff]
    %v1199 = vld [vmem:[%s1 + $0x1e40] sm:$0xff]
    %v1200 = vld [vmem:[%s1 + $0x1e48] sm:$0xff]
    %v1201 = vld [vmem:[%s1 + $0x1e50] sm:$0xff]
    %v1202 = vld [vmem:[%s1 + $0x1e58] sm:$0xff]
    %v1203 = vld [vmem:[%s1 + $0x1e60] sm:$0xff]
    %v1204 = vld [vmem:[%s1 + $0x1e68] sm:$0xff]
    %v1205 = vld [vmem:[%s1 + $0x1e70] sm:$0xff]
    %v1206 = vld [vmem:[%s1 + $0x1e78] sm:$0xff]
    %v1207 = vld [vmem:[%s1 + $0x1e80] sm:$0xff]
    %v1208 = vld [vmem:[%s1 + $0x1e88] sm:$0xff]
    %v1209 = vld [vmem:[%s1 + $0x1e90] sm:$0xff]
    %v1210 = vld [vmem:[%s1 + $0x1e98] sm:$0xff]
    %v1211 = vld [vmem:[%s1 + $0x1ea0] sm:$0xff]
    %v1212 = vld [vmem:[%s1 + $0x1ea8] sm:$0xff]
    %v1213 = vld [vmem:[%s1 + $0x1eb0] sm:$0xff]
    %v1214 = vld [vmem:[%s1 + $0x1eb8] sm:$0xff]
    %v1215 = vld [vmem:[%s1 + $0x1ec0] sm:$0xff]
    %v1216 = vld [vmem:[%s1 + $0x1ec8] sm:$0xff]
    %v1217 = vld [vmem:[%s1 + $0x1ed0] sm:$0xff]
    %v1218 = vld [vmem:[%s1 + $0x1ed8] sm:$0xff]
    %v1219 = vld [vmem:[%s1 + $0x1ee0] sm:$0xff]
    %v1220 = vld [vmem:[%s1 + $0x1ee8] sm:$0xff]
    %v1221 = vld [vmem:[%s1 + $0x1ef0] sm:$0xff]
    %v1222 = vld [vmem:[%s1 + $0x1ef8] sm:$0xff]
    %v1223 = vld [vmem:[%s1 + $0x1f00] sm:$0xff]
    %v1224 = vld [vmem:[%s1 + $0x1f08] sm:$0xff]
    %v1225 = vld [vmem:[%s1 + $0x1f10] sm:$0xff]
    %v1226 = vld [vmem:[%s1 + $0x1f18] sm:$0xff]
    %v1227 = vld [vmem:[%s1 + $0x1f20] sm:$0xff]
    %v1228 = vld [vmem:[%s1 + $0x1f28] sm:$0xff]
    %v1229 = vld [vmem:[%s1 + $0x1f30] sm:$0xff]
    %v1230 = vld [vmem:[%s1 + $0x1f38] sm:$0xff]
    %v1231 = vld [vmem:[%s1 + $0x1f40] sm:$0xff]
    %v1232 = vld [vmem:[%s1 + $0x1f48] sm:$0xff]
    %v1233 = vld [vmem:[%s1 + $0x1f50] sm:$0xff]
    %v1234 = vld [vmem:[%s1 + $0x1f58] sm:$0xff]
    %v1235 = vld [vmem:[%s1 + $0x1f60] sm:$0xff]
    %v1236 = vld [vmem:[%s1 + $0x1f68] sm:$0xff]
    %v1237 = vld [vmem:[%s1 + $0x1f70] sm:$0xff]
    %v1238 = vld [vmem:[%s1 + $0x1f78] sm:$0xff]
    %v1239 = vld [vmem:[%s1 + $0x1f80] sm:$0xff]
    %v1240 = vld [vmem:[%s1 + $0x1f88] sm:$0xff]
    %v1241 = vld [vmem:[%s1 + $0x1f90] sm:$0xff]
    %v1242 = vld [vmem:[%s1 + $0x1f98] sm:$0xff]
    %v1243 = vld [vmem:[%s1 + $0x1fa0] sm:$0xff]
    %v1244 = vld [vmem:[%s1 + $0x1fa8] sm:$0xff]
    %v1245 = vld [vmem:[%s1 + $0x1fb0] sm:$0xff]
    %v1246 = vld [vmem:[%s1 + $0x1fb8] sm:$0xff]
    %v1247 = vld [vmem:[%s1 + $0x1fc0] sm:$0xff]
    %v1248 = vld [vmem:[%s1 + $0x1fc8] sm:$0xff]
    %v1249 = vld [vmem:[%s1 + $0x1fd0] sm:$0xff]
    %v1250 = vld [vmem:[%s1 + $0x1fd8] sm:$0xff]
    %v1251 = vld [vmem:[%s1 + $0x1fe0] sm:$0xff]
    %v1252 = vld [vmem:[%s1 + $0x1fe8] sm:$0xff]
    %v1253 = vld [vmem:[%s1 + $0x1ff0] sm:$0xff]
    %v1254 = vld [vmem:[%s1 + $0x1ff8] sm:$0xff]
    %v1255 = vld [vmem:[%s2] sm:$0xf]
    %v1257 = vlaneseq
    %v1258 = vshrl.u32 %v1257, 7
    %v1259 = vsub.s32 0, %v1258
    %v1260 = vrot.slane %v1255, %v1259
    %v1261 = vlaneseq
    %v1262 = vshrl.u32 %v1261, 7
    %v1263 = vsub.s32 1, %v1262
    %v1264 = vrot.slane %v1255, %v1263
    %v1265 = vlaneseq
    %v1266 = vshrl.u32 %v1265, 7
    %v1267 = vsub.s32 2, %v1266
    %v1268 = vrot.slane %v1255, %v1267
    %v1269 = vlaneseq
    %v1270 = vshrl.u32 %v1269, 7
    %v1271 = vsub.s32 3, %v1270
    %v1272 = vrot.slane %v1255, %v1271
    %v2301 = vunpack.c.l.b16 %v231
    %v2302 = vunpack.c.h.b16 %v231
    %v2303 = vunpack.c.l.b16 %v232
    %v2304 = vunpack.c.h.b16 %v232
    %v2305 = vunpack.c.l.b16 %v233
    %v2306 = vunpack.c.h.b16 %v233
    %v2307 = vunpack.c.l.b16 %v234
    %v2308 = vunpack.c.h.b16 %v234
    %v2309 = vunpack.c.l.b16 %v235
    %v2310 = vunpack.c.h.b16 %v235
    %v2311 = vunpack.c.l.b16 %v236
    %v2312 = vunpack.c.h.b16 %v236
    %v2313 = vunpack.c.l.b16 %v237
    %v2314 = vunpack.c.h.b16 %v237
    %v2315 = vunpack.c.l.b16 %v238
    %v2316 = vunpack.c.h.b16 %v238
    %v2317 = vunpack.c.l.b16 %v239
    %v2318 = vunpack.c.h.b16 %v239
    %v2319 = vunpack.c.l.b16 %v240
    %v2320 = vunpack.c.h.b16 %v240
    %v2321 = vunpack.c.l.b16 %v241
    %v2322 = vunpack.c.h.b16 %v241
    %v2323 = vunpack.c.l.b16 %v242
    %v2324 = vunpack.c.h.b16 %v242
    %v2325 = vunpack.c.l.b16 %v243
    %v2326 = vunpack.c.h.b16 %v243
    %v2327 = vunpack.c.l.b16 %v244
    %v2328 = vunpack.c.h.b16 %v244
    %v2329 = vunpack.c.l.b16 %v245
    %v2330 = vunpack.c.h.b16 %v245
    %v2331 = vunpack.c.l.b16 %v246
    %v2332 = vunpack.c.h.b16 %v246
    %v2333 = vunpack.c.l.b16 %v247
    %v2334 = vunpack.c.h.b16 %v247
    %v2335 = vunpack.c.l.b16 %v248
    %v2336 = vunpack.c.h.b16 %v248
    %v2337 = vunpack.c.l.b16 %v249
    %v2338 = vunpack.c.h.b16 %v249
    %v2339 = vunpack.c.l.b16 %v250
    %v2340 = vunpack.c.h.b16 %v250
    %v2341 = vunpack.c.l.b16 %v251
    %v2342 = vunpack.c.h.b16 %v251
    %v2343 = vunpack.c.l.b16 %v252
    %v2344 = vunpack.c.h.b16 %v252
    %v2345 = vunpack.c.l.b16 %v253
    %v2346 = vunpack.c.h.b16 %v253
    %v2347 = vunpack.c.l.b16 %v254
    %v2348 = vunpack.c.h.b16 %v254
    %v2349 = vunpack.c.l.b16 %v255
    %v2350 = vunpack.c.h.b16 %v255
    %v2351 = vunpack.c.l.b16 %v256
    %v2352 = vunpack.c.h.b16 %v256
    %v2353 = vunpack.c.l.b16 %v257
    %v2354 = vunpack.c.h.b16 %v257
    %v2355 = vunpack.c.l.b16 %v258
    %v2356 = vunpack.c.h.b16 %v258
    %v2357 = vunpack.c.l.b16 %v259
    %v2358 = vunpack.c.h.b16 %v259
    %v2359 = vunpack.c.l.b16 %v260
    %v2360 = vunpack.c.h.b16 %v260
    %v2361 = vunpack.c.l.b16 %v261
    %v2362 = vunpack.c.h.b16 %v261
    %v2363 = vunpack.c.l.b16 %v262
    %v2364 = vunpack.c.h.b16 %v262
    %v2365 = vunpack.c.l.b16 %v263
    %v2366 = vunpack.c.h.b16 %v263
    %v2367 = vunpack.c.l.b16 %v264
    %v2368 = vunpack.c.h.b16 %v264
    %v2369 = vunpack.c.l.b16 %v265
    %v2370 = vunpack.c.h.b16 %v265
    %v2371 = vunpack.c.l.b16 %v266
    %v2372 = vunpack.c.h.b16 %v266
    %v2373 = vunpack.c.l.b16 %v267
    %v2374 = vunpack.c.h.b16 %v267
    %v2375 = vunpack.c.l.b16 %v268
    %v2376 = vunpack.c.h.b16 %v268
    %v2377 = vunpack.c.l.b16 %v269
    %v2378 = vunpack.c.h.b16 %v269
    %v2379 = vunpack.c.l.b16 %v270
    %v2380 = vunpack.c.h.b16 %v270
    %v2381 = vunpack.c.l.b16 %v271
    %v2382 = vunpack.c.h.b16 %v271
    %v2383 = vunpack.c.l.b16 %v272
    %v2384 = vunpack.c.h.b16 %v272
    %v2385 = vunpack.c.l.b16 %v273
    %v2386 = vunpack.c.h.b16 %v273
    %v2387 = vunpack.c.l.b16 %v274
    %v2388 = vunpack.c.h.b16 %v274
    %v2389 = vunpack.c.l.b16 %v275
    %v2390 = vunpack.c.h.b16 %v275
    %v2391 = vunpack.c.l.b16 %v276
    %v2392 = vunpack.c.h.b16 %v276
    %v2393 = vunpack.c.l.b16 %v277
    %v2394 = vunpack.c.h.b16 %v277
    %v2395 = vunpack.c.l.b16 %v278
    %v2396 = vunpack.c.h.b16 %v278
    %v2397 = vunpack.c.l.b16 %v279
    %v2398 = vunpack.c.h.b16 %v279
    %v2399 = vunpack.c.l.b16 %v280
    %v2400 = vunpack.c.h.b16 %v280
    %v2401 = vunpack.c.l.b16 %v281
    %v2402 = vunpack.c.h.b16 %v281
    %v2403 = vunpack.c.l.b16 %v282
    %v2404 = vunpack.c.h.b16 %v282
    %v2405 = vunpack.c.l.b16 %v283
    %v2406 = vunpack.c.h.b16 %v283
    %v2407 = vunpack.c.l.b16 %v284
    %v2408 = vunpack.c.h.b16 %v284
    %v2409 = vunpack.c.l.b16 %v285
    %v2410 = vunpack.c.h.b16 %v285
    %v2411 = vunpack.c.l.b16 %v286
    %v2412 = vunpack.c.h.b16 %v286
    %v2413 = vunpack.c.l.b16 %v287
    %v2414 = vunpack.c.h.b16 %v287
    %v2415 = vunpack.c.l.b16 %v288
    %v2416 = vunpack.c.h.b16 %v288
    %v2417 = vunpack.c.l.b16 %v289
    %v2418 = vunpack.c.h.b16 %v289
    %v2419 = vunpack.c.l.b16 %v290
    %v2420 = vunpack.c.h.b16 %v290
    %v2421 = vunpack.c.l.b16 %v291
    %v2422 = vunpack.c.h.b16 %v291
    %v2423 = vunpack.c.l.b16 %v292
    %v2424 = vunpack.c.h.b16 %v292
    %v2425 = vunpack.c.l.b16 %v293
    %v2426 = vunpack.c.h.b16 %v293
    %v2427 = vunpack.c.l.b16 %v294
    %v2428 = vunpack.c.h.b16 %v294
    %v2429 = vunpack.c.l.b16 %v295
    %v2430 = vunpack.c.h.b16 %v295
    %v2431 = vunpack.c.l.b16 %v296
    %v2432 = vunpack.c.h.b16 %v296
    %v2433 = vunpack.c.l.b16 %v297
    %v2434 = vunpack.c.h.b16 %v297
    %v2435 = vunpack.c.l.b16 %v298
    %v2436 = vunpack.c.h.b16 %v298
    %v2437 = vunpack.c.l.b16 %v299
    %v2438 = vunpack.c.h.b16 %v299
    %v2439 = vunpack.c.l.b16 %v300
    %v2440 = vunpack.c.h.b16 %v300
    %v2441 = vunpack.c.l.b16 %v301
    %v2442 = vunpack.c.h.b16 %v301
    %v2443 = vunpack.c.l.b16 %v302
    %v2444 = vunpack.c.h.b16 %v302
    %v2445 = vunpack.c.l.b16 %v303
    %v2446 = vunpack.c.h.b16 %v303
    %v2447 = vunpack.c.l.b16 %v304
    %v2448 = vunpack.c.h.b16 %v304
    %v2449 = vunpack.c.l.b16 %v305
    %v2450 = vunpack.c.h.b16 %v305
    %v2451 = vunpack.c.l.b16 %v306
    %v2452 = vunpack.c.h.b16 %v306
    %v2453 = vunpack.c.l.b16 %v307
    %v2454 = vunpack.c.h.b16 %v307
    %v2455 = vunpack.c.l.b16 %v308
    %v2456 = vunpack.c.h.b16 %v308
    %v2457 = vunpack.c.l.b16 %v309
    %v2458 = vunpack.c.h.b16 %v309
    %v2459 = vunpack.c.l.b16 %v310
    %v2460 = vunpack.c.h.b16 %v310
    %v2461 = vunpack.c.l.b16 %v311
    %v2462 = vunpack.c.h.b16 %v311
    %v2463 = vunpack.c.l.b16 %v312
    %v2464 = vunpack.c.h.b16 %v312
    %v2465 = vunpack.c.l.b16 %v313
    %v2466 = vunpack.c.h.b16 %v313
    %v2467 = vunpack.c.l.b16 %v314
    %v2468 = vunpack.c.h.b16 %v314
    %v2469 = vunpack.c.l.b16 %v315
    %v2470 = vunpack.c.h.b16 %v315
    %v2471 = vunpack.c.l.b16 %v316
    %v2472 = vunpack.c.h.b16 %v316
    %v2473 = vunpack.c.l.b16 %v317
    %v2474 = vunpack.c.h.b16 %v317
    %v2475 = vunpack.c.l.b16 %v318
    %v2476 = vunpack.c.h.b16 %v318
    %v2477 = vunpack.c.l.b16 %v319
    %v2478 = vunpack.c.h.b16 %v319
    %v2479 = vunpack.c.l.b16 %v320
    %v2480 = vunpack.c.h.b16 %v320
    %v2481 = vunpack.c.l.b16 %v321
    %v2482 = vunpack.c.h.b16 %v321
    %v2483 = vunpack.c.l.b16 %v322
    %v2484 = vunpack.c.h.b16 %v322
    %v2485 = vunpack.c.l.b16 %v323
    %v2486 = vunpack.c.h.b16 %v323
    %v2487 = vunpack.c.l.b16 %v324
    %v2488 = vunpack.c.h.b16 %v324
    %v2489 = vunpack.c.l.b16 %v325
    %v2490 = vunpack.c.h.b16 %v325
    %v2491 = vunpack.c.l.b16 %v326
    %v2492 = vunpack.c.h.b16 %v326
    %v2493 = vunpack.c.l.b16 %v327
    %v2494 = vunpack.c.h.b16 %v327
    %v2495 = vunpack.c.l.b16 %v328
    %v2496 = vunpack.c.h.b16 %v328
    %v2497 = vunpack.c.l.b16 %v329
    %v2498 = vunpack.c.h.b16 %v329
    %v2499 = vunpack.c.l.b16 %v330
    %v2500 = vunpack.c.h.b16 %v330
    %v2501 = vunpack.c.l.b16 %v331
    %v2502 = vunpack.c.h.b16 %v331
    %v2503 = vunpack.c.l.b16 %v332
    %v2504 = vunpack.c.h.b16 %v332
    %v2505 = vunpack.c.l.b16 %v333
    %v2506 = vunpack.c.h.b16 %v333
    %v2507 = vunpack.c.l.b16 %v334
    %v2508 = vunpack.c.h.b16 %v334
    %v2509 = vunpack.c.l.b16 %v335
    %v2510 = vunpack.c.h.b16 %v335
    %v2511 = vunpack.c.l.b16 %v336
    %v2512 = vunpack.c.h.b16 %v336
    %v2513 = vunpack.c.l.b16 %v337
    %v2514 = vunpack.c.h.b16 %v337
    %v2515 = vunpack.c.l.b16 %v338
    %v2516 = vunpack.c.h.b16 %v338
    %v2517 = vunpack.c.l.b16 %v339
    %v2518 = vunpack.c.h.b16 %v339
    %v2519 = vunpack.c.l.b16 %v340
    %v2520 = vunpack.c.h.b16 %v340
    %v2521 = vunpack.c.l.b16 %v341
    %v2522 = vunpack.c.h.b16 %v341
    %v2523 = vunpack.c.l.b16 %v342
    %v2524 = vunpack.c.h.b16 %v342
    %v2525 = vunpack.c.l.b16 %v343
    %v2526 = vunpack.c.h.b16 %v343
    %v2527 = vunpack.c.l.b16 %v344
    %v2528 = vunpack.c.h.b16 %v344
    %v2529 = vunpack.c.l.b16 %v345
    %v2530 = vunpack.c.h.b16 %v345
    %v2531 = vunpack.c.l.b16 %v346
    %v2532 = vunpack.c.h.b16 %v346
    %v2533 = vunpack.c.l.b16 %v347
    %v2534 = vunpack.c.h.b16 %v347
    %v2535 = vunpack.c.l.b16 %v348
    %v2536 = vunpack.c.h.b16 %v348
    %v2537 = vunpack.c.l.b16 %v349
    %v2538 = vunpack.c.h.b16 %v349
    %v2539 = vunpack.c.l.b16 %v350
    %v2540 = vunpack.c.h.b16 %v350
    %v2541 = vunpack.c.l.b16 %v351
    %v2542 = vunpack.c.h.b16 %v351
    %v2543 = vunpack.c.l.b16 %v352
    %v2544 = vunpack.c.h.b16 %v352
    %v2545 = vunpack.c.l.b16 %v353
    %v2546 = vunpack.c.h.b16 %v353
    %v2547 = vunpack.c.l.b16 %v354
    %v2548 = vunpack.c.h.b16 %v354
    %v2549 = vunpack.c.l.b16 %v355
    %v2550 = vunpack.c.h.b16 %v355
    %v2551 = vunpack.c.l.b16 %v356
    %v2552 = vunpack.c.h.b16 %v356
    %v2553 = vunpack.c.l.b16 %v357
    %v2554 = vunpack.c.h.b16 %v357
    %v2555 = vunpack.c.l.b16 %v358
    %v2556 = vunpack.c.h.b16 %v358
    %v2557 = vunpack.c.l.b16 %v359
    %v2558 = vunpack.c.h.b16 %v359
    %v2559 = vunpack.c.l.b16 %v360
    %v2560 = vunpack.c.h.b16 %v360
    %v2561 = vunpack.c.l.b16 %v361
    %v2562 = vunpack.c.h.b16 %v361
    %v2563 = vunpack.c.l.b16 %v362
    %v2564 = vunpack.c.h.b16 %v362
    %v2565 = vunpack.c.l.b16 %v363
    %v2566 = vunpack.c.h.b16 %v363
    %v2567 = vunpack.c.l.b16 %v364
    %v2568 = vunpack.c.h.b16 %v364
    %v2569 = vunpack.c.l.b16 %v365
    %v2570 = vunpack.c.h.b16 %v365
    %v2571 = vunpack.c.l.b16 %v366
    %v2572 = vunpack.c.h.b16 %v366
    %v2573 = vunpack.c.l.b16 %v367
    %v2574 = vunpack.c.h.b16 %v367
    %v2575 = vunpack.c.l.b16 %v368
    %v2576 = vunpack.c.h.b16 %v368
    %v2577 = vunpack.c.l.b16 %v369
    %v2578 = vunpack.c.h.b16 %v369
    %v2579 = vunpack.c.l.b16 %v370
    %v2580 = vunpack.c.h.b16 %v370
    %v2581 = vunpack.c.l.b16 %v371
    %v2582 = vunpack.c.h.b16 %v371
    %v2583 = vunpack.c.l.b16 %v372
    %v2584 = vunpack.c.h.b16 %v372
    %v2585 = vunpack.c.l.b16 %v373
    %v2586 = vunpack.c.h.b16 %v373
    %v2587 = vunpack.c.l.b16 %v374
    %v2588 = vunpack.c.h.b16 %v374
    %v2589 = vunpack.c.l.b16 %v375
    %v2590 = vunpack.c.h.b16 %v375
    %v2591 = vunpack.c.l.b16 %v376
    %v2592 = vunpack.c.h.b16 %v376
    %v2593 = vunpack.c.l.b16 %v377
    %v2594 = vunpack.c.h.b16 %v377
    %v2595 = vunpack.c.l.b16 %v378
    %v2596 = vunpack.c.h.b16 %v378
    %v2597 = vunpack.c.l.b16 %v379
    %v2598 = vunpack.c.h.b16 %v379
    %v2599 = vunpack.c.l.b16 %v380
    %v2600 = vunpack.c.h.b16 %v380
    %v2601 = vunpack.c.l.b16 %v381
    %v2602 = vunpack.c.h.b16 %v381
    %v2603 = vunpack.c.l.b16 %v382
    %v2604 = vunpack.c.h.b16 %v382
    %v2605 = vunpack.c.l.b16 %v383
    %v2606 = vunpack.c.h.b16 %v383
    %v2607 = vunpack.c.l.b16 %v384
    %v2608 = vunpack.c.h.b16 %v384
    %v2609 = vunpack.c.l.b16 %v385
    %v2610 = vunpack.c.h.b16 %v385
    %v2611 = vunpack.c.l.b16 %v386
    %v2612 = vunpack.c.h.b16 %v386
    %v2613 = vunpack.c.l.b16 %v387
    %v2614 = vunpack.c.h.b16 %v387
    %v2615 = vunpack.c.l.b16 %v388
    %v2616 = vunpack.c.h.b16 %v388
    %v2617 = vunpack.c.l.b16 %v389
    %v2618 = vunpack.c.h.b16 %v389
    %v2619 = vunpack.c.l.b16 %v390
    %v2620 = vunpack.c.h.b16 %v390
    %v2621 = vunpack.c.l.b16 %v391
    %v2622 = vunpack.c.h.b16 %v391
    %v2623 = vunpack.c.l.b16 %v392
    %v2624 = vunpack.c.h.b16 %v392
    %v2625 = vunpack.c.l.b16 %v393
    %v2626 = vunpack.c.h.b16 %v393
    %v2627 = vunpack.c.l.b16 %v394
    %v2628 = vunpack.c.h.b16 %v394
    %v2629 = vunpack.c.l.b16 %v395
    %v2630 = vunpack.c.h.b16 %v395
    %v2631 = vunpack.c.l.b16 %v396
    %v2632 = vunpack.c.h.b16 %v396
    %v2633 = vunpack.c.l.b16 %v397
    %v2634 = vunpack.c.h.b16 %v397
    %v2635 = vunpack.c.l.b16 %v398
    %v2636 = vunpack.c.h.b16 %v398
    %v2637 = vunpack.c.l.b16 %v399
    %v2638 = vunpack.c.h.b16 %v399
    %v2639 = vunpack.c.l.b16 %v400
    %v2640 = vunpack.c.h.b16 %v400
    %v2641 = vunpack.c.l.b16 %v401
    %v2642 = vunpack.c.h.b16 %v401
    %v2643 = vunpack.c.l.b16 %v402
    %v2644 = vunpack.c.h.b16 %v402
    %v2645 = vunpack.c.l.b16 %v403
    %v2646 = vunpack.c.h.b16 %v403
    %v2647 = vunpack.c.l.b16 %v404
    %v2648 = vunpack.c.h.b16 %v404
    %v2649 = vunpack.c.l.b16 %v405
    %v2650 = vunpack.c.h.b16 %v405
    %v2651 = vunpack.c.l.b16 %v406
    %v2652 = vunpack.c.h.b16 %v406
    %v2653 = vunpack.c.l.b16 %v407
    %v2654 = vunpack.c.h.b16 %v407
    %v2655 = vunpack.c.l.b16 %v408
    %v2656 = vunpack.c.h.b16 %v408
    %v2657 = vunpack.c.l.b16 %v409
    %v2658 = vunpack.c.h.b16 %v409
    %v2659 = vunpack.c.l.b16 %v410
    %v2660 = vunpack.c.h.b16 %v410
    %v2661 = vunpack.c.l.b16 %v411
    %v2662 = vunpack.c.h.b16 %v411
    %v2663 = vunpack.c.l.b16 %v412
    %v2664 = vunpack.c.h.b16 %v412
    %v2665 = vunpack.c.l.b16 %v413
    %v2666 = vunpack.c.h.b16 %v413
    %v2667 = vunpack.c.l.b16 %v414
    %v2668 = vunpack.c.h.b16 %v414
    %v2669 = vunpack.c.l.b16 %v415
    %v2670 = vunpack.c.h.b16 %v415
    %v2671 = vunpack.c.l.b16 %v416
    %v2672 = vunpack.c.h.b16 %v416
    %v2673 = vunpack.c.l.b16 %v417
    %v2674 = vunpack.c.h.b16 %v417
    %v2675 = vunpack.c.l.b16 %v418
    %v2676 = vunpack.c.h.b16 %v418
    %v2677 = vunpack.c.l.b16 %v419
    %v2678 = vunpack.c.h.b16 %v419
    %v2679 = vunpack.c.l.b16 %v420
    %v2680 = vunpack.c.h.b16 %v420
    %v2681 = vunpack.c.l.b16 %v421
    %v2682 = vunpack.c.h.b16 %v421
    %v2683 = vunpack.c.l.b16 %v422
    %v2684 = vunpack.c.h.b16 %v422
    %v2685 = vunpack.c.l.b16 %v423
    %v2686 = vunpack.c.h.b16 %v423
    %v2687 = vunpack.c.l.b16 %v424
    %v2688 = vunpack.c.h.b16 %v424
    %v2689 = vunpack.c.l.b16 %v425
    %v2690 = vunpack.c.h.b16 %v425
    %v2691 = vunpack.c.l.b16 %v426
    %v2692 = vunpack.c.h.b16 %v426
    %v2693 = vunpack.c.l.b16 %v427
    %v2694 = vunpack.c.h.b16 %v427
    %v2695 = vunpack.c.l.b16 %v428
    %v2696 = vunpack.c.h.b16 %v428
    %v2697 = vunpack.c.l.b16 %v429
    %v2698 = vunpack.c.h.b16 %v429
    %v2699 = vunpack.c.l.b16 %v430
    %v2700 = vunpack.c.h.b16 %v430
    %v2701 = vunpack.c.l.b16 %v431
    %v2702 = vunpack.c.h.b16 %v431
    %v2703 = vunpack.c.l.b16 %v432
    %v2704 = vunpack.c.h.b16 %v432
    %v2705 = vunpack.c.l.b16 %v433
    %v2706 = vunpack.c.h.b16 %v433
    %v2707 = vunpack.c.l.b16 %v434
    %v2708 = vunpack.c.h.b16 %v434
    %v2709 = vunpack.c.l.b16 %v435
    %v2710 = vunpack.c.h.b16 %v435
    %v2711 = vunpack.c.l.b16 %v436
    %v2712 = vunpack.c.h.b16 %v436
    %v2713 = vunpack.c.l.b16 %v437
    %v2714 = vunpack.c.h.b16 %v437
    %v2715 = vunpack.c.l.b16 %v438
    %v2716 = vunpack.c.h.b16 %v438
    %v2717 = vunpack.c.l.b16 %v439
    %v2718 = vunpack.c.h.b16 %v439
    %v2719 = vunpack.c.l.b16 %v440
    %v2720 = vunpack.c.h.b16 %v440
    %v2721 = vunpack.c.l.b16 %v441
    %v2722 = vunpack.c.h.b16 %v441
    %v2723 = vunpack.c.l.b16 %v442
    %v2724 = vunpack.c.h.b16 %v442
    %v2725 = vunpack.c.l.b16 %v443
    %v2726 = vunpack.c.h.b16 %v443
    %v2727 = vunpack.c.l.b16 %v444
    %v2728 = vunpack.c.h.b16 %v444
    %v2729 = vunpack.c.l.b16 %v445
    %v2730 = vunpack.c.h.b16 %v445
    %v2731 = vunpack.c.l.b16 %v446
    %v2732 = vunpack.c.h.b16 %v446
    %v2733 = vunpack.c.l.b16 %v447
    %v2734 = vunpack.c.h.b16 %v447
    %v2735 = vunpack.c.l.b16 %v448
    %v2736 = vunpack.c.h.b16 %v448
    %v2737 = vunpack.c.l.b16 %v449
    %v2738 = vunpack.c.h.b16 %v449
    %v2739 = vunpack.c.l.b16 %v450
    %v2740 = vunpack.c.h.b16 %v450
    %v2741 = vunpack.c.l.b16 %v451
    %v2742 = vunpack.c.h.b16 %v451
    %v2743 = vunpack.c.l.b16 %v452
    %v2744 = vunpack.c.h.b16 %v452
    %v2745 = vunpack.c.l.b16 %v453
    %v2746 = vunpack.c.h.b16 %v453
    %v2747 = vunpack.c.l.b16 %v454
    %v2748 = vunpack.c.h.b16 %v454
    %v2749 = vunpack.c.l.b16 %v455
    %v2750 = vunpack.c.h.b16 %v455
    %v2751 = vunpack.c.l.b16 %v456
    %v2752 = vunpack.c.h.b16 %v456
    %v2753 = vunpack.c.l.b16 %v457
    %v2754 = vunpack.c.h.b16 %v457
    %v2755 = vunpack.c.l.b16 %v458
    %v2756 = vunpack.c.h.b16 %v458
    %v2757 = vunpack.c.l.b16 %v459
    %v2758 = vunpack.c.h.b16 %v459
    %v2759 = vunpack.c.l.b16 %v460
    %v2760 = vunpack.c.h.b16 %v460
    %v2761 = vunpack.c.l.b16 %v461
    %v2762 = vunpack.c.h.b16 %v461
    %v2763 = vunpack.c.l.b16 %v462
    %v2764 = vunpack.c.h.b16 %v462
    %v2765 = vunpack.c.l.b16 %v463
    %v2766 = vunpack.c.h.b16 %v463
    %v2767 = vunpack.c.l.b16 %v464
    %v2768 = vunpack.c.h.b16 %v464
    %v2769 = vunpack.c.l.b16 %v465
    %v2770 = vunpack.c.h.b16 %v465
    %v2771 = vunpack.c.l.b16 %v466
    %v2772 = vunpack.c.h.b16 %v466
    %v2773 = vunpack.c.l.b16 %v467
    %v2774 = vunpack.c.h.b16 %v467
    %v2775 = vunpack.c.l.b16 %v468
    %v2776 = vunpack.c.h.b16 %v468
    %v2777 = vunpack.c.l.b16 %v469
    %v2778 = vunpack.c.h.b16 %v469
    %v2779 = vunpack.c.l.b16 %v470
    %v2780 = vunpack.c.h.b16 %v470
    %v2781 = vunpack.c.l.b16 %v471
    %v2782 = vunpack.c.h.b16 %v471
    %v2783 = vunpack.c.l.b16 %v472
    %v2784 = vunpack.c.h.b16 %v472
    %v2785 = vunpack.c.l.b16 %v473
    %v2786 = vunpack.c.h.b16 %v473
    %v2787 = vunpack.c.l.b16 %v474
    %v2788 = vunpack.c.h.b16 %v474
    %v2789 = vunpack.c.l.b16 %v475
    %v2790 = vunpack.c.h.b16 %v475
    %v2791 = vunpack.c.l.b16 %v476
    %v2792 = vunpack.c.h.b16 %v476
    %v2793 = vunpack.c.l.b16 %v477
    %v2794 = vunpack.c.h.b16 %v477
    %v2795 = vunpack.c.l.b16 %v478
    %v2796 = vunpack.c.h.b16 %v478
    %v2797 = vunpack.c.l.b16 %v479
    %v2798 = vunpack.c.h.b16 %v479
    %v2799 = vunpack.c.l.b16 %v480
    %v2800 = vunpack.c.h.b16 %v480
    %v2801 = vunpack.c.l.b16 %v481
    %v2802 = vunpack.c.h.b16 %v481
    %v2803 = vunpack.c.l.b16 %v482
    %v2804 = vunpack.c.h.b16 %v482
    %v2805 = vunpack.c.l.b16 %v483
    %v2806 = vunpack.c.h.b16 %v483
    %v2807 = vunpack.c.l.b16 %v484
    %v2808 = vunpack.c.h.b16 %v484
    %v2809 = vunpack.c.l.b16 %v485
    %v2810 = vunpack.c.h.b16 %v485
    %v2811 = vunpack.c.l.b16 %v486
    %v2812 = vunpack.c.h.b16 %v486
    %v2813 = vunpack.c.l.b16 %v487
    %v2814 = vunpack.c.h.b16 %v487
    %v2815 = vunpack.c.l.b16 %v488
    %v2816 = vunpack.c.h.b16 %v488
    %v2817 = vunpack.c.l.b16 %v489
    %v2818 = vunpack.c.h.b16 %v489
    %v2819 = vunpack.c.l.b16 %v490
    %v2820 = vunpack.c.h.b16 %v490
    %v2821 = vunpack.c.l.b16 %v491
    %v2822 = vunpack.c.h.b16 %v491
    %v2823 = vunpack.c.l.b16 %v492
    %v2824 = vunpack.c.h.b16 %v492
    %v2825 = vunpack.c.l.b16 %v493
    %v2826 = vunpack.c.h.b16 %v493
    %v2827 = vunpack.c.l.b16 %v494
    %v2828 = vunpack.c.h.b16 %v494
    %v2829 = vunpack.c.l.b16 %v495
    %v2830 = vunpack.c.h.b16 %v495
    %v2831 = vunpack.c.l.b16 %v496
    %v2832 = vunpack.c.h.b16 %v496
    %v2833 = vunpack.c.l.b16 %v497
    %v2834 = vunpack.c.h.b16 %v497
    %v2835 = vunpack.c.l.b16 %v498
    %v2836 = vunpack.c.h.b16 %v498
    %v2837 = vunpack.c.l.b16 %v499
    %v2838 = vunpack.c.h.b16 %v499
    %v2839 = vunpack.c.l.b16 %v500
    %v2840 = vunpack.c.h.b16 %v500
    %v2841 = vunpack.c.l.b16 %v501
    %v2842 = vunpack.c.h.b16 %v501
    %v2843 = vunpack.c.l.b16 %v502
    %v2844 = vunpack.c.h.b16 %v502
    %v2845 = vunpack.c.l.b16 %v503
    %v2846 = vunpack.c.h.b16 %v503
    %v2847 = vunpack.c.l.b16 %v504
    %v2848 = vunpack.c.h.b16 %v504
    %v2849 = vunpack.c.l.b16 %v505
    %v2850 = vunpack.c.h.b16 %v505
    %v2851 = vunpack.c.l.b16 %v506
    %v2852 = vunpack.c.h.b16 %v506
    %v2853 = vunpack.c.l.b16 %v507
    %v2854 = vunpack.c.h.b16 %v507
    %v2855 = vunpack.c.l.b16 %v508
    %v2856 = vunpack.c.h.b16 %v508
    %v2857 = vunpack.c.l.b16 %v509
    %v2858 = vunpack.c.h.b16 %v509
    %v2859 = vunpack.c.l.b16 %v510
    %v2860 = vunpack.c.h.b16 %v510
    %v2861 = vunpack.c.l.b16 %v511
    %v2862 = vunpack.c.h.b16 %v511
    %v2863 = vunpack.c.l.b16 %v512
    %v2864 = vunpack.c.h.b16 %v512
    %v2865 = vunpack.c.l.b16 %v513
    %v2866 = vunpack.c.h.b16 %v513
    %v2867 = vunpack.c.l.b16 %v514
    %v2868 = vunpack.c.h.b16 %v514
    %v2869 = vunpack.c.l.b16 %v515
    %v2870 = vunpack.c.h.b16 %v515
    %v2871 = vunpack.c.l.b16 %v516
    %v2872 = vunpack.c.h.b16 %v516
    %v2873 = vunpack.c.l.b16 %v517
    %v2874 = vunpack.c.h.b16 %v517
    %v2875 = vunpack.c.l.b16 %v518
    %v2876 = vunpack.c.h.b16 %v518
    %v2877 = vunpack.c.l.b16 %v519
    %v2878 = vunpack.c.h.b16 %v519
    %v2879 = vunpack.c.l.b16 %v520
    %v2880 = vunpack.c.h.b16 %v520
    %v2881 = vunpack.c.l.b16 %v521
    %v2882 = vunpack.c.h.b16 %v521
    %v2883 = vunpack.c.l.b16 %v522
    %v2884 = vunpack.c.h.b16 %v522
    %v2885 = vunpack.c.l.b16 %v523
    %v2886 = vunpack.c.h.b16 %v523
    %v2887 = vunpack.c.l.b16 %v524
    %v2888 = vunpack.c.h.b16 %v524
    %v2889 = vunpack.c.l.b16 %v525
    %v2890 = vunpack.c.h.b16 %v525
    %v2891 = vunpack.c.l.b16 %v526
    %v2892 = vunpack.c.h.b16 %v526
    %v2893 = vunpack.c.l.b16 %v527
    %v2894 = vunpack.c.h.b16 %v527
    %v2895 = vunpack.c.l.b16 %v528
    %v2896 = vunpack.c.h.b16 %v528
    %v2897 = vunpack.c.l.b16 %v529
    %v2898 = vunpack.c.h.b16 %v529
    %v2899 = vunpack.c.l.b16 %v530
    %v2900 = vunpack.c.h.b16 %v530
    %v2901 = vunpack.c.l.b16 %v531
    %v2902 = vunpack.c.h.b16 %v531
    %v2903 = vunpack.c.l.b16 %v532
    %v2904 = vunpack.c.h.b16 %v532
    %v2905 = vunpack.c.l.b16 %v533
    %v2906 = vunpack.c.h.b16 %v533
    %v2907 = vunpack.c.l.b16 %v534
    %v2908 = vunpack.c.h.b16 %v534
    %v2909 = vunpack.c.l.b16 %v535
    %v2910 = vunpack.c.h.b16 %v535
    %v2911 = vunpack.c.l.b16 %v536
    %v2912 = vunpack.c.h.b16 %v536
    %v2913 = vunpack.c.l.b16 %v537
    %v2914 = vunpack.c.h.b16 %v537
    %v2915 = vunpack.c.l.b16 %v538
    %v2916 = vunpack.c.h.b16 %v538
    %v2917 = vunpack.c.l.b16 %v539
    %v2918 = vunpack.c.h.b16 %v539
    %v2919 = vunpack.c.l.b16 %v540
    %v2920 = vunpack.c.h.b16 %v540
    %v2921 = vunpack.c.l.b16 %v541
    %v2922 = vunpack.c.h.b16 %v541
    %v2923 = vunpack.c.l.b16 %v542
    %v2924 = vunpack.c.h.b16 %v542
    %v2925 = vunpack.c.l.b16 %v543
    %v2926 = vunpack.c.h.b16 %v543
    %v2927 = vunpack.c.l.b16 %v544
    %v2928 = vunpack.c.h.b16 %v544
    %v2929 = vunpack.c.l.b16 %v545
    %v2930 = vunpack.c.h.b16 %v545
    %v2931 = vunpack.c.l.b16 %v546
    %v2932 = vunpack.c.h.b16 %v546
    %v2933 = vunpack.c.l.b16 %v547
    %v2934 = vunpack.c.h.b16 %v547
    %v2935 = vunpack.c.l.b16 %v548
    %v2936 = vunpack.c.h.b16 %v548
    %v2937 = vunpack.c.l.b16 %v549
    %v2938 = vunpack.c.h.b16 %v549
    %v2939 = vunpack.c.l.b16 %v550
    %v2940 = vunpack.c.h.b16 %v550
    %v2941 = vunpack.c.l.b16 %v551
    %v2942 = vunpack.c.h.b16 %v551
    %v2943 = vunpack.c.l.b16 %v552
    %v2944 = vunpack.c.h.b16 %v552
    %v2945 = vunpack.c.l.b16 %v553
    %v2946 = vunpack.c.h.b16 %v553
    %v2947 = vunpack.c.l.b16 %v554
    %v2948 = vunpack.c.h.b16 %v554
    %v2949 = vunpack.c.l.b16 %v555
    %v2950 = vunpack.c.h.b16 %v555
    %v2951 = vunpack.c.l.b16 %v556
    %v2952 = vunpack.c.h.b16 %v556
    %v2953 = vunpack.c.l.b16 %v557
    %v2954 = vunpack.c.h.b16 %v557
    %v2955 = vunpack.c.l.b16 %v558
    %v2956 = vunpack.c.h.b16 %v558
    %v2957 = vunpack.c.l.b16 %v559
    %v2958 = vunpack.c.h.b16 %v559
    %v2959 = vunpack.c.l.b16 %v560
    %v2960 = vunpack.c.h.b16 %v560
    %v2961 = vunpack.c.l.b16 %v561
    %v2962 = vunpack.c.h.b16 %v561
    %v2963 = vunpack.c.l.b16 %v562
    %v2964 = vunpack.c.h.b16 %v562
    %v2965 = vunpack.c.l.b16 %v563
    %v2966 = vunpack.c.h.b16 %v563
    %v2967 = vunpack.c.l.b16 %v564
    %v2968 = vunpack.c.h.b16 %v564
    %v2969 = vunpack.c.l.b16 %v565
    %v2970 = vunpack.c.h.b16 %v565
    %v2971 = vunpack.c.l.b16 %v566
    %v2972 = vunpack.c.h.b16 %v566
    %v2973 = vunpack.c.l.b16 %v567
    %v2974 = vunpack.c.h.b16 %v567
    %v2975 = vunpack.c.l.b16 %v568
    %v2976 = vunpack.c.h.b16 %v568
    %v2977 = vunpack.c.l.b16 %v569
    %v2978 = vunpack.c.h.b16 %v569
    %v2979 = vunpack.c.l.b16 %v570
    %v2980 = vunpack.c.h.b16 %v570
    %v2981 = vunpack.c.l.b16 %v571
    %v2982 = vunpack.c.h.b16 %v571
    %v2983 = vunpack.c.l.b16 %v572
    %v2984 = vunpack.c.h.b16 %v572
    %v2985 = vunpack.c.l.b16 %v573
    %v2986 = vunpack.c.h.b16 %v573
    %v2987 = vunpack.c.l.b16 %v574
    %v2988 = vunpack.c.h.b16 %v574
    %v2989 = vunpack.c.l.b16 %v575
    %v2990 = vunpack.c.h.b16 %v575
    %v2991 = vunpack.c.l.b16 %v576
    %v2992 = vunpack.c.h.b16 %v576
    %v2993 = vunpack.c.l.b16 %v577
    %v2994 = vunpack.c.h.b16 %v577
    %v2995 = vunpack.c.l.b16 %v578
    %v2996 = vunpack.c.h.b16 %v578
    %v2997 = vunpack.c.l.b16 %v579
    %v2998 = vunpack.c.h.b16 %v579
    %v2999 = vunpack.c.l.b16 %v580
    %v3000 = vunpack.c.h.b16 %v580
    %v3001 = vunpack.c.l.b16 %v581
    %v3002 = vunpack.c.h.b16 %v581
    %v3003 = vunpack.c.l.b16 %v582
    %v3004 = vunpack.c.h.b16 %v582
    %v3005 = vunpack.c.l.b16 %v583
    %v3006 = vunpack.c.h.b16 %v583
    %v3007 = vunpack.c.l.b16 %v584
    %v3008 = vunpack.c.h.b16 %v584
    %v3009 = vunpack.c.l.b16 %v585
    %v3010 = vunpack.c.h.b16 %v585
    %v3011 = vunpack.c.l.b16 %v586
    %v3012 = vunpack.c.h.b16 %v586
    %v3013 = vunpack.c.l.b16 %v587
    %v3014 = vunpack.c.h.b16 %v587
    %v3015 = vunpack.c.l.b16 %v588
    %v3016 = vunpack.c.h.b16 %v588
    %v3017 = vunpack.c.l.b16 %v589
    %v3018 = vunpack.c.h.b16 %v589
    %v3019 = vunpack.c.l.b16 %v590
    %v3020 = vunpack.c.h.b16 %v590
    %v3021 = vunpack.c.l.b16 %v591
    %v3022 = vunpack.c.h.b16 %v591
    %v3023 = vunpack.c.l.b16 %v592
    %v3024 = vunpack.c.h.b16 %v592
    %v3025 = vunpack.c.l.b16 %v593
    %v3026 = vunpack.c.h.b16 %v593
    %v3027 = vunpack.c.l.b16 %v594
    %v3028 = vunpack.c.h.b16 %v594
    %v3029 = vunpack.c.l.b16 %v595
    %v3030 = vunpack.c.h.b16 %v595
    %v3031 = vunpack.c.l.b16 %v596
    %v3032 = vunpack.c.h.b16 %v596
    %v3033 = vunpack.c.l.b16 %v597
    %v3034 = vunpack.c.h.b16 %v597
    %v3035 = vunpack.c.l.b16 %v598
    %v3036 = vunpack.c.h.b16 %v598
    %v3037 = vunpack.c.l.b16 %v599
    %v3038 = vunpack.c.h.b16 %v599
    %v3039 = vunpack.c.l.b16 %v600
    %v3040 = vunpack.c.h.b16 %v600
    %v3041 = vunpack.c.l.b16 %v601
    %v3042 = vunpack.c.h.b16 %v601
    %v3043 = vunpack.c.l.b16 %v602
    %v3044 = vunpack.c.h.b16 %v602
    %v3045 = vunpack.c.l.b16 %v603
    %v3046 = vunpack.c.h.b16 %v603
    %v3047 = vunpack.c.l.b16 %v604
    %v3048 = vunpack.c.h.b16 %v604
    %v3049 = vunpack.c.l.b16 %v605
    %v3050 = vunpack.c.h.b16 %v605
    %v3051 = vunpack.c.l.b16 %v606
    %v3052 = vunpack.c.h.b16 %v606
    %v3053 = vunpack.c.l.b16 %v607
    %v3054 = vunpack.c.h.b16 %v607
    %v3055 = vunpack.c.l.b16 %v608
    %v3056 = vunpack.c.h.b16 %v608
    %v3057 = vunpack.c.l.b16 %v609
    %v3058 = vunpack.c.h.b16 %v609
    %v3059 = vunpack.c.l.b16 %v610
    %v3060 = vunpack.c.h.b16 %v610
    %v3061 = vunpack.c.l.b16 %v611
    %v3062 = vunpack.c.h.b16 %v611
    %v3063 = vunpack.c.l.b16 %v612
    %v3064 = vunpack.c.h.b16 %v612
    %v3065 = vunpack.c.l.b16 %v613
    %v3066 = vunpack.c.h.b16 %v613
    %v3067 = vunpack.c.l.b16 %v614
    %v3068 = vunpack.c.h.b16 %v614
    %v3069 = vunpack.c.l.b16 %v615
    %v3070 = vunpack.c.h.b16 %v615
    %v3071 = vunpack.c.l.b16 %v616
    %v3072 = vunpack.c.h.b16 %v616
    %v3073 = vunpack.c.l.b16 %v617
    %v3074 = vunpack.c.h.b16 %v617
    %v3075 = vunpack.c.l.b16 %v618
    %v3076 = vunpack.c.h.b16 %v618
    %v3077 = vunpack.c.l.b16 %v619
    %v3078 = vunpack.c.h.b16 %v619
    %v3079 = vunpack.c.l.b16 %v620
    %v3080 = vunpack.c.h.b16 %v620
    %v3081 = vunpack.c.l.b16 %v621
    %v3082 = vunpack.c.h.b16 %v621
    %v3083 = vunpack.c.l.b16 %v622
    %v3084 = vunpack.c.h.b16 %v622
    %v3085 = vunpack.c.l.b16 %v623
    %v3086 = vunpack.c.h.b16 %v623
    %v3087 = vunpack.c.l.b16 %v624
    %v3088 = vunpack.c.h.b16 %v624
    %v3089 = vunpack.c.l.b16 %v625
    %v3090 = vunpack.c.h.b16 %v625
    %v3091 = vunpack.c.l.b16 %v626
    %v3092 = vunpack.c.h.b16 %v626
    %v3093 = vunpack.c.l.b16 %v627
    %v3094 = vunpack.c.h.b16 %v627
    %v3095 = vunpack.c.l.b16 %v628
    %v3096 = vunpack.c.h.b16 %v628
    %v3097 = vunpack.c.l.b16 %v629
    %v3098 = vunpack.c.h.b16 %v629
    %v3099 = vunpack.c.l.b16 %v630
    %v3100 = vunpack.c.h.b16 %v630
    %v3101 = vunpack.c.l.b16 %v631
    %v3102 = vunpack.c.h.b16 %v631
    %v3103 = vunpack.c.l.b16 %v632
    %v3104 = vunpack.c.h.b16 %v632
    %v3105 = vunpack.c.l.b16 %v633
    %v3106 = vunpack.c.h.b16 %v633
    %v3107 = vunpack.c.l.b16 %v634
    %v3108 = vunpack.c.h.b16 %v634
    %v3109 = vunpack.c.l.b16 %v635
    %v3110 = vunpack.c.h.b16 %v635
    %v3111 = vunpack.c.l.b16 %v636
    %v3112 = vunpack.c.h.b16 %v636
    %v3113 = vunpack.c.l.b16 %v637
    %v3114 = vunpack.c.h.b16 %v637
    %v3115 = vunpack.c.l.b16 %v638
    %v3116 = vunpack.c.h.b16 %v638
    %v3117 = vunpack.c.l.b16 %v639
    %v3118 = vunpack.c.h.b16 %v639
    %v3119 = vunpack.c.l.b16 %v640
    %v3120 = vunpack.c.h.b16 %v640
    %v3121 = vunpack.c.l.b16 %v641
    %v3122 = vunpack.c.h.b16 %v641
    %v3123 = vunpack.c.l.b16 %v642
    %v3124 = vunpack.c.h.b16 %v642
    %v3125 = vunpack.c.l.b16 %v643
    %v3126 = vunpack.c.h.b16 %v643
    %v3127 = vunpack.c.l.b16 %v644
    %v3128 = vunpack.c.h.b16 %v644
    %v3129 = vunpack.c.l.b16 %v645
    %v3130 = vunpack.c.h.b16 %v645
    %v3131 = vunpack.c.l.b16 %v646
    %v3132 = vunpack.c.h.b16 %v646
    %v3133 = vunpack.c.l.b16 %v647
    %v3134 = vunpack.c.h.b16 %v647
    %v3135 = vunpack.c.l.b16 %v648
    %v3136 = vunpack.c.h.b16 %v648
    %v3137 = vunpack.c.l.b16 %v649
    %v3138 = vunpack.c.h.b16 %v649
    %v3139 = vunpack.c.l.b16 %v650
    %v3140 = vunpack.c.h.b16 %v650
    %v3141 = vunpack.c.l.b16 %v651
    %v3142 = vunpack.c.h.b16 %v651
    %v3143 = vunpack.c.l.b16 %v652
    %v3144 = vunpack.c.h.b16 %v652
    %v3145 = vunpack.c.l.b16 %v653
    %v3146 = vunpack.c.h.b16 %v653
    %v3147 = vunpack.c.l.b16 %v654
    %v3148 = vunpack.c.h.b16 %v654
    %v3149 = vunpack.c.l.b16 %v655
    %v3150 = vunpack.c.h.b16 %v655
    %v3151 = vunpack.c.l.b16 %v656
    %v3152 = vunpack.c.h.b16 %v656
    %v3153 = vunpack.c.l.b16 %v657
    %v3154 = vunpack.c.h.b16 %v657
    %v3155 = vunpack.c.l.b16 %v658
    %v3156 = vunpack.c.h.b16 %v658
    %v3157 = vunpack.c.l.b16 %v659
    %v3158 = vunpack.c.h.b16 %v659
    %v3159 = vunpack.c.l.b16 %v660
    %v3160 = vunpack.c.h.b16 %v660
    %v3161 = vunpack.c.l.b16 %v661
    %v3162 = vunpack.c.h.b16 %v661
    %v3163 = vunpack.c.l.b16 %v662
    %v3164 = vunpack.c.h.b16 %v662
    %v3165 = vunpack.c.l.b16 %v663
    %v3166 = vunpack.c.h.b16 %v663
    %v3167 = vunpack.c.l.b16 %v664
    %v3168 = vunpack.c.h.b16 %v664
    %v3169 = vunpack.c.l.b16 %v665
    %v3170 = vunpack.c.h.b16 %v665
    %v3171 = vunpack.c.l.b16 %v666
    %v3172 = vunpack.c.h.b16 %v666
    %v3173 = vunpack.c.l.b16 %v667
    %v3174 = vunpack.c.h.b16 %v667
    %v3175 = vunpack.c.l.b16 %v668
    %v3176 = vunpack.c.h.b16 %v668
    %v3177 = vunpack.c.l.b16 %v669
    %v3178 = vunpack.c.h.b16 %v669
    %v3179 = vunpack.c.l.b16 %v670
    %v3180 = vunpack.c.h.b16 %v670
    %v3181 = vunpack.c.l.b16 %v671
    %v3182 = vunpack.c.h.b16 %v671
    %v3183 = vunpack.c.l.b16 %v672
    %v3184 = vunpack.c.h.b16 %v672
    %v3185 = vunpack.c.l.b16 %v673
    %v3186 = vunpack.c.h.b16 %v673
    %v3187 = vunpack.c.l.b16 %v674
    %v3188 = vunpack.c.h.b16 %v674
    %v3189 = vunpack.c.l.b16 %v675
    %v3190 = vunpack.c.h.b16 %v675
    %v3191 = vunpack.c.l.b16 %v676
    %v3192 = vunpack.c.h.b16 %v676
    %v3193 = vunpack.c.l.b16 %v677
    %v3194 = vunpack.c.h.b16 %v677
    %v3195 = vunpack.c.l.b16 %v678
    %v3196 = vunpack.c.h.b16 %v678
    %v3197 = vunpack.c.l.b16 %v679
    %v3198 = vunpack.c.h.b16 %v679
    %v3199 = vunpack.c.l.b16 %v680
    %v3200 = vunpack.c.h.b16 %v680
    %v3201 = vunpack.c.l.b16 %v681
    %v3202 = vunpack.c.h.b16 %v681
    %v3203 = vunpack.c.l.b16 %v682
    %v3204 = vunpack.c.h.b16 %v682
    %v3205 = vunpack.c.l.b16 %v683
    %v3206 = vunpack.c.h.b16 %v683
    %v3207 = vunpack.c.l.b16 %v684
    %v3208 = vunpack.c.h.b16 %v684
    %v3209 = vunpack.c.l.b16 %v685
    %v3210 = vunpack.c.h.b16 %v685
    %v3211 = vunpack.c.l.b16 %v686
    %v3212 = vunpack.c.h.b16 %v686
    %v3213 = vunpack.c.l.b16 %v687
    %v3214 = vunpack.c.h.b16 %v687
    %v3215 = vunpack.c.l.b16 %v688
    %v3216 = vunpack.c.h.b16 %v688
    %v3217 = vunpack.c.l.b16 %v689
    %v3218 = vunpack.c.h.b16 %v689
    %v3219 = vunpack.c.l.b16 %v690
    %v3220 = vunpack.c.h.b16 %v690
    %v3221 = vunpack.c.l.b16 %v691
    %v3222 = vunpack.c.h.b16 %v691
    %v3223 = vunpack.c.l.b16 %v692
    %v3224 = vunpack.c.h.b16 %v692
    %v3225 = vunpack.c.l.b16 %v693
    %v3226 = vunpack.c.h.b16 %v693
    %v3227 = vunpack.c.l.b16 %v694
    %v3228 = vunpack.c.h.b16 %v694
    %v3229 = vunpack.c.l.b16 %v695
    %v3230 = vunpack.c.h.b16 %v695
    %v3231 = vunpack.c.l.b16 %v696
    %v3232 = vunpack.c.h.b16 %v696
    %v3233 = vunpack.c.l.b16 %v697
    %v3234 = vunpack.c.h.b16 %v697
    %v3235 = vunpack.c.l.b16 %v698
    %v3236 = vunpack.c.h.b16 %v698
    %v3237 = vunpack.c.l.b16 %v699
    %v3238 = vunpack.c.h.b16 %v699
    %v3239 = vunpack.c.l.b16 %v700
    %v3240 = vunpack.c.h.b16 %v700
    %v3241 = vunpack.c.l.b16 %v701
    %v3242 = vunpack.c.h.b16 %v701
    %v3243 = vunpack.c.l.b16 %v702
    %v3244 = vunpack.c.h.b16 %v702
    %v3245 = vunpack.c.l.b16 %v703
    %v3246 = vunpack.c.h.b16 %v703
    %v3247 = vunpack.c.l.b16 %v704
    %v3248 = vunpack.c.h.b16 %v704
    %v3249 = vunpack.c.l.b16 %v705
    %v3250 = vunpack.c.h.b16 %v705
    %v3251 = vunpack.c.l.b16 %v706
    %v3252 = vunpack.c.h.b16 %v706
    %v3253 = vunpack.c.l.b16 %v707
    %v3254 = vunpack.c.h.b16 %v707
    %v3255 = vunpack.c.l.b16 %v708
    %v3256 = vunpack.c.h.b16 %v708
    %v3257 = vunpack.c.l.b16 %v709
    %v3258 = vunpack.c.h.b16 %v709
    %v3259 = vunpack.c.l.b16 %v710
    %v3260 = vunpack.c.h.b16 %v710
    %v3261 = vunpack.c.l.b16 %v711
    %v3262 = vunpack.c.h.b16 %v711
    %v3263 = vunpack.c.l.b16 %v712
    %v3264 = vunpack.c.h.b16 %v712
    %v3265 = vunpack.c.l.b16 %v713
    %v3266 = vunpack.c.h.b16 %v713
    %v3267 = vunpack.c.l.b16 %v714
    %v3268 = vunpack.c.h.b16 %v714
    %v3269 = vunpack.c.l.b16 %v715
    %v3270 = vunpack.c.h.b16 %v715
    %v3271 = vunpack.c.l.b16 %v716
    %v3272 = vunpack.c.h.b16 %v716
    %v3273 = vunpack.c.l.b16 %v717
    %v3274 = vunpack.c.h.b16 %v717
    %v3275 = vunpack.c.l.b16 %v718
    %v3276 = vunpack.c.h.b16 %v718
    %v3277 = vunpack.c.l.b16 %v719
    %v3278 = vunpack.c.h.b16 %v719
    %v3279 = vunpack.c.l.b16 %v720
    %v3280 = vunpack.c.h.b16 %v720
    %v3281 = vunpack.c.l.b16 %v721
    %v3282 = vunpack.c.h.b16 %v721
    %v3283 = vunpack.c.l.b16 %v722
    %v3284 = vunpack.c.h.b16 %v722
    %v3285 = vunpack.c.l.b16 %v723
    %v3286 = vunpack.c.h.b16 %v723
    %v3287 = vunpack.c.l.b16 %v724
    %v3288 = vunpack.c.h.b16 %v724
    %v3289 = vunpack.c.l.b16 %v725
    %v3290 = vunpack.c.h.b16 %v725
    %v3291 = vunpack.c.l.b16 %v726
    %v3292 = vunpack.c.h.b16 %v726
    %v3293 = vunpack.c.l.b16 %v727
    %v3294 = vunpack.c.h.b16 %v727
    %v3295 = vunpack.c.l.b16 %v728
    %v3296 = vunpack.c.h.b16 %v728
    %v3297 = vunpack.c.l.b16 %v729
    %v3298 = vunpack.c.h.b16 %v729
    %v3299 = vunpack.c.l.b16 %v730
    %v3300 = vunpack.c.h.b16 %v730
    %v3301 = vunpack.c.l.b16 %v731
    %v3302 = vunpack.c.h.b16 %v731
    %v3303 = vunpack.c.l.b16 %v732
    %v3304 = vunpack.c.h.b16 %v732
    %v3305 = vunpack.c.l.b16 %v733
    %v3306 = vunpack.c.h.b16 %v733
    %v3307 = vunpack.c.l.b16 %v734
    %v3308 = vunpack.c.h.b16 %v734
    %v3309 = vunpack.c.l.b16 %v735
    %v3310 = vunpack.c.h.b16 %v735
    %v3311 = vunpack.c.l.b16 %v736
    %v3312 = vunpack.c.h.b16 %v736
    %v3313 = vunpack.c.l.b16 %v737
    %v3314 = vunpack.c.h.b16 %v737
    %v3315 = vunpack.c.l.b16 %v738
    %v3316 = vunpack.c.h.b16 %v738
    %v3317 = vunpack.c.l.b16 %v739
    %v3318 = vunpack.c.h.b16 %v739
    %v3319 = vunpack.c.l.b16 %v740
    %v3320 = vunpack.c.h.b16 %v740
    %v3321 = vunpack.c.l.b16 %v741
    %v3322 = vunpack.c.h.b16 %v741
    %v3323 = vunpack.c.l.b16 %v742
    %v3324 = vunpack.c.h.b16 %v742
    %v3325 = vunpack.c.l.b16 %v743
    %v3326 = vunpack.c.h.b16 %v743
    %v3327 = vunpack.c.l.b16 %v744
    %v3328 = vunpack.c.h.b16 %v744
    %v3329 = vunpack.c.l.b16 %v745
    %v3330 = vunpack.c.h.b16 %v745
    %v3331 = vunpack.c.l.b16 %v746
    %v3332 = vunpack.c.h.b16 %v746
    %v3333 = vunpack.c.l.b16 %v747
    %v3334 = vunpack.c.h.b16 %v747
    %v3335 = vunpack.c.l.b16 %v748
    %v3336 = vunpack.c.h.b16 %v748
    %v3337 = vunpack.c.l.b16 %v749
    %v3338 = vunpack.c.h.b16 %v749
    %v3339 = vunpack.c.l.b16 %v750
    %v3340 = vunpack.c.h.b16 %v750
    %v3341 = vunpack.c.l.b16 %v751
    %v3342 = vunpack.c.h.b16 %v751
    %v3343 = vunpack.c.l.b16 %v752
    %v3344 = vunpack.c.h.b16 %v752
    %v3345 = vunpack.c.l.b16 %v753
    %v3346 = vunpack.c.h.b16 %v753
    %v3347 = vunpack.c.l.b16 %v754
    %v3348 = vunpack.c.h.b16 %v754
    %v3349 = vunpack.c.l.b16 %v755
    %v3350 = vunpack.c.h.b16 %v755
    %v3351 = vunpack.c.l.b16 %v756
    %v3352 = vunpack.c.h.b16 %v756
    %v3353 = vunpack.c.l.b16 %v757
    %v3354 = vunpack.c.h.b16 %v757
    %v3355 = vunpack.c.l.b16 %v758
    %v3356 = vunpack.c.h.b16 %v758
    %v3357 = vunpack.c.l.b16 %v759
    %v3358 = vunpack.c.h.b16 %v759
    %v3359 = vunpack.c.l.b16 %v760
    %v3360 = vunpack.c.h.b16 %v760
    %v3361 = vunpack.c.l.b16 %v761
    %v3362 = vunpack.c.h.b16 %v761
    %v3363 = vunpack.c.l.b16 %v762
    %v3364 = vunpack.c.h.b16 %v762
    %v3365 = vunpack.c.l.b16 %v763
    %v3366 = vunpack.c.h.b16 %v763
    %v3367 = vunpack.c.l.b16 %v764
    %v3368 = vunpack.c.h.b16 %v764
    %v3369 = vunpack.c.l.b16 %v765
    %v3370 = vunpack.c.h.b16 %v765
    %v3371 = vunpack.c.l.b16 %v766
    %v3372 = vunpack.c.h.b16 %v766
    %v3373 = vunpack.c.l.b16 %v767
    %v3374 = vunpack.c.h.b16 %v767
    %v3375 = vunpack.c.l.b16 %v768
    %v3376 = vunpack.c.h.b16 %v768
    %v3377 = vunpack.c.l.b16 %v769
    %v3378 = vunpack.c.h.b16 %v769
    %v3379 = vunpack.c.l.b16 %v770
    %v3380 = vunpack.c.h.b16 %v770
    %v3381 = vunpack.c.l.b16 %v771
    %v3382 = vunpack.c.h.b16 %v771
    %v3383 = vunpack.c.l.b16 %v772
    %v3384 = vunpack.c.h.b16 %v772
    %v3385 = vunpack.c.l.b16 %v773
    %v3386 = vunpack.c.h.b16 %v773
    %v3387 = vunpack.c.l.b16 %v774
    %v3388 = vunpack.c.h.b16 %v774
    %v3389 = vunpack.c.l.b16 %v775
    %v3390 = vunpack.c.h.b16 %v775
    %v3391 = vunpack.c.l.b16 %v776
    %v3392 = vunpack.c.h.b16 %v776
    %v3393 = vunpack.c.l.b16 %v777
    %v3394 = vunpack.c.h.b16 %v777
    %v3395 = vunpack.c.l.b16 %v778
    %v3396 = vunpack.c.h.b16 %v778
    %v3397 = vunpack.c.l.b16 %v779
    %v3398 = vunpack.c.h.b16 %v779
    %v3399 = vunpack.c.l.b16 %v780
    %v3400 = vunpack.c.h.b16 %v780
    %v3401 = vunpack.c.l.b16 %v781
    %v3402 = vunpack.c.h.b16 %v781
    %v3403 = vunpack.c.l.b16 %v782
    %v3404 = vunpack.c.h.b16 %v782
    %v3405 = vunpack.c.l.b16 %v783
    %v3406 = vunpack.c.h.b16 %v783
    %v3407 = vunpack.c.l.b16 %v784
    %v3408 = vunpack.c.h.b16 %v784
    %v3409 = vunpack.c.l.b16 %v785
    %v3410 = vunpack.c.h.b16 %v785
    %v3411 = vunpack.c.l.b16 %v786
    %v3412 = vunpack.c.h.b16 %v786
    %v3413 = vunpack.c.l.b16 %v787
    %v3414 = vunpack.c.h.b16 %v787
    %v3415 = vunpack.c.l.b16 %v788
    %v3416 = vunpack.c.h.b16 %v788
    %v3417 = vunpack.c.l.b16 %v789
    %v3418 = vunpack.c.h.b16 %v789
    %v3419 = vunpack.c.l.b16 %v790
    %v3420 = vunpack.c.h.b16 %v790
    %v3421 = vunpack.c.l.b16 %v791
    %v3422 = vunpack.c.h.b16 %v791
    %v3423 = vunpack.c.l.b16 %v792
    %v3424 = vunpack.c.h.b16 %v792
    %v3425 = vunpack.c.l.b16 %v793
    %v3426 = vunpack.c.h.b16 %v793
    %v3427 = vunpack.c.l.b16 %v794
    %v3428 = vunpack.c.h.b16 %v794
    %v3429 = vunpack.c.l.b16 %v795
    %v3430 = vunpack.c.h.b16 %v795
    %v3431 = vunpack.c.l.b16 %v796
    %v3432 = vunpack.c.h.b16 %v796
    %v3433 = vunpack.c.l.b16 %v797
    %v3434 = vunpack.c.h.b16 %v797
    %v3435 = vunpack.c.l.b16 %v798
    %v3436 = vunpack.c.h.b16 %v798
    %v3437 = vunpack.c.l.b16 %v799
    %v3438 = vunpack.c.h.b16 %v799
    %v3439 = vunpack.c.l.b16 %v800
    %v3440 = vunpack.c.h.b16 %v800
    %v3441 = vunpack.c.l.b16 %v801
    %v3442 = vunpack.c.h.b16 %v801
    %v3443 = vunpack.c.l.b16 %v802
    %v3444 = vunpack.c.h.b16 %v802
    %v3445 = vunpack.c.l.b16 %v803
    %v3446 = vunpack.c.h.b16 %v803
    %v3447 = vunpack.c.l.b16 %v804
    %v3448 = vunpack.c.h.b16 %v804
    %v3449 = vunpack.c.l.b16 %v805
    %v3450 = vunpack.c.h.b16 %v805
    %v3451 = vunpack.c.l.b16 %v806
    %v3452 = vunpack.c.h.b16 %v806
    %v3453 = vunpack.c.l.b16 %v807
    %v3454 = vunpack.c.h.b16 %v807
    %v3455 = vunpack.c.l.b16 %v808
    %v3456 = vunpack.c.h.b16 %v808
    %v3457 = vunpack.c.l.b16 %v809
    %v3458 = vunpack.c.h.b16 %v809
    %v3459 = vunpack.c.l.b16 %v810
    %v3460 = vunpack.c.h.b16 %v810
    %v3461 = vunpack.c.l.b16 %v811
    %v3462 = vunpack.c.h.b16 %v811
    %v3463 = vunpack.c.l.b16 %v812
    %v3464 = vunpack.c.h.b16 %v812
    %v3465 = vunpack.c.l.b16 %v813
    %v3466 = vunpack.c.h.b16 %v813
    %v3467 = vunpack.c.l.b16 %v814
    %v3468 = vunpack.c.h.b16 %v814
    %v3469 = vunpack.c.l.b16 %v815
    %v3470 = vunpack.c.h.b16 %v815
    %v3471 = vunpack.c.l.b16 %v816
    %v3472 = vunpack.c.h.b16 %v816
    %v3473 = vunpack.c.l.b16 %v817
    %v3474 = vunpack.c.h.b16 %v817
    %v3475 = vunpack.c.l.b16 %v818
    %v3476 = vunpack.c.h.b16 %v818
    %v3477 = vunpack.c.l.b16 %v819
    %v3478 = vunpack.c.h.b16 %v819
    %v3479 = vunpack.c.l.b16 %v820
    %v3480 = vunpack.c.h.b16 %v820
    %v3481 = vunpack.c.l.b16 %v821
    %v3482 = vunpack.c.h.b16 %v821
    %v3483 = vunpack.c.l.b16 %v822
    %v3484 = vunpack.c.h.b16 %v822
    %v3485 = vunpack.c.l.b16 %v823
    %v3486 = vunpack.c.h.b16 %v823
    %v3487 = vunpack.c.l.b16 %v824
    %v3488 = vunpack.c.h.b16 %v824
    %v3489 = vunpack.c.l.b16 %v825
    %v3490 = vunpack.c.h.b16 %v825
    %v3491 = vunpack.c.l.b16 %v826
    %v3492 = vunpack.c.h.b16 %v826
    %v3493 = vunpack.c.l.b16 %v827
    %v3494 = vunpack.c.h.b16 %v827
    %v3495 = vunpack.c.l.b16 %v828
    %v3496 = vunpack.c.h.b16 %v828
    %v3497 = vunpack.c.l.b16 %v829
    %v3498 = vunpack.c.h.b16 %v829
    %v3499 = vunpack.c.l.b16 %v830
    %v3500 = vunpack.c.h.b16 %v830
    %v3501 = vunpack.c.l.b16 %v831
    %v3502 = vunpack.c.h.b16 %v831
    %v3503 = vunpack.c.l.b16 %v832
    %v3504 = vunpack.c.h.b16 %v832
    %v3505 = vunpack.c.l.b16 %v833
    %v3506 = vunpack.c.h.b16 %v833
    %v3507 = vunpack.c.l.b16 %v834
    %v3508 = vunpack.c.h.b16 %v834
    %v3509 = vunpack.c.l.b16 %v835
    %v3510 = vunpack.c.h.b16 %v835
    %v3511 = vunpack.c.l.b16 %v836
    %v3512 = vunpack.c.h.b16 %v836
    %v3513 = vunpack.c.l.b16 %v837
    %v3514 = vunpack.c.h.b16 %v837
    %v3515 = vunpack.c.l.b16 %v838
    %v3516 = vunpack.c.h.b16 %v838
    %v3517 = vunpack.c.l.b16 %v839
    %v3518 = vunpack.c.h.b16 %v839
    %v3519 = vunpack.c.l.b16 %v840
    %v3520 = vunpack.c.h.b16 %v840
    %v3521 = vunpack.c.l.b16 %v841
    %v3522 = vunpack.c.h.b16 %v841
    %v3523 = vunpack.c.l.b16 %v842
    %v3524 = vunpack.c.h.b16 %v842
    %v3525 = vunpack.c.l.b16 %v843
    %v3526 = vunpack.c.h.b16 %v843
    %v3527 = vunpack.c.l.b16 %v844
    %v3528 = vunpack.c.h.b16 %v844
    %v3529 = vunpack.c.l.b16 %v845
    %v3530 = vunpack.c.h.b16 %v845
    %v3531 = vunpack.c.l.b16 %v846
    %v3532 = vunpack.c.h.b16 %v846
    %v3533 = vunpack.c.l.b16 %v847
    %v3534 = vunpack.c.h.b16 %v847
    %v3535 = vunpack.c.l.b16 %v848
    %v3536 = vunpack.c.h.b16 %v848
    %v3537 = vunpack.c.l.b16 %v849
    %v3538 = vunpack.c.h.b16 %v849
    %v3539 = vunpack.c.l.b16 %v850
    %v3540 = vunpack.c.h.b16 %v850
    %v3541 = vunpack.c.l.b16 %v851
    %v3542 = vunpack.c.h.b16 %v851
    %v3543 = vunpack.c.l.b16 %v852
    %v3544 = vunpack.c.h.b16 %v852
    %v3545 = vunpack.c.l.b16 %v853
    %v3546 = vunpack.c.h.b16 %v853
    %v3547 = vunpack.c.l.b16 %v854
    %v3548 = vunpack.c.h.b16 %v854
    %v3549 = vunpack.c.l.b16 %v855
    %v3550 = vunpack.c.h.b16 %v855
    %v3551 = vunpack.c.l.b16 %v856
    %v3552 = vunpack.c.h.b16 %v856
    %v3553 = vunpack.c.l.b16 %v857
    %v3554 = vunpack.c.h.b16 %v857
    %v3555 = vunpack.c.l.b16 %v858
    %v3556 = vunpack.c.h.b16 %v858
    %v3557 = vunpack.c.l.b16 %v859
    %v3558 = vunpack.c.h.b16 %v859
    %v3559 = vunpack.c.l.b16 %v860
    %v3560 = vunpack.c.h.b16 %v860
    %v3561 = vunpack.c.l.b16 %v861
    %v3562 = vunpack.c.h.b16 %v861
    %v3563 = vunpack.c.l.b16 %v862
    %v3564 = vunpack.c.h.b16 %v862
    %v3565 = vunpack.c.l.b16 %v863
    %v3566 = vunpack.c.h.b16 %v863
    %v3567 = vunpack.c.l.b16 %v864
    %v3568 = vunpack.c.h.b16 %v864
    %v3569 = vunpack.c.l.b16 %v865
    %v3570 = vunpack.c.h.b16 %v865
    %v3571 = vunpack.c.l.b16 %v866
    %v3572 = vunpack.c.h.b16 %v866
    %v3573 = vunpack.c.l.b16 %v867
    %v3574 = vunpack.c.h.b16 %v867
    %v3575 = vunpack.c.l.b16 %v868
    %v3576 = vunpack.c.h.b16 %v868
    %v3577 = vunpack.c.l.b16 %v869
    %v3578 = vunpack.c.h.b16 %v869
    %v3579 = vunpack.c.l.b16 %v870
    %v3580 = vunpack.c.h.b16 %v870
    %v3581 = vunpack.c.l.b16 %v871
    %v3582 = vunpack.c.h.b16 %v871
    %v3583 = vunpack.c.l.b16 %v872
    %v3584 = vunpack.c.h.b16 %v872
    %v3585 = vunpack.c.l.b16 %v873
    %v3586 = vunpack.c.h.b16 %v873
    %v3587 = vunpack.c.l.b16 %v874
    %v3588 = vunpack.c.h.b16 %v874
    %v3589 = vunpack.c.l.b16 %v875
    %v3590 = vunpack.c.h.b16 %v875
    %v3591 = vunpack.c.l.b16 %v876
    %v3592 = vunpack.c.h.b16 %v876
    %v3593 = vunpack.c.l.b16 %v877
    %v3594 = vunpack.c.h.b16 %v877
    %v3595 = vunpack.c.l.b16 %v878
    %v3596 = vunpack.c.h.b16 %v878
    %v3597 = vunpack.c.l.b16 %v879
    %v3598 = vunpack.c.h.b16 %v879
    %v3599 = vunpack.c.l.b16 %v880
    %v3600 = vunpack.c.h.b16 %v880
    %v3601 = vunpack.c.l.b16 %v881
    %v3602 = vunpack.c.h.b16 %v881
    %v3603 = vunpack.c.l.b16 %v882
    %v3604 = vunpack.c.h.b16 %v882
    %v3605 = vunpack.c.l.b16 %v883
    %v3606 = vunpack.c.h.b16 %v883
    %v3607 = vunpack.c.l.b16 %v884
    %v3608 = vunpack.c.h.b16 %v884
    %v3609 = vunpack.c.l.b16 %v885
    %v3610 = vunpack.c.h.b16 %v885
    %v3611 = vunpack.c.l.b16 %v886
    %v3612 = vunpack.c.h.b16 %v886
    %v3613 = vunpack.c.l.b16 %v887
    %v3614 = vunpack.c.h.b16 %v887
    %v3615 = vunpack.c.l.b16 %v888
    %v3616 = vunpack.c.h.b16 %v888
    %v3617 = vunpack.c.l.b16 %v889
    %v3618 = vunpack.c.h.b16 %v889
    %v3619 = vunpack.c.l.b16 %v890
    %v3620 = vunpack.c.h.b16 %v890
    %v3621 = vunpack.c.l.b16 %v891
    %v3622 = vunpack.c.h.b16 %v891
    %v3623 = vunpack.c.l.b16 %v892
    %v3624 = vunpack.c.h.b16 %v892
    %v3625 = vunpack.c.l.b16 %v893
    %v3626 = vunpack.c.h.b16 %v893
    %v3627 = vunpack.c.l.b16 %v894
    %v3628 = vunpack.c.h.b16 %v894
    %v3629 = vunpack.c.l.b16 %v895
    %v3630 = vunpack.c.h.b16 %v895
    %v3631 = vunpack.c.l.b16 %v896
    %v3632 = vunpack.c.h.b16 %v896
    %v3633 = vunpack.c.l.b16 %v897
    %v3634 = vunpack.c.h.b16 %v897
    %v3635 = vunpack.c.l.b16 %v898
    %v3636 = vunpack.c.h.b16 %v898
    %v3637 = vunpack.c.l.b16 %v899
    %v3638 = vunpack.c.h.b16 %v899
    %v3639 = vunpack.c.l.b16 %v900
    %v3640 = vunpack.c.h.b16 %v900
    %v3641 = vunpack.c.l.b16 %v901
    %v3642 = vunpack.c.h.b16 %v901
    %v3643 = vunpack.c.l.b16 %v902
    %v3644 = vunpack.c.h.b16 %v902
    %v3645 = vunpack.c.l.b16 %v903
    %v3646 = vunpack.c.h.b16 %v903
    %v3647 = vunpack.c.l.b16 %v904
    %v3648 = vunpack.c.h.b16 %v904
    %v3649 = vunpack.c.l.b16 %v905
    %v3650 = vunpack.c.h.b16 %v905
    %v3651 = vunpack.c.l.b16 %v906
    %v3652 = vunpack.c.h.b16 %v906
    %v3653 = vunpack.c.l.b16 %v907
    %v3654 = vunpack.c.h.b16 %v907
    %v3655 = vunpack.c.l.b16 %v908
    %v3656 = vunpack.c.h.b16 %v908
    %v3657 = vunpack.c.l.b16 %v909
    %v3658 = vunpack.c.h.b16 %v909
    %v3659 = vunpack.c.l.b16 %v910
    %v3660 = vunpack.c.h.b16 %v910
    %v3661 = vunpack.c.l.b16 %v911
    %v3662 = vunpack.c.h.b16 %v911
    %v3663 = vunpack.c.l.b16 %v912
    %v3664 = vunpack.c.h.b16 %v912
    %v3665 = vunpack.c.l.b16 %v913
    %v3666 = vunpack.c.h.b16 %v913
    %v3667 = vunpack.c.l.b16 %v914
    %v3668 = vunpack.c.h.b16 %v914
    %v3669 = vunpack.c.l.b16 %v915
    %v3670 = vunpack.c.h.b16 %v915
    %v3671 = vunpack.c.l.b16 %v916
    %v3672 = vunpack.c.h.b16 %v916
    %v3673 = vunpack.c.l.b16 %v917
    %v3674 = vunpack.c.h.b16 %v917
    %v3675 = vunpack.c.l.b16 %v918
    %v3676 = vunpack.c.h.b16 %v918
    %v3677 = vunpack.c.l.b16 %v919
    %v3678 = vunpack.c.h.b16 %v919
    %v3679 = vunpack.c.l.b16 %v920
    %v3680 = vunpack.c.h.b16 %v920
    %v3681 = vunpack.c.l.b16 %v921
    %v3682 = vunpack.c.h.b16 %v921
    %v3683 = vunpack.c.l.b16 %v922
    %v3684 = vunpack.c.h.b16 %v922
    %v3685 = vunpack.c.l.b16 %v923
    %v3686 = vunpack.c.h.b16 %v923
    %v3687 = vunpack.c.l.b16 %v924
    %v3688 = vunpack.c.h.b16 %v924
    %v3689 = vunpack.c.l.b16 %v925
    %v3690 = vunpack.c.h.b16 %v925
    %v3691 = vunpack.c.l.b16 %v926
    %v3692 = vunpack.c.h.b16 %v926
    %v3693 = vunpack.c.l.b16 %v927
    %v3694 = vunpack.c.h.b16 %v927
    %v3695 = vunpack.c.l.b16 %v928
    %v3696 = vunpack.c.h.b16 %v928
    %v3697 = vunpack.c.l.b16 %v929
    %v3698 = vunpack.c.h.b16 %v929
    %v3699 = vunpack.c.l.b16 %v930
    %v3700 = vunpack.c.h.b16 %v930
    %v3701 = vunpack.c.l.b16 %v931
    %v3702 = vunpack.c.h.b16 %v931
    %v3703 = vunpack.c.l.b16 %v932
    %v3704 = vunpack.c.h.b16 %v932
    %v3705 = vunpack.c.l.b16 %v933
    %v3706 = vunpack.c.h.b16 %v933
    %v3707 = vunpack.c.l.b16 %v934
    %v3708 = vunpack.c.h.b16 %v934
    %v3709 = vunpack.c.l.b16 %v935
    %v3710 = vunpack.c.h.b16 %v935
    %v3711 = vunpack.c.l.b16 %v936
    %v3712 = vunpack.c.h.b16 %v936
    %v3713 = vunpack.c.l.b16 %v937
    %v3714 = vunpack.c.h.b16 %v937
    %v3715 = vunpack.c.l.b16 %v938
    %v3716 = vunpack.c.h.b16 %v938
    %v3717 = vunpack.c.l.b16 %v939
    %v3718 = vunpack.c.h.b16 %v939
    %v3719 = vunpack.c.l.b16 %v940
    %v3720 = vunpack.c.h.b16 %v940
    %v3721 = vunpack.c.l.b16 %v941
    %v3722 = vunpack.c.h.b16 %v941
    %v3723 = vunpack.c.l.b16 %v942
    %v3724 = vunpack.c.h.b16 %v942
    %v3725 = vunpack.c.l.b16 %v943
    %v3726 = vunpack.c.h.b16 %v943
    %v3727 = vunpack.c.l.b16 %v944
    %v3728 = vunpack.c.h.b16 %v944
    %v3729 = vunpack.c.l.b16 %v945
    %v3730 = vunpack.c.h.b16 %v945
    %v3731 = vunpack.c.l.b16 %v946
    %v3732 = vunpack.c.h.b16 %v946
    %v3733 = vunpack.c.l.b16 %v947
    %v3734 = vunpack.c.h.b16 %v947
    %v3735 = vunpack.c.l.b16 %v948
    %v3736 = vunpack.c.h.b16 %v948
    %v3737 = vunpack.c.l.b16 %v949
    %v3738 = vunpack.c.h.b16 %v949
    %v3739 = vunpack.c.l.b16 %v950
    %v3740 = vunpack.c.h.b16 %v950
    %v3741 = vunpack.c.l.b16 %v951
    %v3742 = vunpack.c.h.b16 %v951
    %v3743 = vunpack.c.l.b16 %v952
    %v3744 = vunpack.c.h.b16 %v952
    %v3745 = vunpack.c.l.b16 %v953
    %v3746 = vunpack.c.h.b16 %v953
    %v3747 = vunpack.c.l.b16 %v954
    %v3748 = vunpack.c.h.b16 %v954
    %v3749 = vunpack.c.l.b16 %v955
    %v3750 = vunpack.c.h.b16 %v955
    %v3751 = vunpack.c.l.b16 %v956
    %v3752 = vunpack.c.h.b16 %v956
    %v3753 = vunpack.c.l.b16 %v957
    %v3754 = vunpack.c.h.b16 %v957
    %v3755 = vunpack.c.l.b16 %v958
    %v3756 = vunpack.c.h.b16 %v958
    %v3757 = vunpack.c.l.b16 %v959
    %v3758 = vunpack.c.h.b16 %v959
    %v3759 = vunpack.c.l.b16 %v960
    %v3760 = vunpack.c.h.b16 %v960
    %v3761 = vunpack.c.l.b16 %v961
    %v3762 = vunpack.c.h.b16 %v961
    %v3763 = vunpack.c.l.b16 %v962
    %v3764 = vunpack.c.h.b16 %v962
    %v3765 = vunpack.c.l.b16 %v963
    %v3766 = vunpack.c.h.b16 %v963
    %v3767 = vunpack.c.l.b16 %v964
    %v3768 = vunpack.c.h.b16 %v964
    %v3769 = vunpack.c.l.b16 %v965
    %v3770 = vunpack.c.h.b16 %v965
    %v3771 = vunpack.c.l.b16 %v966
    %v3772 = vunpack.c.h.b16 %v966
    %v3773 = vunpack.c.l.b16 %v967
    %v3774 = vunpack.c.h.b16 %v967
    %v3775 = vunpack.c.l.b16 %v968
    %v3776 = vunpack.c.h.b16 %v968
    %v3777 = vunpack.c.l.b16 %v969
    %v3778 = vunpack.c.h.b16 %v969
    %v3779 = vunpack.c.l.b16 %v970
    %v3780 = vunpack.c.h.b16 %v970
    %v3781 = vunpack.c.l.b16 %v971
    %v3782 = vunpack.c.h.b16 %v971
    %v3783 = vunpack.c.l.b16 %v972
    %v3784 = vunpack.c.h.b16 %v972
    %v3785 = vunpack.c.l.b16 %v973
    %v3786 = vunpack.c.h.b16 %v973
    %v3787 = vunpack.c.l.b16 %v974
    %v3788 = vunpack.c.h.b16 %v974
    %v3789 = vunpack.c.l.b16 %v975
    %v3790 = vunpack.c.h.b16 %v975
    %v3791 = vunpack.c.l.b16 %v976
    %v3792 = vunpack.c.h.b16 %v976
    %v3793 = vunpack.c.l.b16 %v977
    %v3794 = vunpack.c.h.b16 %v977
    %v3795 = vunpack.c.l.b16 %v978
    %v3796 = vunpack.c.h.b16 %v978
    %v3797 = vunpack.c.l.b16 %v979
    %v3798 = vunpack.c.h.b16 %v979
    %v3799 = vunpack.c.l.b16 %v980
    %v3800 = vunpack.c.h.b16 %v980
    %v3801 = vunpack.c.l.b16 %v981
    %v3802 = vunpack.c.h.b16 %v981
    %v3803 = vunpack.c.l.b16 %v982
    %v3804 = vunpack.c.h.b16 %v982
    %v3805 = vunpack.c.l.b16 %v983
    %v3806 = vunpack.c.h.b16 %v983
    %v3807 = vunpack.c.l.b16 %v984
    %v3808 = vunpack.c.h.b16 %v984
    %v3809 = vunpack.c.l.b16 %v985
    %v3810 = vunpack.c.h.b16 %v985
    %v3811 = vunpack.c.l.b16 %v986
    %v3812 = vunpack.c.h.b16 %v986
    %v3813 = vunpack.c.l.b16 %v987
    %v3814 = vunpack.c.h.b16 %v987
    %v3815 = vunpack.c.l.b16 %v988
    %v3816 = vunpack.c.h.b16 %v988
    %v3817 = vunpack.c.l.b16 %v989
    %v3818 = vunpack.c.h.b16 %v989
    %v3819 = vunpack.c.l.b16 %v990
    %v3820 = vunpack.c.h.b16 %v990
    %v3821 = vunpack.c.l.b16 %v991
    %v3822 = vunpack.c.h.b16 %v991
    %v3823 = vunpack.c.l.b16 %v992
    %v3824 = vunpack.c.h.b16 %v992
    %v3825 = vunpack.c.l.b16 %v993
    %v3826 = vunpack.c.h.b16 %v993
    %v3827 = vunpack.c.l.b16 %v994
    %v3828 = vunpack.c.h.b16 %v994
    %v3829 = vunpack.c.l.b16 %v995
    %v3830 = vunpack.c.h.b16 %v995
    %v3831 = vunpack.c.l.b16 %v996
    %v3832 = vunpack.c.h.b16 %v996
    %v3833 = vunpack.c.l.b16 %v997
    %v3834 = vunpack.c.h.b16 %v997
    %v3835 = vunpack.c.l.b16 %v998
    %v3836 = vunpack.c.h.b16 %v998
    %v3837 = vunpack.c.l.b16 %v999
    %v3838 = vunpack.c.h.b16 %v999
    %v3839 = vunpack.c.l.b16 %v1000
    %v3840 = vunpack.c.h.b16 %v1000
    %v3841 = vunpack.c.l.b16 %v1001
    %v3842 = vunpack.c.h.b16 %v1001
    %v3843 = vunpack.c.l.b16 %v1002
    %v3844 = vunpack.c.h.b16 %v1002
    %v3845 = vunpack.c.l.b16 %v1003
    %v3846 = vunpack.c.h.b16 %v1003
    %v3847 = vunpack.c.l.b16 %v1004
    %v3848 = vunpack.c.h.b16 %v1004
    %v3849 = vunpack.c.l.b16 %v1005
    %v3850 = vunpack.c.h.b16 %v1005
    %v3851 = vunpack.c.l.b16 %v1006
    %v3852 = vunpack.c.h.b16 %v1006
    %v3853 = vunpack.c.l.b16 %v1007
    %v3854 = vunpack.c.h.b16 %v1007
    %v3855 = vunpack.c.l.b16 %v1008
    %v3856 = vunpack.c.h.b16 %v1008
    %v3857 = vunpack.c.l.b16 %v1009
    %v3858 = vunpack.c.h.b16 %v1009
    %v3859 = vunpack.c.l.b16 %v1010
    %v3860 = vunpack.c.h.b16 %v1010
    %v3861 = vunpack.c.l.b16 %v1011
    %v3862 = vunpack.c.h.b16 %v1011
    %v3863 = vunpack.c.l.b16 %v1012
    %v3864 = vunpack.c.h.b16 %v1012
    %v3865 = vunpack.c.l.b16 %v1013
    %v3866 = vunpack.c.h.b16 %v1013
    %v3867 = vunpack.c.l.b16 %v1014
    %v3868 = vunpack.c.h.b16 %v1014
    %v3869 = vunpack.c.l.b16 %v1015
    %v3870 = vunpack.c.h.b16 %v1015
    %v3871 = vunpack.c.l.b16 %v1016
    %v3872 = vunpack.c.h.b16 %v1016
    %v3873 = vunpack.c.l.b16 %v1017
    %v3874 = vunpack.c.h.b16 %v1017
    %v3875 = vunpack.c.l.b16 %v1018
    %v3876 = vunpack.c.h.b16 %v1018
    %v3877 = vunpack.c.l.b16 %v1019
    %v3878 = vunpack.c.h.b16 %v1019
    %v3879 = vunpack.c.l.b16 %v1020
    %v3880 = vunpack.c.h.b16 %v1020
    %v3881 = vunpack.c.l.b16 %v1021
    %v3882 = vunpack.c.h.b16 %v1021
    %v3883 = vunpack.c.l.b16 %v1022
    %v3884 = vunpack.c.h.b16 %v1022
    %v3885 = vunpack.c.l.b16 %v1023
    %v3886 = vunpack.c.h.b16 %v1023
    %v3887 = vunpack.c.l.b16 %v1024
    %v3888 = vunpack.c.h.b16 %v1024
    %v3889 = vunpack.c.l.b16 %v1025
    %v3890 = vunpack.c.h.b16 %v1025
    %v3891 = vunpack.c.l.b16 %v1026
    %v3892 = vunpack.c.h.b16 %v1026
    %v3893 = vunpack.c.l.b16 %v1027
    %v3894 = vunpack.c.h.b16 %v1027
    %v3895 = vunpack.c.l.b16 %v1028
    %v3896 = vunpack.c.h.b16 %v1028
    %v3897 = vunpack.c.l.b16 %v1029
    %v3898 = vunpack.c.h.b16 %v1029
    %v3899 = vunpack.c.l.b16 %v1030
    %v3900 = vunpack.c.h.b16 %v1030
    %v3901 = vunpack.c.l.b16 %v1031
    %v3902 = vunpack.c.h.b16 %v1031
    %v3903 = vunpack.c.l.b16 %v1032
    %v3904 = vunpack.c.h.b16 %v1032
    %v3905 = vunpack.c.l.b16 %v1033
    %v3906 = vunpack.c.h.b16 %v1033
    %v3907 = vunpack.c.l.b16 %v1034
    %v3908 = vunpack.c.h.b16 %v1034
    %v3909 = vunpack.c.l.b16 %v1035
    %v3910 = vunpack.c.h.b16 %v1035
    %v3911 = vunpack.c.l.b16 %v1036
    %v3912 = vunpack.c.h.b16 %v1036
    %v3913 = vunpack.c.l.b16 %v1037
    %v3914 = vunpack.c.h.b16 %v1037
    %v3915 = vunpack.c.l.b16 %v1038
    %v3916 = vunpack.c.h.b16 %v1038
    %v3917 = vunpack.c.l.b16 %v1039
    %v3918 = vunpack.c.h.b16 %v1039
    %v3919 = vunpack.c.l.b16 %v1040
    %v3920 = vunpack.c.h.b16 %v1040
    %v3921 = vunpack.c.l.b16 %v1041
    %v3922 = vunpack.c.h.b16 %v1041
    %v3923 = vunpack.c.l.b16 %v1042
    %v3924 = vunpack.c.h.b16 %v1042
    %v3925 = vunpack.c.l.b16 %v1043
    %v3926 = vunpack.c.h.b16 %v1043
    %v3927 = vunpack.c.l.b16 %v1044
    %v3928 = vunpack.c.h.b16 %v1044
    %v3929 = vunpack.c.l.b16 %v1045
    %v3930 = vunpack.c.h.b16 %v1045
    %v3931 = vunpack.c.l.b16 %v1046
    %v3932 = vunpack.c.h.b16 %v1046
    %v3933 = vunpack.c.l.b16 %v1047
    %v3934 = vunpack.c.h.b16 %v1047
    %v3935 = vunpack.c.l.b16 %v1048
    %v3936 = vunpack.c.h.b16 %v1048
    %v3937 = vunpack.c.l.b16 %v1049
    %v3938 = vunpack.c.h.b16 %v1049
    %v3939 = vunpack.c.l.b16 %v1050
    %v3940 = vunpack.c.h.b16 %v1050
    %v3941 = vunpack.c.l.b16 %v1051
    %v3942 = vunpack.c.h.b16 %v1051
    %v3943 = vunpack.c.l.b16 %v1052
    %v3944 = vunpack.c.h.b16 %v1052
    %v3945 = vunpack.c.l.b16 %v1053
    %v3946 = vunpack.c.h.b16 %v1053
    %v3947 = vunpack.c.l.b16 %v1054
    %v3948 = vunpack.c.h.b16 %v1054
    %v3949 = vunpack.c.l.b16 %v1055
    %v3950 = vunpack.c.h.b16 %v1055
    %v3951 = vunpack.c.l.b16 %v1056
    %v3952 = vunpack.c.h.b16 %v1056
    %v3953 = vunpack.c.l.b16 %v1057
    %v3954 = vunpack.c.h.b16 %v1057
    %v3955 = vunpack.c.l.b16 %v1058
    %v3956 = vunpack.c.h.b16 %v1058
    %v3957 = vunpack.c.l.b16 %v1059
    %v3958 = vunpack.c.h.b16 %v1059
    %v3959 = vunpack.c.l.b16 %v1060
    %v3960 = vunpack.c.h.b16 %v1060
    %v3961 = vunpack.c.l.b16 %v1061
    %v3962 = vunpack.c.h.b16 %v1061
    %v3963 = vunpack.c.l.b16 %v1062
    %v3964 = vunpack.c.h.b16 %v1062
    %v3965 = vunpack.c.l.b16 %v1063
    %v3966 = vunpack.c.h.b16 %v1063
    %v3967 = vunpack.c.l.b16 %v1064
    %v3968 = vunpack.c.h.b16 %v1064
    %v3969 = vunpack.c.l.b16 %v1065
    %v3970 = vunpack.c.h.b16 %v1065
    %v3971 = vunpack.c.l.b16 %v1066
    %v3972 = vunpack.c.h.b16 %v1066
    %v3973 = vunpack.c.l.b16 %v1067
    %v3974 = vunpack.c.h.b16 %v1067
    %v3975 = vunpack.c.l.b16 %v1068
    %v3976 = vunpack.c.h.b16 %v1068
    %v3977 = vunpack.c.l.b16 %v1069
    %v3978 = vunpack.c.h.b16 %v1069
    %v3979 = vunpack.c.l.b16 %v1070
    %v3980 = vunpack.c.h.b16 %v1070
    %v3981 = vunpack.c.l.b16 %v1071
    %v3982 = vunpack.c.h.b16 %v1071
    %v3983 = vunpack.c.l.b16 %v1072
    %v3984 = vunpack.c.h.b16 %v1072
    %v3985 = vunpack.c.l.b16 %v1073
    %v3986 = vunpack.c.h.b16 %v1073
    %v3987 = vunpack.c.l.b16 %v1074
    %v3988 = vunpack.c.h.b16 %v1074
    %v3989 = vunpack.c.l.b16 %v1075
    %v3990 = vunpack.c.h.b16 %v1075
    %v3991 = vunpack.c.l.b16 %v1076
    %v3992 = vunpack.c.h.b16 %v1076
    %v3993 = vunpack.c.l.b16 %v1077
    %v3994 = vunpack.c.h.b16 %v1077
    %v3995 = vunpack.c.l.b16 %v1078
    %v3996 = vunpack.c.h.b16 %v1078
    %v3997 = vunpack.c.l.b16 %v1079
    %v3998 = vunpack.c.h.b16 %v1079
    %v3999 = vunpack.c.l.b16 %v1080
    %v4000 = vunpack.c.h.b16 %v1080
    %v4001 = vunpack.c.l.b16 %v1081
    %v4002 = vunpack.c.h.b16 %v1081
    %v4003 = vunpack.c.l.b16 %v1082
    %v4004 = vunpack.c.h.b16 %v1082
    %v4005 = vunpack.c.l.b16 %v1083
    %v4006 = vunpack.c.h.b16 %v1083
    %v4007 = vunpack.c.l.b16 %v1084
    %v4008 = vunpack.c.h.b16 %v1084
    %v4009 = vunpack.c.l.b16 %v1085
    %v4010 = vunpack.c.h.b16 %v1085
    %v4011 = vunpack.c.l.b16 %v1086
    %v4012 = vunpack.c.h.b16 %v1086
    %v4013 = vunpack.c.l.b16 %v1087
    %v4014 = vunpack.c.h.b16 %v1087
    %v4015 = vunpack.c.l.b16 %v1088
    %v4016 = vunpack.c.h.b16 %v1088
    %v4017 = vunpack.c.l.b16 %v1089
    %v4018 = vunpack.c.h.b16 %v1089
    %v4019 = vunpack.c.l.b16 %v1090
    %v4020 = vunpack.c.h.b16 %v1090
    %v4021 = vunpack.c.l.b16 %v1091
    %v4022 = vunpack.c.h.b16 %v1091
    %v4023 = vunpack.c.l.b16 %v1092
    %v4024 = vunpack.c.h.b16 %v1092
    %v4025 = vunpack.c.l.b16 %v1093
    %v4026 = vunpack.c.h.b16 %v1093
    %v4027 = vunpack.c.l.b16 %v1094
    %v4028 = vunpack.c.h.b16 %v1094
    %v4029 = vunpack.c.l.b16 %v1095
    %v4030 = vunpack.c.h.b16 %v1095
    %v4031 = vunpack.c.l.b16 %v1096
    %v4032 = vunpack.c.h.b16 %v1096
    %v4033 = vunpack.c.l.b16 %v1097
    %v4034 = vunpack.c.h.b16 %v1097
    %v4035 = vunpack.c.l.b16 %v1098
    %v4036 = vunpack.c.h.b16 %v1098
    %v4037 = vunpack.c.l.b16 %v1099
    %v4038 = vunpack.c.h.b16 %v1099
    %v4039 = vunpack.c.l.b16 %v1100
    %v4040 = vunpack.c.h.b16 %v1100
    %v4041 = vunpack.c.l.b16 %v1101
    %v4042 = vunpack.c.h.b16 %v1101
    %v4043 = vunpack.c.l.b16 %v1102
    %v4044 = vunpack.c.h.b16 %v1102
    %v4045 = vunpack.c.l.b16 %v1103
    %v4046 = vunpack.c.h.b16 %v1103
    %v4047 = vunpack.c.l.b16 %v1104
    %v4048 = vunpack.c.h.b16 %v1104
    %v4049 = vunpack.c.l.b16 %v1105
    %v4050 = vunpack.c.h.b16 %v1105
    %v4051 = vunpack.c.l.b16 %v1106
    %v4052 = vunpack.c.h.b16 %v1106
    %v4053 = vunpack.c.l.b16 %v1107
    %v4054 = vunpack.c.h.b16 %v1107
    %v4055 = vunpack.c.l.b16 %v1108
    %v4056 = vunpack.c.h.b16 %v1108
    %v4057 = vunpack.c.l.b16 %v1109
    %v4058 = vunpack.c.h.b16 %v1109
    %v4059 = vunpack.c.l.b16 %v1110
    %v4060 = vunpack.c.h.b16 %v1110
    %v4061 = vunpack.c.l.b16 %v1111
    %v4062 = vunpack.c.h.b16 %v1111
    %v4063 = vunpack.c.l.b16 %v1112
    %v4064 = vunpack.c.h.b16 %v1112
    %v4065 = vunpack.c.l.b16 %v1113
    %v4066 = vunpack.c.h.b16 %v1113
    %v4067 = vunpack.c.l.b16 %v1114
    %v4068 = vunpack.c.h.b16 %v1114
    %v4069 = vunpack.c.l.b16 %v1115
    %v4070 = vunpack.c.h.b16 %v1115
    %v4071 = vunpack.c.l.b16 %v1116
    %v4072 = vunpack.c.h.b16 %v1116
    %v4073 = vunpack.c.l.b16 %v1117
    %v4074 = vunpack.c.h.b16 %v1117
    %v4075 = vunpack.c.l.b16 %v1118
    %v4076 = vunpack.c.h.b16 %v1118
    %v4077 = vunpack.c.l.b16 %v1119
    %v4078 = vunpack.c.h.b16 %v1119
    %v4079 = vunpack.c.l.b16 %v1120
    %v4080 = vunpack.c.h.b16 %v1120
    %v4081 = vunpack.c.l.b16 %v1121
    %v4082 = vunpack.c.h.b16 %v1121
    %v4083 = vunpack.c.l.b16 %v1122
    %v4084 = vunpack.c.h.b16 %v1122
    %v4085 = vunpack.c.l.b16 %v1123
    %v4086 = vunpack.c.h.b16 %v1123
    %v4087 = vunpack.c.l.b16 %v1124
    %v4088 = vunpack.c.h.b16 %v1124
    %v4089 = vunpack.c.l.b16 %v1125
    %v4090 = vunpack.c.h.b16 %v1125
    %v4091 = vunpack.c.l.b16 %v1126
    %v4092 = vunpack.c.h.b16 %v1126
    %v4093 = vunpack.c.l.b16 %v1127
    %v4094 = vunpack.c.h.b16 %v1127
    %v4095 = vunpack.c.l.b16 %v1128
    %v4096 = vunpack.c.h.b16 %v1128
    %v4097 = vunpack.c.l.b16 %v1129
    %v4098 = vunpack.c.h.b16 %v1129
    %v4099 = vunpack.c.l.b16 %v1130
    %v4100 = vunpack.c.h.b16 %v1130
    %v4101 = vunpack.c.l.b16 %v1131
    %v4102 = vunpack.c.h.b16 %v1131
    %v4103 = vunpack.c.l.b16 %v1132
    %v4104 = vunpack.c.h.b16 %v1132
    %v4105 = vunpack.c.l.b16 %v1133
    %v4106 = vunpack.c.h.b16 %v1133
    %v4107 = vunpack.c.l.b16 %v1134
    %v4108 = vunpack.c.h.b16 %v1134
    %v4109 = vunpack.c.l.b16 %v1135
    %v4110 = vunpack.c.h.b16 %v1135
    %v4111 = vunpack.c.l.b16 %v1136
    %v4112 = vunpack.c.h.b16 %v1136
    %v4113 = vunpack.c.l.b16 %v1137
    %v4114 = vunpack.c.h.b16 %v1137
    %v4115 = vunpack.c.l.b16 %v1138
    %v4116 = vunpack.c.h.b16 %v1138
    %v4117 = vunpack.c.l.b16 %v1139
    %v4118 = vunpack.c.h.b16 %v1139
    %v4119 = vunpack.c.l.b16 %v1140
    %v4120 = vunpack.c.h.b16 %v1140
    %v4121 = vunpack.c.l.b16 %v1141
    %v4122 = vunpack.c.h.b16 %v1141
    %v4123 = vunpack.c.l.b16 %v1142
    %v4124 = vunpack.c.h.b16 %v1142
    %v4125 = vunpack.c.l.b16 %v1143
    %v4126 = vunpack.c.h.b16 %v1143
    %v4127 = vunpack.c.l.b16 %v1144
    %v4128 = vunpack.c.h.b16 %v1144
    %v4129 = vunpack.c.l.b16 %v1145
    %v4130 = vunpack.c.h.b16 %v1145
    %v4131 = vunpack.c.l.b16 %v1146
    %v4132 = vunpack.c.h.b16 %v1146
    %v4133 = vunpack.c.l.b16 %v1147
    %v4134 = vunpack.c.h.b16 %v1147
    %v4135 = vunpack.c.l.b16 %v1148
    %v4136 = vunpack.c.h.b16 %v1148
    %v4137 = vunpack.c.l.b16 %v1149
    %v4138 = vunpack.c.h.b16 %v1149
    %v4139 = vunpack.c.l.b16 %v1150
    %v4140 = vunpack.c.h.b16 %v1150
    %v4141 = vunpack.c.l.b16 %v1151
    %v4142 = vunpack.c.h.b16 %v1151
    %v4143 = vunpack.c.l.b16 %v1152
    %v4144 = vunpack.c.h.b16 %v1152
    %v4145 = vunpack.c.l.b16 %v1153
    %v4146 = vunpack.c.h.b16 %v1153
    %v4147 = vunpack.c.l.b16 %v1154
    %v4148 = vunpack.c.h.b16 %v1154
    %v4149 = vunpack.c.l.b16 %v1155
    %v4150 = vunpack.c.h.b16 %v1155
    %v4151 = vunpack.c.l.b16 %v1156
    %v4152 = vunpack.c.h.b16 %v1156
    %v4153 = vunpack.c.l.b16 %v1157
    %v4154 = vunpack.c.h.b16 %v1157
    %v4155 = vunpack.c.l.b16 %v1158
    %v4156 = vunpack.c.h.b16 %v1158
    %v4157 = vunpack.c.l.b16 %v1159
    %v4158 = vunpack.c.h.b16 %v1159
    %v4159 = vunpack.c.l.b16 %v1160
    %v4160 = vunpack.c.h.b16 %v1160
    %v4161 = vunpack.c.l.b16 %v1161
    %v4162 = vunpack.c.h.b16 %v1161
    %v4163 = vunpack.c.l.b16 %v1162
    %v4164 = vunpack.c.h.b16 %v1162
    %v4165 = vunpack.c.l.b16 %v1163
    %v4166 = vunpack.c.h.b16 %v1163
    %v4167 = vunpack.c.l.b16 %v1164
    %v4168 = vunpack.c.h.b16 %v1164
    %v4169 = vunpack.c.l.b16 %v1165
    %v4170 = vunpack.c.h.b16 %v1165
    %v4171 = vunpack.c.l.b16 %v1166
    %v4172 = vunpack.c.h.b16 %v1166
    %v4173 = vunpack.c.l.b16 %v1167
    %v4174 = vunpack.c.h.b16 %v1167
    %v4175 = vunpack.c.l.b16 %v1168
    %v4176 = vunpack.c.h.b16 %v1168
    %v4177 = vunpack.c.l.b16 %v1169
    %v4178 = vunpack.c.h.b16 %v1169
    %v4179 = vunpack.c.l.b16 %v1170
    %v4180 = vunpack.c.h.b16 %v1170
    %v4181 = vunpack.c.l.b16 %v1171
    %v4182 = vunpack.c.h.b16 %v1171
    %v4183 = vunpack.c.l.b16 %v1172
    %v4184 = vunpack.c.h.b16 %v1172
    %v4185 = vunpack.c.l.b16 %v1173
    %v4186 = vunpack.c.h.b16 %v1173
    %v4187 = vunpack.c.l.b16 %v1174
    %v4188 = vunpack.c.h.b16 %v1174
    %v4189 = vunpack.c.l.b16 %v1175
    %v4190 = vunpack.c.h.b16 %v1175
    %v4191 = vunpack.c.l.b16 %v1176
    %v4192 = vunpack.c.h.b16 %v1176
    %v4193 = vunpack.c.l.b16 %v1177
    %v4194 = vunpack.c.h.b16 %v1177
    %v4195 = vunpack.c.l.b16 %v1178
    %v4196 = vunpack.c.h.b16 %v1178
    %v4197 = vunpack.c.l.b16 %v1179
    %v4198 = vunpack.c.h.b16 %v1179
    %v4199 = vunpack.c.l.b16 %v1180
    %v4200 = vunpack.c.h.b16 %v1180
    %v4201 = vunpack.c.l.b16 %v1181
    %v4202 = vunpack.c.h.b16 %v1181
    %v4203 = vunpack.c.l.b16 %v1182
    %v4204 = vunpack.c.h.b16 %v1182
    %v4205 = vunpack.c.l.b16 %v1183
    %v4206 = vunpack.c.h.b16 %v1183
    %v4207 = vunpack.c.l.b16 %v1184
    %v4208 = vunpack.c.h.b16 %v1184
    %v4209 = vunpack.c.l.b16 %v1185
    %v4210 = vunpack.c.h.b16 %v1185
    %v4211 = vunpack.c.l.b16 %v1186
    %v4212 = vunpack.c.h.b16 %v1186
    %v4213 = vunpack.c.l.b16 %v1187
    %v4214 = vunpack.c.h.b16 %v1187
    %v4215 = vunpack.c.l.b16 %v1188
    %v4216 = vunpack.c.h.b16 %v1188
    %v4217 = vunpack.c.l.b16 %v1189
    %v4218 = vunpack.c.h.b16 %v1189
    %v4219 = vunpack.c.l.b16 %v1190
    %v4220 = vunpack.c.h.b16 %v1190
    %v4221 = vunpack.c.l.b16 %v1191
    %v4222 = vunpack.c.h.b16 %v1191
    %v4223 = vunpack.c.l.b16 %v1192
    %v4224 = vunpack.c.h.b16 %v1192
    %v4225 = vunpack.c.l.b16 %v1193
    %v4226 = vunpack.c.h.b16 %v1193
    %v4227 = vunpack.c.l.b16 %v1194
    %v4228 = vunpack.c.h.b16 %v1194
    %v4229 = vunpack.c.l.b16 %v1195
    %v4230 = vunpack.c.h.b16 %v1195
    %v4231 = vunpack.c.l.b16 %v1196
    %v4232 = vunpack.c.h.b16 %v1196
    %v4233 = vunpack.c.l.b16 %v1197
    %v4234 = vunpack.c.h.b16 %v1197
    %v4235 = vunpack.c.l.b16 %v1198
    %v4236 = vunpack.c.h.b16 %v1198
    %v4237 = vunpack.c.l.b16 %v1199
    %v4238 = vunpack.c.h.b16 %v1199
    %v4239 = vunpack.c.l.b16 %v1200
    %v4240 = vunpack.c.h.b16 %v1200
    %v4241 = vunpack.c.l.b16 %v1201
    %v4242 = vunpack.c.h.b16 %v1201
    %v4243 = vunpack.c.l.b16 %v1202
    %v4244 = vunpack.c.h.b16 %v1202
    %v4245 = vunpack.c.l.b16 %v1203
    %v4246 = vunpack.c.h.b16 %v1203
    %v4247 = vunpack.c.l.b16 %v1204
    %v4248 = vunpack.c.h.b16 %v1204
    %v4249 = vunpack.c.l.b16 %v1205
    %v4250 = vunpack.c.h.b16 %v1205
    %v4251 = vunpack.c.l.b16 %v1206
    %v4252 = vunpack.c.h.b16 %v1206
    %v4253 = vunpack.c.l.b16 %v1207
    %v4254 = vunpack.c.h.b16 %v1207
    %v4255 = vunpack.c.l.b16 %v1208
    %v4256 = vunpack.c.h.b16 %v1208
    %v4257 = vunpack.c.l.b16 %v1209
    %v4258 = vunpack.c.h.b16 %v1209
    %v4259 = vunpack.c.l.b16 %v1210
    %v4260 = vunpack.c.h.b16 %v1210
    %v4261 = vunpack.c.l.b16 %v1211
    %v4262 = vunpack.c.h.b16 %v1211
    %v4263 = vunpack.c.l.b16 %v1212
    %v4264 = vunpack.c.h.b16 %v1212
    %v4265 = vunpack.c.l.b16 %v1213
    %v4266 = vunpack.c.h.b16 %v1213
    %v4267 = vunpack.c.l.b16 %v1214
    %v4268 = vunpack.c.h.b16 %v1214
    %v4269 = vunpack.c.l.b16 %v1215
    %v4270 = vunpack.c.h.b16 %v1215
    %v4271 = vunpack.c.l.b16 %v1216
    %v4272 = vunpack.c.h.b16 %v1216
    %v4273 = vunpack.c.l.b16 %v1217
    %v4274 = vunpack.c.h.b16 %v1217
    %v4275 = vunpack.c.l.b16 %v1218
    %v4276 = vunpack.c.h.b16 %v1218
    %v4277 = vunpack.c.l.b16 %v1219
    %v4278 = vunpack.c.h.b16 %v1219
    %v4279 = vunpack.c.l.b16 %v1220
    %v4280 = vunpack.c.h.b16 %v1220
    %v4281 = vunpack.c.l.b16 %v1221
    %v4282 = vunpack.c.h.b16 %v1221
    %v4283 = vunpack.c.l.b16 %v1222
    %v4284 = vunpack.c.h.b16 %v1222
    %v4285 = vunpack.c.l.b16 %v1223
    %v4286 = vunpack.c.h.b16 %v1223
    %v4287 = vunpack.c.l.b16 %v1224
    %v4288 = vunpack.c.h.b16 %v1224
    %v4289 = vunpack.c.l.b16 %v1225
    %v4290 = vunpack.c.h.b16 %v1225
    %v4291 = vunpack.c.l.b16 %v1226
    %v4292 = vunpack.c.h.b16 %v1226
    %v4293 = vunpack.c.l.b16 %v1227
    %v4294 = vunpack.c.h.b16 %v1227
    %v4295 = vunpack.c.l.b16 %v1228
    %v4296 = vunpack.c.h.b16 %v1228
    %v4297 = vunpack.c.l.b16 %v1229
    %v4298 = vunpack.c.h.b16 %v1229
    %v4299 = vunpack.c.l.b16 %v1230
    %v4300 = vunpack.c.h.b16 %v1230
    %v4301 = vunpack.c.l.b16 %v1231
    %v4302 = vunpack.c.h.b16 %v1231
    %v4303 = vunpack.c.l.b16 %v1232
    %v4304 = vunpack.c.h.b16 %v1232
    %v4305 = vunpack.c.l.b16 %v1233
    %v4306 = vunpack.c.h.b16 %v1233
    %v4307 = vunpack.c.l.b16 %v1234
    %v4308 = vunpack.c.h.b16 %v1234
    %v4309 = vunpack.c.l.b16 %v1235
    %v4310 = vunpack.c.h.b16 %v1235
    %v4311 = vunpack.c.l.b16 %v1236
    %v4312 = vunpack.c.h.b16 %v1236
    %v4313 = vunpack.c.l.b16 %v1237
    %v4314 = vunpack.c.h.b16 %v1237
    %v4315 = vunpack.c.l.b16 %v1238
    %v4316 = vunpack.c.h.b16 %v1238
    %v4317 = vunpack.c.l.b16 %v1239
    %v4318 = vunpack.c.h.b16 %v1239
    %v4319 = vunpack.c.l.b16 %v1240
    %v4320 = vunpack.c.h.b16 %v1240
    %v4321 = vunpack.c.l.b16 %v1241
    %v4322 = vunpack.c.h.b16 %v1241
    %v4323 = vunpack.c.l.b16 %v1242
    %v4324 = vunpack.c.h.b16 %v1242
    %v4325 = vunpack.c.l.b16 %v1243
    %v4326 = vunpack.c.h.b16 %v1243
    %v4327 = vunpack.c.l.b16 %v1244
    %v4328 = vunpack.c.h.b16 %v1244
    %v4329 = vunpack.c.l.b16 %v1245
    %v4330 = vunpack.c.h.b16 %v1245
    %v4331 = vunpack.c.l.b16 %v1246
    %v4332 = vunpack.c.h.b16 %v1246
    %v4333 = vunpack.c.l.b16 %v1247
    %v4334 = vunpack.c.h.b16 %v1247
    %v4335 = vunpack.c.l.b16 %v1248
    %v4336 = vunpack.c.h.b16 %v1248
    %v4337 = vunpack.c.l.b16 %v1249
    %v4338 = vunpack.c.h.b16 %v1249
    %v4339 = vunpack.c.l.b16 %v1250
    %v4340 = vunpack.c.h.b16 %v1250
    %v4341 = vunpack.c.l.b16 %v1251
    %v4342 = vunpack.c.h.b16 %v1251
    %v4343 = vunpack.c.l.b16 %v1252
    %v4344 = vunpack.c.h.b16 %v1252
    %v4345 = vunpack.c.l.b16 %v1253
    %v4346 = vunpack.c.h.b16 %v1253
    %v4347 = vunpack.c.l.b16 %v1254
    %v4348 = vunpack.c.h.b16 %v1254
    %v4349 = vpack.c.b16 %v2305, %v2301
    %v4350 = vpack.c.b16 %v2306, %v2302
    %v4351 = vpack.c.b16 %v2307, %v2303
    %v4352 = vpack.c.b16 %v2308, %v2304
    %v4353 = vpack.c.b16 %v2313, %v2309
    %v4354 = vpack.c.b16 %v2314, %v2310
    %v4355 = vpack.c.b16 %v2315, %v2311
    %v4356 = vpack.c.b16 %v2316, %v2312
    %v4357 = vpack.c.b16 %v2321, %v2317
    %v4358 = vpack.c.b16 %v2322, %v2318
    %v4359 = vpack.c.b16 %v2323, %v2319
    %v4360 = vpack.c.b16 %v2324, %v2320
    %v4361 = vpack.c.b16 %v2329, %v2325
    %v4362 = vpack.c.b16 %v2330, %v2326
    %v4363 = vpack.c.b16 %v2331, %v2327
    %v4364 = vpack.c.b16 %v2332, %v2328
    %v4365 = vpack.c.b16 %v2337, %v2333
    %v4366 = vpack.c.b16 %v2338, %v2334
    %v4367 = vpack.c.b16 %v2339, %v2335
    %v4368 = vpack.c.b16 %v2340, %v2336
    %v4369 = vpack.c.b16 %v2345, %v2341
    %v4370 = vpack.c.b16 %v2346, %v2342
    %v4371 = vpack.c.b16 %v2347, %v2343
    %v4372 = vpack.c.b16 %v2348, %v2344
    %v4373 = vpack.c.b16 %v2353, %v2349
    %v4374 = vpack.c.b16 %v2354, %v2350
    %v4375 = vpack.c.b16 %v2355, %v2351
    %v4376 = vpack.c.b16 %v2356, %v2352
    %v4377 = vpack.c.b16 %v2361, %v2357
    %v4378 = vpack.c.b16 %v2362, %v2358
    %v4379 = vpack.c.b16 %v2363, %v2359
    %v4380 = vpack.c.b16 %v2364, %v2360
    %v4381 = vpack.c.b16 %v2369, %v2365
    %v4382 = vpack.c.b16 %v2370, %v2366
    %v4383 = vpack.c.b16 %v2371, %v2367
    %v4384 = vpack.c.b16 %v2372, %v2368
    %v4385 = vpack.c.b16 %v2377, %v2373
    %v4386 = vpack.c.b16 %v2378, %v2374
    %v4387 = vpack.c.b16 %v2379, %v2375
    %v4388 = vpack.c.b16 %v2380, %v2376
    %v4389 = vpack.c.b16 %v2385, %v2381
    %v4390 = vpack.c.b16 %v2386, %v2382
    %v4391 = vpack.c.b16 %v2387, %v2383
    %v4392 = vpack.c.b16 %v2388, %v2384
    %v4393 = vpack.c.b16 %v2393, %v2389
    %v4394 = vpack.c.b16 %v2394, %v2390
    %v4395 = vpack.c.b16 %v2395, %v2391
    %v4396 = vpack.c.b16 %v2396, %v2392
    %v4397 = vpack.c.b16 %v2401, %v2397
    %v4398 = vpack.c.b16 %v2402, %v2398
    %v4399 = vpack.c.b16 %v2403, %v2399
    %v4400 = vpack.c.b16 %v2404, %v2400
    %v4401 = vpack.c.b16 %v2409, %v2405
    %v4402 = vpack.c.b16 %v2410, %v2406
    %v4403 = vpack.c.b16 %v2411, %v2407
    %v4404 = vpack.c.b16 %v2412, %v2408
    %v4405 = vpack.c.b16 %v2417, %v2413
    %v4406 = vpack.c.b16 %v2418, %v2414
    %v4407 = vpack.c.b16 %v2419, %v2415
    %v4408 = vpack.c.b16 %v2420, %v2416
    %v4409 = vpack.c.b16 %v2425, %v2421
    %v4410 = vpack.c.b16 %v2426, %v2422
    %v4411 = vpack.c.b16 %v2427, %v2423
    %v4412 = vpack.c.b16 %v2428, %v2424
    %v4413 = vpack.c.b16 %v2433, %v2429
    %v4414 = vpack.c.b16 %v2434, %v2430
    %v4415 = vpack.c.b16 %v2435, %v2431
    %v4416 = vpack.c.b16 %v2436, %v2432
    %v4417 = vpack.c.b16 %v2441, %v2437
    %v4418 = vpack.c.b16 %v2442, %v2438
    %v4419 = vpack.c.b16 %v2443, %v2439
    %v4420 = vpack.c.b16 %v2444, %v2440
    %v4421 = vpack.c.b16 %v2449, %v2445
    %v4422 = vpack.c.b16 %v2450, %v2446
    %v4423 = vpack.c.b16 %v2451, %v2447
    %v4424 = vpack.c.b16 %v2452, %v2448
    %v4425 = vpack.c.b16 %v2457, %v2453
    %v4426 = vpack.c.b16 %v2458, %v2454
    %v4427 = vpack.c.b16 %v2459, %v2455
    %v4428 = vpack.c.b16 %v2460, %v2456
    %v4429 = vpack.c.b16 %v2465, %v2461
    %v4430 = vpack.c.b16 %v2466, %v2462
    %v4431 = vpack.c.b16 %v2467, %v2463
    %v4432 = vpack.c.b16 %v2468, %v2464
    %v4433 = vpack.c.b16 %v2473, %v2469
    %v4434 = vpack.c.b16 %v2474, %v2470
    %v4435 = vpack.c.b16 %v2475, %v2471
    %v4436 = vpack.c.b16 %v2476, %v2472
    %v4437 = vpack.c.b16 %v2481, %v2477
    %v4438 = vpack.c.b16 %v2482, %v2478
    %v4439 = vpack.c.b16 %v2483, %v2479
    %v4440 = vpack.c.b16 %v2484, %v2480
    %v4441 = vpack.c.b16 %v2489, %v2485
    %v4442 = vpack.c.b16 %v2490, %v2486
    %v4443 = vpack.c.b16 %v2491, %v2487
    %v4444 = vpack.c.b16 %v2492, %v2488
    %v4445 = vpack.c.b16 %v2497, %v2493
    %v4446 = vpack.c.b16 %v2498, %v2494
    %v4447 = vpack.c.b16 %v2499, %v2495
    %v4448 = vpack.c.b16 %v2500, %v2496
    %v4449 = vpack.c.b16 %v2505, %v2501
    %v4450 = vpack.c.b16 %v2506, %v2502
    %v4451 = vpack.c.b16 %v2507, %v2503
    %v4452 = vpack.c.b16 %v2508, %v2504
    %v4453 = vpack.c.b16 %v2513, %v2509
    %v4454 = vpack.c.b16 %v2514, %v2510
    %v4455 = vpack.c.b16 %v2515, %v2511
    %v4456 = vpack.c.b16 %v2516, %v2512
    %v4457 = vpack.c.b16 %v2521, %v2517
    %v4458 = vpack.c.b16 %v2522, %v2518
    %v4459 = vpack.c.b16 %v2523, %v2519
    %v4460 = vpack.c.b16 %v2524, %v2520
    %v4461 = vpack.c.b16 %v2529, %v2525
    %v4462 = vpack.c.b16 %v2530, %v2526
    %v4463 = vpack.c.b16 %v2531, %v2527
    %v4464 = vpack.c.b16 %v2532, %v2528
    %v4465 = vpack.c.b16 %v2537, %v2533
    %v4466 = vpack.c.b16 %v2538, %v2534
    %v4467 = vpack.c.b16 %v2539, %v2535
    %v4468 = vpack.c.b16 %v2540, %v2536
    %v4469 = vpack.c.b16 %v2545, %v2541
    %v4470 = vpack.c.b16 %v2546, %v2542
    %v4471 = vpack.c.b16 %v2547, %v2543
    %v4472 = vpack.c.b16 %v2548, %v2544
    %v4473 = vpack.c.b16 %v2553, %v2549
    %v4474 = vpack.c.b16 %v2554, %v2550
    %v4475 = vpack.c.b16 %v2555, %v2551
    %v4476 = vpack.c.b16 %v2556, %v2552
    %v4477 = vpack.c.b16 %v2561, %v2557
    %v4478 = vpack.c.b16 %v2562, %v2558
    %v4479 = vpack.c.b16 %v2563, %v2559
    %v4480 = vpack.c.b16 %v2564, %v2560
    %v4481 = vpack.c.b16 %v2569, %v2565
    %v4482 = vpack.c.b16 %v2570, %v2566
    %v4483 = vpack.c.b16 %v2571, %v2567
    %v4484 = vpack.c.b16 %v2572, %v2568
    %v4485 = vpack.c.b16 %v2577, %v2573
    %v4486 = vpack.c.b16 %v2578, %v2574
    %v4487 = vpack.c.b16 %v2579, %v2575
    %v4488 = vpack.c.b16 %v2580, %v2576
    %v4489 = vpack.c.b16 %v2585, %v2581
    %v4490 = vpack.c.b16 %v2586, %v2582
    %v4491 = vpack.c.b16 %v2587, %v2583
    %v4492 = vpack.c.b16 %v2588, %v2584
    %v4493 = vpack.c.b16 %v2593, %v2589
    %v4494 = vpack.c.b16 %v2594, %v2590
    %v4495 = vpack.c.b16 %v2595, %v2591
    %v4496 = vpack.c.b16 %v2596, %v2592
    %v4497 = vpack.c.b16 %v2601, %v2597
    %v4498 = vpack.c.b16 %v2602, %v2598
    %v4499 = vpack.c.b16 %v2603, %v2599
    %v4500 = vpack.c.b16 %v2604, %v2600
    %v4501 = vpack.c.b16 %v2609, %v2605
    %v4502 = vpack.c.b16 %v2610, %v2606
    %v4503 = vpack.c.b16 %v2611, %v2607
    %v4504 = vpack.c.b16 %v2612, %v2608
    %v4505 = vpack.c.b16 %v2617, %v2613
    %v4506 = vpack.c.b16 %v2618, %v2614
    %v4507 = vpack.c.b16 %v2619, %v2615
    %v4508 = vpack.c.b16 %v2620, %v2616
    %v4509 = vpack.c.b16 %v2625, %v2621
    %v4510 = vpack.c.b16 %v2626, %v2622
    %v4511 = vpack.c.b16 %v2627, %v2623
    %v4512 = vpack.c.b16 %v2628, %v2624
    %v4513 = vpack.c.b16 %v2633, %v2629
    %v4514 = vpack.c.b16 %v2634, %v2630
    %v4515 = vpack.c.b16 %v2635, %v2631
    %v4516 = vpack.c.b16 %v2636, %v2632
    %v4517 = vpack.c.b16 %v2641, %v2637
    %v4518 = vpack.c.b16 %v2642, %v2638
    %v4519 = vpack.c.b16 %v2643, %v2639
    %v4520 = vpack.c.b16 %v2644, %v2640
    %v4521 = vpack.c.b16 %v2649, %v2645
    %v4522 = vpack.c.b16 %v2650, %v2646
    %v4523 = vpack.c.b16 %v2651, %v2647
    %v4524 = vpack.c.b16 %v2652, %v2648
    %v4525 = vpack.c.b16 %v2657, %v2653
    %v4526 = vpack.c.b16 %v2658, %v2654
    %v4527 = vpack.c.b16 %v2659, %v2655
    %v4528 = vpack.c.b16 %v2660, %v2656
    %v4529 = vpack.c.b16 %v2665, %v2661
    %v4530 = vpack.c.b16 %v2666, %v2662
    %v4531 = vpack.c.b16 %v2667, %v2663
    %v4532 = vpack.c.b16 %v2668, %v2664
    %v4533 = vpack.c.b16 %v2673, %v2669
    %v4534 = vpack.c.b16 %v2674, %v2670
    %v4535 = vpack.c.b16 %v2675, %v2671
    %v4536 = vpack.c.b16 %v2676, %v2672
    %v4537 = vpack.c.b16 %v2681, %v2677
    %v4538 = vpack.c.b16 %v2682, %v2678
    %v4539 = vpack.c.b16 %v2683, %v2679
    %v4540 = vpack.c.b16 %v2684, %v2680
    %v4541 = vpack.c.b16 %v2689, %v2685
    %v4542 = vpack.c.b16 %v2690, %v2686
    %v4543 = vpack.c.b16 %v2691, %v2687
    %v4544 = vpack.c.b16 %v2692, %v2688
    %v4545 = vpack.c.b16 %v2697, %v2693
    %v4546 = vpack.c.b16 %v2698, %v2694
    %v4547 = vpack.c.b16 %v2699, %v2695
    %v4548 = vpack.c.b16 %v2700, %v2696
    %v4549 = vpack.c.b16 %v2705, %v2701
    %v4550 = vpack.c.b16 %v2706, %v2702
    %v4551 = vpack.c.b16 %v2707, %v2703
    %v4552 = vpack.c.b16 %v2708, %v2704
    %v4553 = vpack.c.b16 %v2713, %v2709
    %v4554 = vpack.c.b16 %v2714, %v2710
    %v4555 = vpack.c.b16 %v2715, %v2711
    %v4556 = vpack.c.b16 %v2716, %v2712
    %v4557 = vpack.c.b16 %v2721, %v2717
    %v4558 = vpack.c.b16 %v2722, %v2718
    %v4559 = vpack.c.b16 %v2723, %v2719
    %v4560 = vpack.c.b16 %v2724, %v2720
    %v4561 = vpack.c.b16 %v2729, %v2725
    %v4562 = vpack.c.b16 %v2730, %v2726
    %v4563 = vpack.c.b16 %v2731, %v2727
    %v4564 = vpack.c.b16 %v2732, %v2728
    %v4565 = vpack.c.b16 %v2737, %v2733
    %v4566 = vpack.c.b16 %v2738, %v2734
    %v4567 = vpack.c.b16 %v2739, %v2735
    %v4568 = vpack.c.b16 %v2740, %v2736
    %v4569 = vpack.c.b16 %v2745, %v2741
    %v4570 = vpack.c.b16 %v2746, %v2742
    %v4571 = vpack.c.b16 %v2747, %v2743
    %v4572 = vpack.c.b16 %v2748, %v2744
    %v4573 = vpack.c.b16 %v2753, %v2749
    %v4574 = vpack.c.b16 %v2754, %v2750
    %v4575 = vpack.c.b16 %v2755, %v2751
    %v4576 = vpack.c.b16 %v2756, %v2752
    %v4577 = vpack.c.b16 %v2761, %v2757
    %v4578 = vpack.c.b16 %v2762, %v2758
    %v4579 = vpack.c.b16 %v2763, %v2759
    %v4580 = vpack.c.b16 %v2764, %v2760
    %v4581 = vpack.c.b16 %v2769, %v2765
    %v4582 = vpack.c.b16 %v2770, %v2766
    %v4583 = vpack.c.b16 %v2771, %v2767
    %v4584 = vpack.c.b16 %v2772, %v2768
    %v4585 = vpack.c.b16 %v2777, %v2773
    %v4586 = vpack.c.b16 %v2778, %v2774
    %v4587 = vpack.c.b16 %v2779, %v2775
    %v4588 = vpack.c.b16 %v2780, %v2776
    %v4589 = vpack.c.b16 %v2785, %v2781
    %v4590 = vpack.c.b16 %v2786, %v2782
    %v4591 = vpack.c.b16 %v2787, %v2783
    %v4592 = vpack.c.b16 %v2788, %v2784
    %v4593 = vpack.c.b16 %v2793, %v2789
    %v4594 = vpack.c.b16 %v2794, %v2790
    %v4595 = vpack.c.b16 %v2795, %v2791
    %v4596 = vpack.c.b16 %v2796, %v2792
    %v4597 = vpack.c.b16 %v2801, %v2797
    %v4598 = vpack.c.b16 %v2802, %v2798
    %v4599 = vpack.c.b16 %v2803, %v2799
    %v4600 = vpack.c.b16 %v2804, %v2800
    %v4601 = vpack.c.b16 %v2809, %v2805
    %v4602 = vpack.c.b16 %v2810, %v2806
    %v4603 = vpack.c.b16 %v2811, %v2807
    %v4604 = vpack.c.b16 %v2812, %v2808
    %v4605 = vpack.c.b16 %v2817, %v2813
    %v4606 = vpack.c.b16 %v2818, %v2814
    %v4607 = vpack.c.b16 %v2819, %v2815
    %v4608 = vpack.c.b16 %v2820, %v2816
    %v4609 = vpack.c.b16 %v2825, %v2821
    %v4610 = vpack.c.b16 %v2826, %v2822
    %v4611 = vpack.c.b16 %v2827, %v2823
    %v4612 = vpack.c.b16 %v2828, %v2824
    %v4613 = vpack.c.b16 %v2833, %v2829
    %v4614 = vpack.c.b16 %v2834, %v2830
    %v4615 = vpack.c.b16 %v2835, %v2831
    %v4616 = vpack.c.b16 %v2836, %v2832
    %v4617 = vpack.c.b16 %v2841, %v2837
    %v4618 = vpack.c.b16 %v2842, %v2838
    %v4619 = vpack.c.b16 %v2843, %v2839
    %v4620 = vpack.c.b16 %v2844, %v2840
    %v4621 = vpack.c.b16 %v2849, %v2845
    %v4622 = vpack.c.b16 %v2850, %v2846
    %v4623 = vpack.c.b16 %v2851, %v2847
    %v4624 = vpack.c.b16 %v2852, %v2848
    %v4625 = vpack.c.b16 %v2857, %v2853
    %v4626 = vpack.c.b16 %v2858, %v2854
    %v4627 = vpack.c.b16 %v2859, %v2855
    %v4628 = vpack.c.b16 %v2860, %v2856
    %v4629 = vpack.c.b16 %v2865, %v2861
    %v4630 = vpack.c.b16 %v2866, %v2862
    %v4631 = vpack.c.b16 %v2867, %v2863
    %v4632 = vpack.c.b16 %v2868, %v2864
    %v4633 = vpack.c.b16 %v2873, %v2869
    %v4634 = vpack.c.b16 %v2874, %v2870
    %v4635 = vpack.c.b16 %v2875, %v2871
    %v4636 = vpack.c.b16 %v2876, %v2872
    %v4637 = vpack.c.b16 %v2881, %v2877
    %v4638 = vpack.c.b16 %v2882, %v2878
    %v4639 = vpack.c.b16 %v2883, %v2879
    %v4640 = vpack.c.b16 %v2884, %v2880
    %v4641 = vpack.c.b16 %v2889, %v2885
    %v4642 = vpack.c.b16 %v2890, %v2886
    %v4643 = vpack.c.b16 %v2891, %v2887
    %v4644 = vpack.c.b16 %v2892, %v2888
    %v4645 = vpack.c.b16 %v2897, %v2893
    %v4646 = vpack.c.b16 %v2898, %v2894
    %v4647 = vpack.c.b16 %v2899, %v2895
    %v4648 = vpack.c.b16 %v2900, %v2896
    %v4649 = vpack.c.b16 %v2905, %v2901
    %v4650 = vpack.c.b16 %v2906, %v2902
    %v4651 = vpack.c.b16 %v2907, %v2903
    %v4652 = vpack.c.b16 %v2908, %v2904
    %v4653 = vpack.c.b16 %v2913, %v2909
    %v4654 = vpack.c.b16 %v2914, %v2910
    %v4655 = vpack.c.b16 %v2915, %v2911
    %v4656 = vpack.c.b16 %v2916, %v2912
    %v4657 = vpack.c.b16 %v2921, %v2917
    %v4658 = vpack.c.b16 %v2922, %v2918
    %v4659 = vpack.c.b16 %v2923, %v2919
    %v4660 = vpack.c.b16 %v2924, %v2920
    %v4661 = vpack.c.b16 %v2929, %v2925
    %v4662 = vpack.c.b16 %v2930, %v2926
    %v4663 = vpack.c.b16 %v2931, %v2927
    %v4664 = vpack.c.b16 %v2932, %v2928
    %v4665 = vpack.c.b16 %v2937, %v2933
    %v4666 = vpack.c.b16 %v2938, %v2934
    %v4667 = vpack.c.b16 %v2939, %v2935
    %v4668 = vpack.c.b16 %v2940, %v2936
    %v4669 = vpack.c.b16 %v2945, %v2941
    %v4670 = vpack.c.b16 %v2946, %v2942
    %v4671 = vpack.c.b16 %v2947, %v2943
    %v4672 = vpack.c.b16 %v2948, %v2944
    %v4673 = vpack.c.b16 %v2953, %v2949
    %v4674 = vpack.c.b16 %v2954, %v2950
    %v4675 = vpack.c.b16 %v2955, %v2951
    %v4676 = vpack.c.b16 %v2956, %v2952
    %v4677 = vpack.c.b16 %v2961, %v2957
    %v4678 = vpack.c.b16 %v2962, %v2958
    %v4679 = vpack.c.b16 %v2963, %v2959
    %v4680 = vpack.c.b16 %v2964, %v2960
    %v4681 = vpack.c.b16 %v2969, %v2965
    %v4682 = vpack.c.b16 %v2970, %v2966
    %v4683 = vpack.c.b16 %v2971, %v2967
    %v4684 = vpack.c.b16 %v2972, %v2968
    %v4685 = vpack.c.b16 %v2977, %v2973
    %v4686 = vpack.c.b16 %v2978, %v2974
    %v4687 = vpack.c.b16 %v2979, %v2975
    %v4688 = vpack.c.b16 %v2980, %v2976
    %v4689 = vpack.c.b16 %v2985, %v2981
    %v4690 = vpack.c.b16 %v2986, %v2982
    %v4691 = vpack.c.b16 %v2987, %v2983
    %v4692 = vpack.c.b16 %v2988, %v2984
    %v4693 = vpack.c.b16 %v2993, %v2989
    %v4694 = vpack.c.b16 %v2994, %v2990
    %v4695 = vpack.c.b16 %v2995, %v2991
    %v4696 = vpack.c.b16 %v2996, %v2992
    %v4697 = vpack.c.b16 %v3001, %v2997
    %v4698 = vpack.c.b16 %v3002, %v2998
    %v4699 = vpack.c.b16 %v3003, %v2999
    %v4700 = vpack.c.b16 %v3004, %v3000
    %v4701 = vpack.c.b16 %v3009, %v3005
    %v4702 = vpack.c.b16 %v3010, %v3006
    %v4703 = vpack.c.b16 %v3011, %v3007
    %v4704 = vpack.c.b16 %v3012, %v3008
    %v4705 = vpack.c.b16 %v3017, %v3013
    %v4706 = vpack.c.b16 %v3018, %v3014
    %v4707 = vpack.c.b16 %v3019, %v3015
    %v4708 = vpack.c.b16 %v3020, %v3016
    %v4709 = vpack.c.b16 %v3025, %v3021
    %v4710 = vpack.c.b16 %v3026, %v3022
    %v4711 = vpack.c.b16 %v3027, %v3023
    %v4712 = vpack.c.b16 %v3028, %v3024
    %v4713 = vpack.c.b16 %v3033, %v3029
    %v4714 = vpack.c.b16 %v3034, %v3030
    %v4715 = vpack.c.b16 %v3035, %v3031
    %v4716 = vpack.c.b16 %v3036, %v3032
    %v4717 = vpack.c.b16 %v3041, %v3037
    %v4718 = vpack.c.b16 %v3042, %v3038
    %v4719 = vpack.c.b16 %v3043, %v3039
    %v4720 = vpack.c.b16 %v3044, %v3040
    %v4721 = vpack.c.b16 %v3049, %v3045
    %v4722 = vpack.c.b16 %v3050, %v3046
    %v4723 = vpack.c.b16 %v3051, %v3047
    %v4724 = vpack.c.b16 %v3052, %v3048
    %v4725 = vpack.c.b16 %v3057, %v3053
    %v4726 = vpack.c.b16 %v3058, %v3054
    %v4727 = vpack.c.b16 %v3059, %v3055
    %v4728 = vpack.c.b16 %v3060, %v3056
    %v4729 = vpack.c.b16 %v3065, %v3061
    %v4730 = vpack.c.b16 %v3066, %v3062
    %v4731 = vpack.c.b16 %v3067, %v3063
    %v4732 = vpack.c.b16 %v3068, %v3064
    %v4733 = vpack.c.b16 %v3073, %v3069
    %v4734 = vpack.c.b16 %v3074, %v3070
    %v4735 = vpack.c.b16 %v3075, %v3071
    %v4736 = vpack.c.b16 %v3076, %v3072
    %v4737 = vpack.c.b16 %v3081, %v3077
    %v4738 = vpack.c.b16 %v3082, %v3078
    %v4739 = vpack.c.b16 %v3083, %v3079
    %v4740 = vpack.c.b16 %v3084, %v3080
    %v4741 = vpack.c.b16 %v3089, %v3085
    %v4742 = vpack.c.b16 %v3090, %v3086
    %v4743 = vpack.c.b16 %v3091, %v3087
    %v4744 = vpack.c.b16 %v3092, %v3088
    %v4745 = vpack.c.b16 %v3097, %v3093
    %v4746 = vpack.c.b16 %v3098, %v3094
    %v4747 = vpack.c.b16 %v3099, %v3095
    %v4748 = vpack.c.b16 %v3100, %v3096
    %v4749 = vpack.c.b16 %v3105, %v3101
    %v4750 = vpack.c.b16 %v3106, %v3102
    %v4751 = vpack.c.b16 %v3107, %v3103
    %v4752 = vpack.c.b16 %v3108, %v3104
    %v4753 = vpack.c.b16 %v3113, %v3109
    %v4754 = vpack.c.b16 %v3114, %v3110
    %v4755 = vpack.c.b16 %v3115, %v3111
    %v4756 = vpack.c.b16 %v3116, %v3112
    %v4757 = vpack.c.b16 %v3121, %v3117
    %v4758 = vpack.c.b16 %v3122, %v3118
    %v4759 = vpack.c.b16 %v3123, %v3119
    %v4760 = vpack.c.b16 %v3124, %v3120
    %v4761 = vpack.c.b16 %v3129, %v3125
    %v4762 = vpack.c.b16 %v3130, %v3126
    %v4763 = vpack.c.b16 %v3131, %v3127
    %v4764 = vpack.c.b16 %v3132, %v3128
    %v4765 = vpack.c.b16 %v3137, %v3133
    %v4766 = vpack.c.b16 %v3138, %v3134
    %v4767 = vpack.c.b16 %v3139, %v3135
    %v4768 = vpack.c.b16 %v3140, %v3136
    %v4769 = vpack.c.b16 %v3145, %v3141
    %v4770 = vpack.c.b16 %v3146, %v3142
    %v4771 = vpack.c.b16 %v3147, %v3143
    %v4772 = vpack.c.b16 %v3148, %v3144
    %v4773 = vpack.c.b16 %v3153, %v3149
    %v4774 = vpack.c.b16 %v3154, %v3150
    %v4775 = vpack.c.b16 %v3155, %v3151
    %v4776 = vpack.c.b16 %v3156, %v3152
    %v4777 = vpack.c.b16 %v3161, %v3157
    %v4778 = vpack.c.b16 %v3162, %v3158
    %v4779 = vpack.c.b16 %v3163, %v3159
    %v4780 = vpack.c.b16 %v3164, %v3160
    %v4781 = vpack.c.b16 %v3169, %v3165
    %v4782 = vpack.c.b16 %v3170, %v3166
    %v4783 = vpack.c.b16 %v3171, %v3167
    %v4784 = vpack.c.b16 %v3172, %v3168
    %v4785 = vpack.c.b16 %v3177, %v3173
    %v4786 = vpack.c.b16 %v3178, %v3174
    %v4787 = vpack.c.b16 %v3179, %v3175
    %v4788 = vpack.c.b16 %v3180, %v3176
    %v4789 = vpack.c.b16 %v3185, %v3181
    %v4790 = vpack.c.b16 %v3186, %v3182
    %v4791 = vpack.c.b16 %v3187, %v3183
    %v4792 = vpack.c.b16 %v3188, %v3184
    %v4793 = vpack.c.b16 %v3193, %v3189
    %v4794 = vpack.c.b16 %v3194, %v3190
    %v4795 = vpack.c.b16 %v3195, %v3191
    %v4796 = vpack.c.b16 %v3196, %v3192
    %v4797 = vpack.c.b16 %v3201, %v3197
    %v4798 = vpack.c.b16 %v3202, %v3198
    %v4799 = vpack.c.b16 %v3203, %v3199
    %v4800 = vpack.c.b16 %v3204, %v3200
    %v4801 = vpack.c.b16 %v3209, %v3205
    %v4802 = vpack.c.b16 %v3210, %v3206
    %v4803 = vpack.c.b16 %v3211, %v3207
    %v4804 = vpack.c.b16 %v3212, %v3208
    %v4805 = vpack.c.b16 %v3217, %v3213
    %v4806 = vpack.c.b16 %v3218, %v3214
    %v4807 = vpack.c.b16 %v3219, %v3215
    %v4808 = vpack.c.b16 %v3220, %v3216
    %v4809 = vpack.c.b16 %v3225, %v3221
    %v4810 = vpack.c.b16 %v3226, %v3222
    %v4811 = vpack.c.b16 %v3227, %v3223
    %v4812 = vpack.c.b16 %v3228, %v3224
    %v4813 = vpack.c.b16 %v3233, %v3229
    %v4814 = vpack.c.b16 %v3234, %v3230
    %v4815 = vpack.c.b16 %v3235, %v3231
    %v4816 = vpack.c.b16 %v3236, %v3232
    %v4817 = vpack.c.b16 %v3241, %v3237
    %v4818 = vpack.c.b16 %v3242, %v3238
    %v4819 = vpack.c.b16 %v3243, %v3239
    %v4820 = vpack.c.b16 %v3244, %v3240
    %v4821 = vpack.c.b16 %v3249, %v3245
    %v4822 = vpack.c.b16 %v3250, %v3246
    %v4823 = vpack.c.b16 %v3251, %v3247
    %v4824 = vpack.c.b16 %v3252, %v3248
    %v4825 = vpack.c.b16 %v3257, %v3253
    %v4826 = vpack.c.b16 %v3258, %v3254
    %v4827 = vpack.c.b16 %v3259, %v3255
    %v4828 = vpack.c.b16 %v3260, %v3256
    %v4829 = vpack.c.b16 %v3265, %v3261
    %v4830 = vpack.c.b16 %v3266, %v3262
    %v4831 = vpack.c.b16 %v3267, %v3263
    %v4832 = vpack.c.b16 %v3268, %v3264
    %v4833 = vpack.c.b16 %v3273, %v3269
    %v4834 = vpack.c.b16 %v3274, %v3270
    %v4835 = vpack.c.b16 %v3275, %v3271
    %v4836 = vpack.c.b16 %v3276, %v3272
    %v4837 = vpack.c.b16 %v3281, %v3277
    %v4838 = vpack.c.b16 %v3282, %v3278
    %v4839 = vpack.c.b16 %v3283, %v3279
    %v4840 = vpack.c.b16 %v3284, %v3280
    %v4841 = vpack.c.b16 %v3289, %v3285
    %v4842 = vpack.c.b16 %v3290, %v3286
    %v4843 = vpack.c.b16 %v3291, %v3287
    %v4844 = vpack.c.b16 %v3292, %v3288
    %v4845 = vpack.c.b16 %v3297, %v3293
    %v4846 = vpack.c.b16 %v3298, %v3294
    %v4847 = vpack.c.b16 %v3299, %v3295
    %v4848 = vpack.c.b16 %v3300, %v3296
    %v4849 = vpack.c.b16 %v3305, %v3301
    %v4850 = vpack.c.b16 %v3306, %v3302
    %v4851 = vpack.c.b16 %v3307, %v3303
    %v4852 = vpack.c.b16 %v3308, %v3304
    %v4853 = vpack.c.b16 %v3313, %v3309
    %v4854 = vpack.c.b16 %v3314, %v3310
    %v4855 = vpack.c.b16 %v3315, %v3311
    %v4856 = vpack.c.b16 %v3316, %v3312
    %v4857 = vpack.c.b16 %v3321, %v3317
    %v4858 = vpack.c.b16 %v3322, %v3318
    %v4859 = vpack.c.b16 %v3323, %v3319
    %v4860 = vpack.c.b16 %v3324, %v3320
    %v4861 = vpack.c.b16 %v3329, %v3325
    %v4862 = vpack.c.b16 %v3330, %v3326
    %v4863 = vpack.c.b16 %v3331, %v3327
    %v4864 = vpack.c.b16 %v3332, %v3328
    %v4865 = vpack.c.b16 %v3337, %v3333
    %v4866 = vpack.c.b16 %v3338, %v3334
    %v4867 = vpack.c.b16 %v3339, %v3335
    %v4868 = vpack.c.b16 %v3340, %v3336
    %v4869 = vpack.c.b16 %v3345, %v3341
    %v4870 = vpack.c.b16 %v3346, %v3342
    %v4871 = vpack.c.b16 %v3347, %v3343
    %v4872 = vpack.c.b16 %v3348, %v3344
    %v4873 = vpack.c.b16 %v3353, %v3349
    %v4874 = vpack.c.b16 %v3354, %v3350
    %v4875 = vpack.c.b16 %v3355, %v3351
    %v4876 = vpack.c.b16 %v3356, %v3352
    %v4877 = vpack.c.b16 %v3361, %v3357
    %v4878 = vpack.c.b16 %v3362, %v3358
    %v4879 = vpack.c.b16 %v3363, %v3359
    %v4880 = vpack.c.b16 %v3364, %v3360
    %v4881 = vpack.c.b16 %v3369, %v3365
    %v4882 = vpack.c.b16 %v3370, %v3366
    %v4883 = vpack.c.b16 %v3371, %v3367
    %v4884 = vpack.c.b16 %v3372, %v3368
    %v4885 = vpack.c.b16 %v3377, %v3373
    %v4886 = vpack.c.b16 %v3378, %v3374
    %v4887 = vpack.c.b16 %v3379, %v3375
    %v4888 = vpack.c.b16 %v3380, %v3376
    %v4889 = vpack.c.b16 %v3385, %v3381
    %v4890 = vpack.c.b16 %v3386, %v3382
    %v4891 = vpack.c.b16 %v3387, %v3383
    %v4892 = vpack.c.b16 %v3388, %v3384
    %v4893 = vpack.c.b16 %v3393, %v3389
    %v4894 = vpack.c.b16 %v3394, %v3390
    %v4895 = vpack.c.b16 %v3395, %v3391
    %v4896 = vpack.c.b16 %v3396, %v3392
    %v4897 = vpack.c.b16 %v3401, %v3397
    %v4898 = vpack.c.b16 %v3402, %v3398
    %v4899 = vpack.c.b16 %v3403, %v3399
    %v4900 = vpack.c.b16 %v3404, %v3400
    %v4901 = vpack.c.b16 %v3409, %v3405
    %v4902 = vpack.c.b16 %v3410, %v3406
    %v4903 = vpack.c.b16 %v3411, %v3407
    %v4904 = vpack.c.b16 %v3412, %v3408
    %v4905 = vpack.c.b16 %v3417, %v3413
    %v4906 = vpack.c.b16 %v3418, %v3414
    %v4907 = vpack.c.b16 %v3419, %v3415
    %v4908 = vpack.c.b16 %v3420, %v3416
    %v4909 = vpack.c.b16 %v3425, %v3421
    %v4910 = vpack.c.b16 %v3426, %v3422
    %v4911 = vpack.c.b16 %v3427, %v3423
    %v4912 = vpack.c.b16 %v3428, %v3424
    %v4913 = vpack.c.b16 %v3433, %v3429
    %v4914 = vpack.c.b16 %v3434, %v3430
    %v4915 = vpack.c.b16 %v3435, %v3431
    %v4916 = vpack.c.b16 %v3436, %v3432
    %v4917 = vpack.c.b16 %v3441, %v3437
    %v4918 = vpack.c.b16 %v3442, %v3438
    %v4919 = vpack.c.b16 %v3443, %v3439
    %v4920 = vpack.c.b16 %v3444, %v3440
    %v4921 = vpack.c.b16 %v3449, %v3445
    %v4922 = vpack.c.b16 %v3450, %v3446
    %v4923 = vpack.c.b16 %v3451, %v3447
    %v4924 = vpack.c.b16 %v3452, %v3448
    %v4925 = vpack.c.b16 %v3457, %v3453
    %v4926 = vpack.c.b16 %v3458, %v3454
    %v4927 = vpack.c.b16 %v3459, %v3455
    %v4928 = vpack.c.b16 %v3460, %v3456
    %v4929 = vpack.c.b16 %v3465, %v3461
    %v4930 = vpack.c.b16 %v3466, %v3462
    %v4931 = vpack.c.b16 %v3467, %v3463
    %v4932 = vpack.c.b16 %v3468, %v3464
    %v4933 = vpack.c.b16 %v3473, %v3469
    %v4934 = vpack.c.b16 %v3474, %v3470
    %v4935 = vpack.c.b16 %v3475, %v3471
    %v4936 = vpack.c.b16 %v3476, %v3472
    %v4937 = vpack.c.b16 %v3481, %v3477
    %v4938 = vpack.c.b16 %v3482, %v3478
    %v4939 = vpack.c.b16 %v3483, %v3479
    %v4940 = vpack.c.b16 %v3484, %v3480
    %v4941 = vpack.c.b16 %v3489, %v3485
    %v4942 = vpack.c.b16 %v3490, %v3486
    %v4943 = vpack.c.b16 %v3491, %v3487
    %v4944 = vpack.c.b16 %v3492, %v3488
    %v4945 = vpack.c.b16 %v3497, %v3493
    %v4946 = vpack.c.b16 %v3498, %v3494
    %v4947 = vpack.c.b16 %v3499, %v3495
    %v4948 = vpack.c.b16 %v3500, %v3496
    %v4949 = vpack.c.b16 %v3505, %v3501
    %v4950 = vpack.c.b16 %v3506, %v3502
    %v4951 = vpack.c.b16 %v3507, %v3503
    %v4952 = vpack.c.b16 %v3508, %v3504
    %v4953 = vpack.c.b16 %v3513, %v3509
    %v4954 = vpack.c.b16 %v3514, %v3510
    %v4955 = vpack.c.b16 %v3515, %v3511
    %v4956 = vpack.c.b16 %v3516, %v3512
    %v4957 = vpack.c.b16 %v3521, %v3517
    %v4958 = vpack.c.b16 %v3522, %v3518
    %v4959 = vpack.c.b16 %v3523, %v3519
    %v4960 = vpack.c.b16 %v3524, %v3520
    %v4961 = vpack.c.b16 %v3529, %v3525
    %v4962 = vpack.c.b16 %v3530, %v3526
    %v4963 = vpack.c.b16 %v3531, %v3527
    %v4964 = vpack.c.b16 %v3532, %v3528
    %v4965 = vpack.c.b16 %v3537, %v3533
    %v4966 = vpack.c.b16 %v3538, %v3534
    %v4967 = vpack.c.b16 %v3539, %v3535
    %v4968 = vpack.c.b16 %v3540, %v3536
    %v4969 = vpack.c.b16 %v3545, %v3541
    %v4970 = vpack.c.b16 %v3546, %v3542
    %v4971 = vpack.c.b16 %v3547, %v3543
    %v4972 = vpack.c.b16 %v3548, %v3544
    %v4973 = vpack.c.b16 %v3553, %v3549
    %v4974 = vpack.c.b16 %v3554, %v3550
    %v4975 = vpack.c.b16 %v3555, %v3551
    %v4976 = vpack.c.b16 %v3556, %v3552
    %v4977 = vpack.c.b16 %v3561, %v3557
    %v4978 = vpack.c.b16 %v3562, %v3558
    %v4979 = vpack.c.b16 %v3563, %v3559
    %v4980 = vpack.c.b16 %v3564, %v3560
    %v4981 = vpack.c.b16 %v3569, %v3565
    %v4982 = vpack.c.b16 %v3570, %v3566
    %v4983 = vpack.c.b16 %v3571, %v3567
    %v4984 = vpack.c.b16 %v3572, %v3568
    %v4985 = vpack.c.b16 %v3577, %v3573
    %v4986 = vpack.c.b16 %v3578, %v3574
    %v4987 = vpack.c.b16 %v3579, %v3575
    %v4988 = vpack.c.b16 %v3580, %v3576
    %v4989 = vpack.c.b16 %v3585, %v3581
    %v4990 = vpack.c.b16 %v3586, %v3582
    %v4991 = vpack.c.b16 %v3587, %v3583
    %v4992 = vpack.c.b16 %v3588, %v3584
    %v4993 = vpack.c.b16 %v3593, %v3589
    %v4994 = vpack.c.b16 %v3594, %v3590
    %v4995 = vpack.c.b16 %v3595, %v3591
    %v4996 = vpack.c.b16 %v3596, %v3592
    %v4997 = vpack.c.b16 %v3601, %v3597
    %v4998 = vpack.c.b16 %v3602, %v3598
    %v4999 = vpack.c.b16 %v3603, %v3599
    %v5000 = vpack.c.b16 %v3604, %v3600
    %v5001 = vpack.c.b16 %v3609, %v3605
    %v5002 = vpack.c.b16 %v3610, %v3606
    %v5003 = vpack.c.b16 %v3611, %v3607
    %v5004 = vpack.c.b16 %v3612, %v3608
    %v5005 = vpack.c.b16 %v3617, %v3613
    %v5006 = vpack.c.b16 %v3618, %v3614
    %v5007 = vpack.c.b16 %v3619, %v3615
    %v5008 = vpack.c.b16 %v3620, %v3616
    %v5009 = vpack.c.b16 %v3625, %v3621
    %v5010 = vpack.c.b16 %v3626, %v3622
    %v5011 = vpack.c.b16 %v3627, %v3623
    %v5012 = vpack.c.b16 %v3628, %v3624
    %v5013 = vpack.c.b16 %v3633, %v3629
    %v5014 = vpack.c.b16 %v3634, %v3630
    %v5015 = vpack.c.b16 %v3635, %v3631
    %v5016 = vpack.c.b16 %v3636, %v3632
    %v5017 = vpack.c.b16 %v3641, %v3637
    %v5018 = vpack.c.b16 %v3642, %v3638
    %v5019 = vpack.c.b16 %v3643, %v3639
    %v5020 = vpack.c.b16 %v3644, %v3640
    %v5021 = vpack.c.b16 %v3649, %v3645
    %v5022 = vpack.c.b16 %v3650, %v3646
    %v5023 = vpack.c.b16 %v3651, %v3647
    %v5024 = vpack.c.b16 %v3652, %v3648
    %v5025 = vpack.c.b16 %v3657, %v3653
    %v5026 = vpack.c.b16 %v3658, %v3654
    %v5027 = vpack.c.b16 %v3659, %v3655
    %v5028 = vpack.c.b16 %v3660, %v3656
    %v5029 = vpack.c.b16 %v3665, %v3661
    %v5030 = vpack.c.b16 %v3666, %v3662
    %v5031 = vpack.c.b16 %v3667, %v3663
    %v5032 = vpack.c.b16 %v3668, %v3664
    %v5033 = vpack.c.b16 %v3673, %v3669
    %v5034 = vpack.c.b16 %v3674, %v3670
    %v5035 = vpack.c.b16 %v3675, %v3671
    %v5036 = vpack.c.b16 %v3676, %v3672
    %v5037 = vpack.c.b16 %v3681, %v3677
    %v5038 = vpack.c.b16 %v3682, %v3678
    %v5039 = vpack.c.b16 %v3683, %v3679
    %v5040 = vpack.c.b16 %v3684, %v3680
    %v5041 = vpack.c.b16 %v3689, %v3685
    %v5042 = vpack.c.b16 %v3690, %v3686
    %v5043 = vpack.c.b16 %v3691, %v3687
    %v5044 = vpack.c.b16 %v3692, %v3688
    %v5045 = vpack.c.b16 %v3697, %v3693
    %v5046 = vpack.c.b16 %v3698, %v3694
    %v5047 = vpack.c.b16 %v3699, %v3695
    %v5048 = vpack.c.b16 %v3700, %v3696
    %v5049 = vpack.c.b16 %v3705, %v3701
    %v5050 = vpack.c.b16 %v3706, %v3702
    %v5051 = vpack.c.b16 %v3707, %v3703
    %v5052 = vpack.c.b16 %v3708, %v3704
    %v5053 = vpack.c.b16 %v3713, %v3709
    %v5054 = vpack.c.b16 %v3714, %v3710
    %v5055 = vpack.c.b16 %v3715, %v3711
    %v5056 = vpack.c.b16 %v3716, %v3712
    %v5057 = vpack.c.b16 %v3721, %v3717
    %v5058 = vpack.c.b16 %v3722, %v3718
    %v5059 = vpack.c.b16 %v3723, %v3719
    %v5060 = vpack.c.b16 %v3724, %v3720
    %v5061 = vpack.c.b16 %v3729, %v3725
    %v5062 = vpack.c.b16 %v3730, %v3726
    %v5063 = vpack.c.b16 %v3731, %v3727
    %v5064 = vpack.c.b16 %v3732, %v3728
    %v5065 = vpack.c.b16 %v3737, %v3733
    %v5066 = vpack.c.b16 %v3738, %v3734
    %v5067 = vpack.c.b16 %v3739, %v3735
    %v5068 = vpack.c.b16 %v3740, %v3736
    %v5069 = vpack.c.b16 %v3745, %v3741
    %v5070 = vpack.c.b16 %v3746, %v3742
    %v5071 = vpack.c.b16 %v3747, %v3743
    %v5072 = vpack.c.b16 %v3748, %v3744
    %v5073 = vpack.c.b16 %v3753, %v3749
    %v5074 = vpack.c.b16 %v3754, %v3750
    %v5075 = vpack.c.b16 %v3755, %v3751
    %v5076 = vpack.c.b16 %v3756, %v3752
    %v5077 = vpack.c.b16 %v3761, %v3757
    %v5078 = vpack.c.b16 %v3762, %v3758
    %v5079 = vpack.c.b16 %v3763, %v3759
    %v5080 = vpack.c.b16 %v3764, %v3760
    %v5081 = vpack.c.b16 %v3769, %v3765
    %v5082 = vpack.c.b16 %v3770, %v3766
    %v5083 = vpack.c.b16 %v3771, %v3767
    %v5084 = vpack.c.b16 %v3772, %v3768
    %v5085 = vpack.c.b16 %v3777, %v3773
    %v5086 = vpack.c.b16 %v3778, %v3774
    %v5087 = vpack.c.b16 %v3779, %v3775
    %v5088 = vpack.c.b16 %v3780, %v3776
    %v5089 = vpack.c.b16 %v3785, %v3781
    %v5090 = vpack.c.b16 %v3786, %v3782
    %v5091 = vpack.c.b16 %v3787, %v3783
    %v5092 = vpack.c.b16 %v3788, %v3784
    %v5093 = vpack.c.b16 %v3793, %v3789
    %v5094 = vpack.c.b16 %v3794, %v3790
    %v5095 = vpack.c.b16 %v3795, %v3791
    %v5096 = vpack.c.b16 %v3796, %v3792
    %v5097 = vpack.c.b16 %v3801, %v3797
    %v5098 = vpack.c.b16 %v3802, %v3798
    %v5099 = vpack.c.b16 %v3803, %v3799
    %v5100 = vpack.c.b16 %v3804, %v3800
    %v5101 = vpack.c.b16 %v3809, %v3805
    %v5102 = vpack.c.b16 %v3810, %v3806
    %v5103 = vpack.c.b16 %v3811, %v3807
    %v5104 = vpack.c.b16 %v3812, %v3808
    %v5105 = vpack.c.b16 %v3817, %v3813
    %v5106 = vpack.c.b16 %v3818, %v3814
    %v5107 = vpack.c.b16 %v3819, %v3815
    %v5108 = vpack.c.b16 %v3820, %v3816
    %v5109 = vpack.c.b16 %v3825, %v3821
    %v5110 = vpack.c.b16 %v3826, %v3822
    %v5111 = vpack.c.b16 %v3827, %v3823
    %v5112 = vpack.c.b16 %v3828, %v3824
    %v5113 = vpack.c.b16 %v3833, %v3829
    %v5114 = vpack.c.b16 %v3834, %v3830
    %v5115 = vpack.c.b16 %v3835, %v3831
    %v5116 = vpack.c.b16 %v3836, %v3832
    %v5117 = vpack.c.b16 %v3841, %v3837
    %v5118 = vpack.c.b16 %v3842, %v3838
    %v5119 = vpack.c.b16 %v3843, %v3839
    %v5120 = vpack.c.b16 %v3844, %v3840
    %v5121 = vpack.c.b16 %v3849, %v3845
    %v5122 = vpack.c.b16 %v3850, %v3846
    %v5123 = vpack.c.b16 %v3851, %v3847
    %v5124 = vpack.c.b16 %v3852, %v3848
    %v5125 = vpack.c.b16 %v3857, %v3853
    %v5126 = vpack.c.b16 %v3858, %v3854
    %v5127 = vpack.c.b16 %v3859, %v3855
    %v5128 = vpack.c.b16 %v3860, %v3856
    %v5129 = vpack.c.b16 %v3865, %v3861
    %v5130 = vpack.c.b16 %v3866, %v3862
    %v5131 = vpack.c.b16 %v3867, %v3863
    %v5132 = vpack.c.b16 %v3868, %v3864
    %v5133 = vpack.c.b16 %v3873, %v3869
    %v5134 = vpack.c.b16 %v3874, %v3870
    %v5135 = vpack.c.b16 %v3875, %v3871
    %v5136 = vpack.c.b16 %v3876, %v3872
    %v5137 = vpack.c.b16 %v3881, %v3877
    %v5138 = vpack.c.b16 %v3882, %v3878
    %v5139 = vpack.c.b16 %v3883, %v3879
    %v5140 = vpack.c.b16 %v3884, %v3880
    %v5141 = vpack.c.b16 %v3889, %v3885
    %v5142 = vpack.c.b16 %v3890, %v3886
    %v5143 = vpack.c.b16 %v3891, %v3887
    %v5144 = vpack.c.b16 %v3892, %v3888
    %v5145 = vpack.c.b16 %v3897, %v3893
    %v5146 = vpack.c.b16 %v3898, %v3894
    %v5147 = vpack.c.b16 %v3899, %v3895
    %v5148 = vpack.c.b16 %v3900, %v3896
    %v5149 = vpack.c.b16 %v3905, %v3901
    %v5150 = vpack.c.b16 %v3906, %v3902
    %v5151 = vpack.c.b16 %v3907, %v3903
    %v5152 = vpack.c.b16 %v3908, %v3904
    %v5153 = vpack.c.b16 %v3913, %v3909
    %v5154 = vpack.c.b16 %v3914, %v3910
    %v5155 = vpack.c.b16 %v3915, %v3911
    %v5156 = vpack.c.b16 %v3916, %v3912
    %v5157 = vpack.c.b16 %v3921, %v3917
    %v5158 = vpack.c.b16 %v3922, %v3918
    %v5159 = vpack.c.b16 %v3923, %v3919
    %v5160 = vpack.c.b16 %v3924, %v3920
    %v5161 = vpack.c.b16 %v3929, %v3925
    %v5162 = vpack.c.b16 %v3930, %v3926
    %v5163 = vpack.c.b16 %v3931, %v3927
    %v5164 = vpack.c.b16 %v3932, %v3928
    %v5165 = vpack.c.b16 %v3937, %v3933
    %v5166 = vpack.c.b16 %v3938, %v3934
    %v5167 = vpack.c.b16 %v3939, %v3935
    %v5168 = vpack.c.b16 %v3940, %v3936
    %v5169 = vpack.c.b16 %v3945, %v3941
    %v5170 = vpack.c.b16 %v3946, %v3942
    %v5171 = vpack.c.b16 %v3947, %v3943
    %v5172 = vpack.c.b16 %v3948, %v3944
    %v5173 = vpack.c.b16 %v3953, %v3949
    %v5174 = vpack.c.b16 %v3954, %v3950
    %v5175 = vpack.c.b16 %v3955, %v3951
    %v5176 = vpack.c.b16 %v3956, %v3952
    %v5177 = vpack.c.b16 %v3961, %v3957
    %v5178 = vpack.c.b16 %v3962, %v3958
    %v5179 = vpack.c.b16 %v3963, %v3959
    %v5180 = vpack.c.b16 %v3964, %v3960
    %v5181 = vpack.c.b16 %v3969, %v3965
    %v5182 = vpack.c.b16 %v3970, %v3966
    %v5183 = vpack.c.b16 %v3971, %v3967
    %v5184 = vpack.c.b16 %v3972, %v3968
    %v5185 = vpack.c.b16 %v3977, %v3973
    %v5186 = vpack.c.b16 %v3978, %v3974
    %v5187 = vpack.c.b16 %v3979, %v3975
    %v5188 = vpack.c.b16 %v3980, %v3976
    %v5189 = vpack.c.b16 %v3985, %v3981
    %v5190 = vpack.c.b16 %v3986, %v3982
    %v5191 = vpack.c.b16 %v3987, %v3983
    %v5192 = vpack.c.b16 %v3988, %v3984
    %v5193 = vpack.c.b16 %v3993, %v3989
    %v5194 = vpack.c.b16 %v3994, %v3990
    %v5195 = vpack.c.b16 %v3995, %v3991
    %v5196 = vpack.c.b16 %v3996, %v3992
    %v5197 = vpack.c.b16 %v4001, %v3997
    %v5198 = vpack.c.b16 %v4002, %v3998
    %v5199 = vpack.c.b16 %v4003, %v3999
    %v5200 = vpack.c.b16 %v4004, %v4000
    %v5201 = vpack.c.b16 %v4009, %v4005
    %v5202 = vpack.c.b16 %v4010, %v4006
    %v5203 = vpack.c.b16 %v4011, %v4007
    %v5204 = vpack.c.b16 %v4012, %v4008
    %v5205 = vpack.c.b16 %v4017, %v4013
    %v5206 = vpack.c.b16 %v4018, %v4014
    %v5207 = vpack.c.b16 %v4019, %v4015
    %v5208 = vpack.c.b16 %v4020, %v4016
    %v5209 = vpack.c.b16 %v4025, %v4021
    %v5210 = vpack.c.b16 %v4026, %v4022
    %v5211 = vpack.c.b16 %v4027, %v4023
    %v5212 = vpack.c.b16 %v4028, %v4024
    %v5213 = vpack.c.b16 %v4033, %v4029
    %v5214 = vpack.c.b16 %v4034, %v4030
    %v5215 = vpack.c.b16 %v4035, %v4031
    %v5216 = vpack.c.b16 %v4036, %v4032
    %v5217 = vpack.c.b16 %v4041, %v4037
    %v5218 = vpack.c.b16 %v4042, %v4038
    %v5219 = vpack.c.b16 %v4043, %v4039
    %v5220 = vpack.c.b16 %v4044, %v4040
    %v5221 = vpack.c.b16 %v4049, %v4045
    %v5222 = vpack.c.b16 %v4050, %v4046
    %v5223 = vpack.c.b16 %v4051, %v4047
    %v5224 = vpack.c.b16 %v4052, %v4048
    %v5225 = vpack.c.b16 %v4057, %v4053
    %v5226 = vpack.c.b16 %v4058, %v4054
    %v5227 = vpack.c.b16 %v4059, %v4055
    %v5228 = vpack.c.b16 %v4060, %v4056
    %v5229 = vpack.c.b16 %v4065, %v4061
    %v5230 = vpack.c.b16 %v4066, %v4062
    %v5231 = vpack.c.b16 %v4067, %v4063
    %v5232 = vpack.c.b16 %v4068, %v4064
    %v5233 = vpack.c.b16 %v4073, %v4069
    %v5234 = vpack.c.b16 %v4074, %v4070
    %v5235 = vpack.c.b16 %v4075, %v4071
    %v5236 = vpack.c.b16 %v4076, %v4072
    %v5237 = vpack.c.b16 %v4081, %v4077
    %v5238 = vpack.c.b16 %v4082, %v4078
    %v5239 = vpack.c.b16 %v4083, %v4079
    %v5240 = vpack.c.b16 %v4084, %v4080
    %v5241 = vpack.c.b16 %v4089, %v4085
    %v5242 = vpack.c.b16 %v4090, %v4086
    %v5243 = vpack.c.b16 %v4091, %v4087
    %v5244 = vpack.c.b16 %v4092, %v4088
    %v5245 = vpack.c.b16 %v4097, %v4093
    %v5246 = vpack.c.b16 %v4098, %v4094
    %v5247 = vpack.c.b16 %v4099, %v4095
    %v5248 = vpack.c.b16 %v4100, %v4096
    %v5249 = vpack.c.b16 %v4105, %v4101
    %v5250 = vpack.c.b16 %v4106, %v4102
    %v5251 = vpack.c.b16 %v4107, %v4103
    %v5252 = vpack.c.b16 %v4108, %v4104
    %v5253 = vpack.c.b16 %v4113, %v4109
    %v5254 = vpack.c.b16 %v4114, %v4110
    %v5255 = vpack.c.b16 %v4115, %v4111
    %v5256 = vpack.c.b16 %v4116, %v4112
    %v5257 = vpack.c.b16 %v4121, %v4117
    %v5258 = vpack.c.b16 %v4122, %v4118
    %v5259 = vpack.c.b16 %v4123, %v4119
    %v5260 = vpack.c.b16 %v4124, %v4120
    %v5261 = vpack.c.b16 %v4129, %v4125
    %v5262 = vpack.c.b16 %v4130, %v4126
    %v5263 = vpack.c.b16 %v4131, %v4127
    %v5264 = vpack.c.b16 %v4132, %v4128
    %v5265 = vpack.c.b16 %v4137, %v4133
    %v5266 = vpack.c.b16 %v4138, %v4134
    %v5267 = vpack.c.b16 %v4139, %v4135
    %v5268 = vpack.c.b16 %v4140, %v4136
    %v5269 = vpack.c.b16 %v4145, %v4141
    %v5270 = vpack.c.b16 %v4146, %v4142
    %v5271 = vpack.c.b16 %v4147, %v4143
    %v5272 = vpack.c.b16 %v4148, %v4144
    %v5273 = vpack.c.b16 %v4153, %v4149
    %v5274 = vpack.c.b16 %v4154, %v4150
    %v5275 = vpack.c.b16 %v4155, %v4151
    %v5276 = vpack.c.b16 %v4156, %v4152
    %v5277 = vpack.c.b16 %v4161, %v4157
    %v5278 = vpack.c.b16 %v4162, %v4158
    %v5279 = vpack.c.b16 %v4163, %v4159
    %v5280 = vpack.c.b16 %v4164, %v4160
    %v5281 = vpack.c.b16 %v4169, %v4165
    %v5282 = vpack.c.b16 %v4170, %v4166
    %v5283 = vpack.c.b16 %v4171, %v4167
    %v5284 = vpack.c.b16 %v4172, %v4168
    %v5285 = vpack.c.b16 %v4177, %v4173
    %v5286 = vpack.c.b16 %v4178, %v4174
    %v5287 = vpack.c.b16 %v4179, %v4175
    %v5288 = vpack.c.b16 %v4180, %v4176
    %v5289 = vpack.c.b16 %v4185, %v4181
    %v5290 = vpack.c.b16 %v4186, %v4182
    %v5291 = vpack.c.b16 %v4187, %v4183
    %v5292 = vpack.c.b16 %v4188, %v4184
    %v5293 = vpack.c.b16 %v4193, %v4189
    %v5294 = vpack.c.b16 %v4194, %v4190
    %v5295 = vpack.c.b16 %v4195, %v4191
    %v5296 = vpack.c.b16 %v4196, %v4192
    %v5297 = vpack.c.b16 %v4201, %v4197
    %v5298 = vpack.c.b16 %v4202, %v4198
    %v5299 = vpack.c.b16 %v4203, %v4199
    %v5300 = vpack.c.b16 %v4204, %v4200
    %v5301 = vpack.c.b16 %v4209, %v4205
    %v5302 = vpack.c.b16 %v4210, %v4206
    %v5303 = vpack.c.b16 %v4211, %v4207
    %v5304 = vpack.c.b16 %v4212, %v4208
    %v5305 = vpack.c.b16 %v4217, %v4213
    %v5306 = vpack.c.b16 %v4218, %v4214
    %v5307 = vpack.c.b16 %v4219, %v4215
    %v5308 = vpack.c.b16 %v4220, %v4216
    %v5309 = vpack.c.b16 %v4225, %v4221
    %v5310 = vpack.c.b16 %v4226, %v4222
    %v5311 = vpack.c.b16 %v4227, %v4223
    %v5312 = vpack.c.b16 %v4228, %v4224
    %v5313 = vpack.c.b16 %v4233, %v4229
    %v5314 = vpack.c.b16 %v4234, %v4230
    %v5315 = vpack.c.b16 %v4235, %v4231
    %v5316 = vpack.c.b16 %v4236, %v4232
    %v5317 = vpack.c.b16 %v4241, %v4237
    %v5318 = vpack.c.b16 %v4242, %v4238
    %v5319 = vpack.c.b16 %v4243, %v4239
    %v5320 = vpack.c.b16 %v4244, %v4240
    %v5321 = vpack.c.b16 %v4249, %v4245
    %v5322 = vpack.c.b16 %v4250, %v4246
    %v5323 = vpack.c.b16 %v4251, %v4247
    %v5324 = vpack.c.b16 %v4252, %v4248
    %v5325 = vpack.c.b16 %v4257, %v4253
    %v5326 = vpack.c.b16 %v4258, %v4254
    %v5327 = vpack.c.b16 %v4259, %v4255
    %v5328 = vpack.c.b16 %v4260, %v4256
    %v5329 = vpack.c.b16 %v4265, %v4261
    %v5330 = vpack.c.b16 %v4266, %v4262
    %v5331 = vpack.c.b16 %v4267, %v4263
    %v5332 = vpack.c.b16 %v4268, %v4264
    %v5333 = vpack.c.b16 %v4273, %v4269
    %v5334 = vpack.c.b16 %v4274, %v4270
    %v5335 = vpack.c.b16 %v4275, %v4271
    %v5336 = vpack.c.b16 %v4276, %v4272
    %v5337 = vpack.c.b16 %v4281, %v4277
    %v5338 = vpack.c.b16 %v4282, %v4278
    %v5339 = vpack.c.b16 %v4283, %v4279
    %v5340 = vpack.c.b16 %v4284, %v4280
    %v5341 = vpack.c.b16 %v4289, %v4285
    %v5342 = vpack.c.b16 %v4290, %v4286
    %v5343 = vpack.c.b16 %v4291, %v4287
    %v5344 = vpack.c.b16 %v4292, %v4288
    %v5345 = vpack.c.b16 %v4297, %v4293
    %v5346 = vpack.c.b16 %v4298, %v4294
    %v5347 = vpack.c.b16 %v4299, %v4295
    %v5348 = vpack.c.b16 %v4300, %v4296
    %v5349 = vpack.c.b16 %v4305, %v4301
    %v5350 = vpack.c.b16 %v4306, %v4302
    %v5351 = vpack.c.b16 %v4307, %v4303
    %v5352 = vpack.c.b16 %v4308, %v4304
    %v5353 = vpack.c.b16 %v4313, %v4309
    %v5354 = vpack.c.b16 %v4314, %v4310
    %v5355 = vpack.c.b16 %v4315, %v4311
    %v5356 = vpack.c.b16 %v4316, %v4312
    %v5357 = vpack.c.b16 %v4321, %v4317
    %v5358 = vpack.c.b16 %v4322, %v4318
    %v5359 = vpack.c.b16 %v4323, %v4319
    %v5360 = vpack.c.b16 %v4324, %v4320
    %v5361 = vpack.c.b16 %v4329, %v4325
    %v5362 = vpack.c.b16 %v4330, %v4326
    %v5363 = vpack.c.b16 %v4331, %v4327
    %v5364 = vpack.c.b16 %v4332, %v4328
    %v5365 = vpack.c.b16 %v4337, %v4333
    %v5366 = vpack.c.b16 %v4338, %v4334
    %v5367 = vpack.c.b16 %v4339, %v4335
    %v5368 = vpack.c.b16 %v4340, %v4336
    %v5369 = vpack.c.b16 %v4345, %v4341
    %v5370 = vpack.c.b16 %v4346, %v4342
    %v5371 = vpack.c.b16 %v4347, %v4343
    %v5372 = vpack.c.b16 %v4348, %v4344
    %6397 = vmatprep.subr.bf16.mxu0 %v4378
    %6398 = vmatpush1.bf16.msra.mxu0 %v4377
    %6399 = vmatprep.subr.bf16.mxu0 %v4374
    %6400 = vmatpush1.bf16.msra.mxu0 %v4373
    %6401 = vmatprep.subr.bf16.mxu0 %v4370
    %6402 = vmatpush1.bf16.msra.mxu0 %v4369
    %6403 = vmatprep.subr.bf16.mxu0 %v4366
    %6404 = vmatpush1.bf16.msra.mxu0 %v4365
    %6405 = vmatprep.subr.bf16.mxu0 %v4362
    %6406 = vmatpush1.bf16.msra.mxu0 %v4361
    %6407 = vmatprep.subr.bf16.mxu0 %v4358
    %6408 = vmatpush1.bf16.msra.mxu0 %v4357
    %6409 = vmatprep.subr.bf16.mxu0 %v4354
    %6410 = vmatpush1.bf16.msra.mxu0 %v4353
    %6411 = vmatprep.subr.bf16.mxu0 %v4350
    %6412 = vmatpush1.bf16.msra.mxu0 %v4349
    %6413 = vmatprep.subr.bf16.mxu0 %v4410
    %6414 = vmatpush2.bf16.msra.mxu0 %v4409
    %6415 = vmatprep.subr.bf16.mxu0 %v4406
    %6416 = vmatpush2.bf16.msra.mxu0 %v4405
    %6417 = vmatprep.subr.bf16.mxu0 %v4402
    %6418 = vmatpush2.bf16.msra.mxu0 %v4401
    %6419 = vmatprep.subr.bf16.mxu0 %v4398
    %6420 = vmatpush2.bf16.msra.mxu0 %v4397
    %6421 = vmatprep.subr.bf16.mxu0 %v4394
    %6422 = vmatpush2.bf16.msra.mxu0 %v4393
    %6423 = vmatprep.subr.bf16.mxu0 %v4390
    %6424 = vmatpush2.bf16.msra.mxu0 %v4389
    %6425 = vmatprep.subr.bf16.mxu0 %v4386
    %6426 = vmatpush2.bf16.msra.mxu0 %v4385
    %6427 = vmatprep.subr.bf16.mxu0 %v4382
    %6428 = vmatpush2.bf16.msra.mxu0 %v4381
    %6429 = vmatprep.mubr.bf16.mxu0 %v200
    %6430 = vmatmul.mubr.bf16.gmra.mxu0 %v199
    %v6431 = vpop.f32.mrf.mxu0
    %v6432 = vadd.f32 %v1260, %v6431
    %v6433 = vpop.f32.mrf.mxu0
    %v6434 = vadd.f32 %v1264, %v6433
    %v6435 = vpop.f32.mrf.mxu0
    %v6436 = vpop.f32.mrf.mxu0
    %6437 = vdwg.mxu0
    %6438 = vmatprep.subr.bf16.mxu0 %v4442
    %6439 = vmatpush1.bf16.msra.mxu0 %v4441
    %6440 = vmatprep.subr.bf16.mxu0 %v4438
    %6441 = vmatpush1.bf16.msra.mxu0 %v4437
    %6442 = vmatprep.subr.bf16.mxu0 %v4434
    %6443 = vmatpush1.bf16.msra.mxu0 %v4433
    %6444 = vmatprep.subr.bf16.mxu0 %v4430
    %6445 = vmatpush1.bf16.msra.mxu0 %v4429
    %6446 = vmatprep.subr.bf16.mxu0 %v4426
    %6447 = vmatpush1.bf16.msra.mxu0 %v4425
    %6448 = vmatprep.subr.bf16.mxu0 %v4422
    %6449 = vmatpush1.bf16.msra.mxu0 %v4421
    %6450 = vmatprep.subr.bf16.mxu0 %v4418
    %6451 = vmatpush1.bf16.msra.mxu0 %v4417
    %6452 = vmatprep.subr.bf16.mxu0 %v4414
    %6453 = vmatpush1.bf16.msra.mxu0 %v4413
    %6454 = vmatprep.subr.bf16.mxu0 %v4474
    %6455 = vmatpush2.bf16.msra.mxu0 %v4473
    %6456 = vmatprep.subr.bf16.mxu0 %v4470
    %6457 = vmatpush2.bf16.msra.mxu0 %v4469
    %6458 = vmatprep.subr.bf16.mxu0 %v4466
    %6459 = vmatpush2.bf16.msra.mxu0 %v4465
    %6460 = vmatprep.subr.bf16.mxu0 %v4462
    %6461 = vmatpush2.bf16.msra.mxu0 %v4461
    %6462 = vmatprep.subr.bf16.mxu0 %v4458
    %6463 = vmatpush2.bf16.msra.mxu0 %v4457
    %6464 = vmatprep.subr.bf16.mxu0 %v4454
    %6465 = vmatpush2.bf16.msra.mxu0 %v4453
    %6466 = vmatprep.subr.bf16.mxu0 %v4450
    %6467 = vmatpush2.bf16.msra.mxu0 %v4449
    %6468 = vmatprep.subr.bf16.mxu0 %v4446
    %6469 = vmatpush2.bf16.msra.mxu0 %v4445
    %6470 = vmatprep.mubr.bf16.mxu0 %v202
    %6471 = vmatmul.mubr.bf16.gmra.mxu0 %v201
    %v6472 = vpop.f32.mrf.mxu0
    %v6473 = vadd.f32 %v6432, %v6472
    %v6474 = vpop.f32.mrf.mxu0
    %v6475 = vadd.f32 %v6434, %v6474
    %v6476 = vpop.f32.mrf.mxu0
    %v6477 = vpop.f32.mrf.mxu0
    %6478 = vdwg.mxu0
    %6479 = vmatprep.subr.bf16.mxu0 %v4506
    %6480 = vmatpush1.bf16.msra.mxu0 %v4505
    %6481 = vmatprep.subr.bf16.mxu0 %v4502
    %6482 = vmatpush1.bf16.msra.mxu0 %v4501
    %6483 = vmatprep.subr.bf16.mxu0 %v4498
    %6484 = vmatpush1.bf16.msra.mxu0 %v4497
    %6485 = vmatprep.subr.bf16.mxu0 %v4494
    %6486 = vmatpush1.bf16.msra.mxu0 %v4493
    %6487 = vmatprep.subr.bf16.mxu0 %v4490
    %6488 = vmatpush1.bf16.msra.mxu0 %v4489
    %6489 = vmatprep.subr.bf16.mxu0 %v4486
    %6490 = vmatpush1.bf16.msra.mxu0 %v4485
    %6491 = vmatprep.subr.bf16.mxu0 %v4482
    %6492 = vmatpush1.bf16.msra.mxu0 %v4481
    %6493 = vmatprep.subr.bf16.mxu0 %v4478
    %6494 = vmatpush1.bf16.msra.mxu0 %v4477
    %6495 = vmatprep.subr.bf16.mxu0 %v4538
    %6496 = vmatpush2.bf16.msra.mxu0 %v4537
    %6497 = vmatprep.subr.bf16.mxu0 %v4534
    %6498 = vmatpush2.bf16.msra.mxu0 %v4533
    %6499 = vmatprep.subr.bf16.mxu0 %v4530
    %6500 = vmatpush2.bf16.msra.mxu0 %v4529
    %6501 = vmatprep.subr.bf16.mxu0 %v4526
    %6502 = vmatpush2.bf16.msra.mxu0 %v4525
    %6503 = vmatprep.subr.bf16.mxu0 %v4522
    %6504 = vmatpush2.bf16.msra.mxu0 %v4521
    %6505 = vmatprep.subr.bf16.mxu0 %v4518
    %6506 = vmatpush2.bf16.msra.mxu0 %v4517
    %6507 = vmatprep.subr.bf16.mxu0 %v4514
    %6508 = vmatpush2.bf16.msra.mxu0 %v4513
    %6509 = vmatprep.subr.bf16.mxu0 %v4510
    %6510 = vmatpush2.bf16.msra.mxu0 %v4509
    %6511 = vmatprep.mubr.bf16.mxu0 %v204
    %6512 = vmatmul.mubr.bf16.gmra.mxu0 %v203
    %v6513 = vpop.f32.mrf.mxu0
    %v6514 = vadd.f32 %v6473, %v6513
    %v6515 = vpop.f32.mrf.mxu0
    %v6516 = vadd.f32 %v6475, %v6515
    %v6517 = vpop.f32.mrf.mxu0
    %v6518 = vpop.f32.mrf.mxu0
    %6519 = vdwg.mxu0
    %6520 = vmatprep.subr.bf16.mxu0 %v4570
    %6521 = vmatpush1.bf16.msra.mxu0 %v4569
    %6522 = vmatprep.subr.bf16.mxu0 %v4566
    %6523 = vmatpush1.bf16.msra.mxu0 %v4565
    %6524 = vmatprep.subr.bf16.mxu0 %v4562
    %6525 = vmatpush1.bf16.msra.mxu0 %v4561
    %6526 = vmatprep.subr.bf16.mxu0 %v4558
    %6527 = vmatpush1.bf16.msra.mxu0 %v4557
    %6528 = vmatprep.subr.bf16.mxu0 %v4554
    %6529 = vmatpush1.bf16.msra.mxu0 %v4553
    %6530 = vmatprep.subr.bf16.mxu0 %v4550
    %6531 = vmatpush1.bf16.msra.mxu0 %v4549
    %6532 = vmatprep.subr.bf16.mxu0 %v4546
    %6533 = vmatpush1.bf16.msra.mxu0 %v4545
    %6534 = vmatprep.subr.bf16.mxu0 %v4542
    %6535 = vmatpush1.bf16.msra.mxu0 %v4541
    %6536 = vmatprep.subr.bf16.mxu0 %v4602
    %6537 = vmatpush2.bf16.msra.mxu0 %v4601
    %6538 = vmatprep.subr.bf16.mxu0 %v4598
    %6539 = vmatpush2.bf16.msra.mxu0 %v4597
    %6540 = vmatprep.subr.bf16.mxu0 %v4594
    %6541 = vmatpush2.bf16.msra.mxu0 %v4593
    %6542 = vmatprep.subr.bf16.mxu0 %v4590
    %6543 = vmatpush2.bf16.msra.mxu0 %v4589
    %6544 = vmatprep.subr.bf16.mxu0 %v4586
    %6545 = vmatpush2.bf16.msra.mxu0 %v4585
    %6546 = vmatprep.subr.bf16.mxu0 %v4582
    %6547 = vmatpush2.bf16.msra.mxu0 %v4581
    %6548 = vmatprep.subr.bf16.mxu0 %v4578
    %6549 = vmatpush2.bf16.msra.mxu0 %v4577
    %6550 = vmatprep.subr.bf16.mxu0 %v4574
    %6551 = vmatpush2.bf16.msra.mxu0 %v4573
    %6552 = vmatprep.mubr.bf16.mxu0 %v206
    %6553 = vmatmul.mubr.bf16.gmra.mxu0 %v205
    %v6554 = vpop.f32.mrf.mxu0
    %v6555 = vadd.f32 %v6514, %v6554
    %v6556 = vpop.f32.mrf.mxu0
    %v6557 = vadd.f32 %v6516, %v6556
    %v6558 = vpop.f32.mrf.mxu0
    %v6559 = vpop.f32.mrf.mxu0
    %6560 = vdwg.mxu0
    %6561 = vmatprep.subr.bf16.mxu0 %v4634
    %6562 = vmatpush1.bf16.msra.mxu0 %v4633
    %6563 = vmatprep.subr.bf16.mxu0 %v4630
    %6564 = vmatpush1.bf16.msra.mxu0 %v4629
    %6565 = vmatprep.subr.bf16.mxu0 %v4626
    %6566 = vmatpush1.bf16.msra.mxu0 %v4625
    %6567 = vmatprep.subr.bf16.mxu0 %v4622
    %6568 = vmatpush1.bf16.msra.mxu0 %v4621
    %6569 = vmatprep.subr.bf16.mxu0 %v4618
    %6570 = vmatpush1.bf16.msra.mxu0 %v4617
    %6571 = vmatprep.subr.bf16.mxu0 %v4614
    %6572 = vmatpush1.bf16.msra.mxu0 %v4613
    %6573 = vmatprep.subr.bf16.mxu0 %v4610
    %6574 = vmatpush1.bf16.msra.mxu0 %v4609
    %6575 = vmatprep.subr.bf16.mxu0 %v4606
    %6576 = vmatpush1.bf16.msra.mxu0 %v4605
    %6577 = vmatprep.subr.bf16.mxu0 %v4666
    %6578 = vmatpush2.bf16.msra.mxu0 %v4665
    %6579 = vmatprep.subr.bf16.mxu0 %v4662
    %6580 = vmatpush2.bf16.msra.mxu0 %v4661
    %6581 = vmatprep.subr.bf16.mxu0 %v4658
    %6582 = vmatpush2.bf16.msra.mxu0 %v4657
    %6583 = vmatprep.subr.bf16.mxu0 %v4654
    %6584 = vmatpush2.bf16.msra.mxu0 %v4653
    %6585 = vmatprep.subr.bf16.mxu0 %v4650
    %6586 = vmatpush2.bf16.msra.mxu0 %v4649
    %6587 = vmatprep.subr.bf16.mxu0 %v4646
    %6588 = vmatpush2.bf16.msra.mxu0 %v4645
    %6589 = vmatprep.subr.bf16.mxu0 %v4642
    %6590 = vmatpush2.bf16.msra.mxu0 %v4641
    %6591 = vmatprep.subr.bf16.mxu0 %v4638
    %6592 = vmatpush2.bf16.msra.mxu0 %v4637
    %6593 = vmatprep.mubr.bf16.mxu0 %v208
    %6594 = vmatmul.mubr.bf16.gmra.mxu0 %v207
    %v6595 = vpop.f32.mrf.mxu0
    %v6596 = vadd.f32 %v6555, %v6595
    %v6597 = vpop.f32.mrf.mxu0
    %v6598 = vadd.f32 %v6557, %v6597
    %v6599 = vpop.f32.mrf.mxu0
    %v6600 = vpop.f32.mrf.mxu0
    %6601 = vdwg.mxu0
    %6602 = vmatprep.subr.bf16.mxu0 %v4698
    %6603 = vmatpush1.bf16.msra.mxu0 %v4697
    %6604 = vmatprep.subr.bf16.mxu0 %v4694
    %6605 = vmatpush1.bf16.msra.mxu0 %v4693
    %6606 = vmatprep.subr.bf16.mxu0 %v4690
    %6607 = vmatpush1.bf16.msra.mxu0 %v4689
    %6608 = vmatprep.subr.bf16.mxu0 %v4686
    %6609 = vmatpush1.bf16.msra.mxu0 %v4685
    %6610 = vmatprep.subr.bf16.mxu0 %v4682
    %6611 = vmatpush1.bf16.msra.mxu0 %v4681
    %6612 = vmatprep.subr.bf16.mxu0 %v4678
    %6613 = vmatpush1.bf16.msra.mxu0 %v4677
    %6614 = vmatprep.subr.bf16.mxu0 %v4674
    %6615 = vmatpush1.bf16.msra.mxu0 %v4673
    %6616 = vmatprep.subr.bf16.mxu0 %v4670
    %6617 = vmatpush1.bf16.msra.mxu0 %v4669
    %6618 = vmatprep.subr.bf16.mxu0 %v4730
    %6619 = vmatpush2.bf16.msra.mxu0 %v4729
    %6620 = vmatprep.subr.bf16.mxu0 %v4726
    %6621 = vmatpush2.bf16.msra.mxu0 %v4725
    %6622 = vmatprep.subr.bf16.mxu0 %v4722
    %6623 = vmatpush2.bf16.msra.mxu0 %v4721
    %6624 = vmatprep.subr.bf16.mxu0 %v4718
    %6625 = vmatpush2.bf16.msra.mxu0 %v4717
    %6626 = vmatprep.subr.bf16.mxu0 %v4714
    %6627 = vmatpush2.bf16.msra.mxu0 %v4713
    %6628 = vmatprep.subr.bf16.mxu0 %v4710
    %6629 = vmatpush2.bf16.msra.mxu0 %v4709
    %6630 = vmatprep.subr.bf16.mxu0 %v4706
    %6631 = vmatpush2.bf16.msra.mxu0 %v4705
    %6632 = vmatprep.subr.bf16.mxu0 %v4702
    %6633 = vmatpush2.bf16.msra.mxu0 %v4701
    %6634 = vmatprep.mubr.bf16.mxu0 %v210
    %6635 = vmatmul.mubr.bf16.gmra.mxu0 %v209
    %v6636 = vpop.f32.mrf.mxu0
    %v6637 = vadd.f32 %v6596, %v6636
    %v6638 = vpop.f32.mrf.mxu0
    %v6639 = vadd.f32 %v6598, %v6638
    %v6640 = vpop.f32.mrf.mxu0
    %v6641 = vpop.f32.mrf.mxu0
    %6642 = vdwg.mxu0
    %6643 = vmatprep.subr.bf16.mxu0 %v4762
    %6644 = vmatpush1.bf16.msra.mxu0 %v4761
    %6645 = vmatprep.subr.bf16.mxu0 %v4758
    %6646 = vmatpush1.bf16.msra.mxu0 %v4757
    %6647 = vmatprep.subr.bf16.mxu0 %v4754
    %6648 = vmatpush1.bf16.msra.mxu0 %v4753
    %6649 = vmatprep.subr.bf16.mxu0 %v4750
    %6650 = vmatpush1.bf16.msra.mxu0 %v4749
    %6651 = vmatprep.subr.bf16.mxu0 %v4746
    %6652 = vmatpush1.bf16.msra.mxu0 %v4745
    %6653 = vmatprep.subr.bf16.mxu0 %v4742
    %6654 = vmatpush1.bf16.msra.mxu0 %v4741
    %6655 = vmatprep.subr.bf16.mxu0 %v4738
    %6656 = vmatpush1.bf16.msra.mxu0 %v4737
    %6657 = vmatprep.subr.bf16.mxu0 %v4734
    %6658 = vmatpush1.bf16.msra.mxu0 %v4733
    %6659 = vmatprep.subr.bf16.mxu0 %v4794
    %6660 = vmatpush2.bf16.msra.mxu0 %v4793
    %6661 = vmatprep.subr.bf16.mxu0 %v4790
    %6662 = vmatpush2.bf16.msra.mxu0 %v4789
    %6663 = vmatprep.subr.bf16.mxu0 %v4786
    %6664 = vmatpush2.bf16.msra.mxu0 %v4785
    %6665 = vmatprep.subr.bf16.mxu0 %v4782
    %6666 = vmatpush2.bf16.msra.mxu0 %v4781
    %6667 = vmatprep.subr.bf16.mxu0 %v4778
    %6668 = vmatpush2.bf16.msra.mxu0 %v4777
    %6669 = vmatprep.subr.bf16.mxu0 %v4774
    %6670 = vmatpush2.bf16.msra.mxu0 %v4773
    %6671 = vmatprep.subr.bf16.mxu0 %v4770
    %6672 = vmatpush2.bf16.msra.mxu0 %v4769
    %6673 = vmatprep.subr.bf16.mxu0 %v4766
    %6674 = vmatpush2.bf16.msra.mxu0 %v4765
    %6675 = vmatprep.mubr.bf16.mxu0 %v212
    %6676 = vmatmul.mubr.bf16.gmra.mxu0 %v211
    %v6677 = vpop.f32.mrf.mxu0
    %v6678 = vadd.f32 %v6637, %v6677
    %v6679 = vpop.f32.mrf.mxu0
    %v6680 = vadd.f32 %v6639, %v6679
    %v6681 = vpop.f32.mrf.mxu0
    %v6682 = vpop.f32.mrf.mxu0
    %6683 = vdwg.mxu0
    %6684 = vmatprep.subr.bf16.mxu0 %v4826
    %6685 = vmatpush1.bf16.msra.mxu0 %v4825
    %6686 = vmatprep.subr.bf16.mxu0 %v4822
    %6687 = vmatpush1.bf16.msra.mxu0 %v4821
    %6688 = vmatprep.subr.bf16.mxu0 %v4818
    %6689 = vmatpush1.bf16.msra.mxu0 %v4817
    %6690 = vmatprep.subr.bf16.mxu0 %v4814
    %6691 = vmatpush1.bf16.msra.mxu0 %v4813
    %6692 = vmatprep.subr.bf16.mxu0 %v4810
    %6693 = vmatpush1.bf16.msra.mxu0 %v4809
    %6694 = vmatprep.subr.bf16.mxu0 %v4806
    %6695 = vmatpush1.bf16.msra.mxu0 %v4805
    %6696 = vmatprep.subr.bf16.mxu0 %v4802
    %6697 = vmatpush1.bf16.msra.mxu0 %v4801
    %6698 = vmatprep.subr.bf16.mxu0 %v4798
    %6699 = vmatpush1.bf16.msra.mxu0 %v4797
    %6700 = vmatprep.subr.bf16.mxu0 %v4858
    %6701 = vmatpush2.bf16.msra.mxu0 %v4857
    %6702 = vmatprep.subr.bf16.mxu0 %v4854
    %6703 = vmatpush2.bf16.msra.mxu0 %v4853
    %6704 = vmatprep.subr.bf16.mxu0 %v4850
    %6705 = vmatpush2.bf16.msra.mxu0 %v4849
    %6706 = vmatprep.subr.bf16.mxu0 %v4846
    %6707 = vmatpush2.bf16.msra.mxu0 %v4845
    %6708 = vmatprep.subr.bf16.mxu0 %v4842
    %6709 = vmatpush2.bf16.msra.mxu0 %v4841
    %6710 = vmatprep.subr.bf16.mxu0 %v4838
    %6711 = vmatpush2.bf16.msra.mxu0 %v4837
    %6712 = vmatprep.subr.bf16.mxu0 %v4834
    %6713 = vmatpush2.bf16.msra.mxu0 %v4833
    %6714 = vmatprep.subr.bf16.mxu0 %v4830
    %6715 = vmatpush2.bf16.msra.mxu0 %v4829
    %6716 = vmatprep.mubr.bf16.mxu0 %v214
    %6717 = vmatmul.mubr.bf16.gmra.mxu0 %v213
    %v6718 = vpop.f32.mrf.mxu0
    %v6719 = vadd.f32 %v6678, %v6718
    %v6720 = vpop.f32.mrf.mxu0
    %v6721 = vadd.f32 %v6680, %v6720
    %v6722 = vpop.f32.mrf.mxu0
    %v6723 = vpop.f32.mrf.mxu0
    %6724 = vdwg.mxu0
    %6725 = vmatprep.subr.bf16.mxu0 %v4890
    %6726 = vmatpush1.bf16.msra.mxu0 %v4889
    %6727 = vmatprep.subr.bf16.mxu0 %v4886
    %6728 = vmatpush1.bf16.msra.mxu0 %v4885
    %6729 = vmatprep.subr.bf16.mxu0 %v4882
    %6730 = vmatpush1.bf16.msra.mxu0 %v4881
    %6731 = vmatprep.subr.bf16.mxu0 %v4878
    %6732 = vmatpush1.bf16.msra.mxu0 %v4877
    %6733 = vmatprep.subr.bf16.mxu0 %v4874
    %6734 = vmatpush1.bf16.msra.mxu0 %v4873
    %6735 = vmatprep.subr.bf16.mxu0 %v4870
    %6736 = vmatpush1.bf16.msra.mxu0 %v4869
    %6737 = vmatprep.subr.bf16.mxu0 %v4866
    %6738 = vmatpush1.bf16.msra.mxu0 %v4865
    %6739 = vmatprep.subr.bf16.mxu0 %v4862
    %6740 = vmatpush1.bf16.msra.mxu0 %v4861
    %6741 = vmatprep.subr.bf16.mxu0 %v4922
    %6742 = vmatpush2.bf16.msra.mxu0 %v4921
    %6743 = vmatprep.subr.bf16.mxu0 %v4918
    %6744 = vmatpush2.bf16.msra.mxu0 %v4917
    %6745 = vmatprep.subr.bf16.mxu0 %v4914
    %6746 = vmatpush2.bf16.msra.mxu0 %v4913
    %6747 = vmatprep.subr.bf16.mxu0 %v4910
    %6748 = vmatpush2.bf16.msra.mxu0 %v4909
    %6749 = vmatprep.subr.bf16.mxu0 %v4906
    %6750 = vmatpush2.bf16.msra.mxu0 %v4905
    %6751 = vmatprep.subr.bf16.mxu0 %v4902
    %6752 = vmatpush2.bf16.msra.mxu0 %v4901
    %6753 = vmatprep.subr.bf16.mxu0 %v4898
    %6754 = vmatpush2.bf16.msra.mxu0 %v4897
    %6755 = vmatprep.subr.bf16.mxu0 %v4894
    %6756 = vmatpush2.bf16.msra.mxu0 %v4893
    %6757 = vmatprep.mubr.bf16.mxu0 %v216
    %6758 = vmatmul.mubr.bf16.gmra.mxu0 %v215
    %v6759 = vpop.f32.mrf.mxu0
    %v6760 = vadd.f32 %v6719, %v6759
    %v6761 = vpop.f32.mrf.mxu0
    %v6762 = vadd.f32 %v6721, %v6761
    %v6763 = vpop.f32.mrf.mxu0
    %v6764 = vpop.f32.mrf.mxu0
    %6765 = vdwg.mxu0
    %6766 = vmatprep.subr.bf16.mxu0 %v4954
    %6767 = vmatpush1.bf16.msra.mxu0 %v4953
    %6768 = vmatprep.subr.bf16.mxu0 %v4950
    %6769 = vmatpush1.bf16.msra.mxu0 %v4949
    %6770 = vmatprep.subr.bf16.mxu0 %v4946
    %6771 = vmatpush1.bf16.msra.mxu0 %v4945
    %6772 = vmatprep.subr.bf16.mxu0 %v4942
    %6773 = vmatpush1.bf16.msra.mxu0 %v4941
    %6774 = vmatprep.subr.bf16.mxu0 %v4938
    %6775 = vmatpush1.bf16.msra.mxu0 %v4937
    %6776 = vmatprep.subr.bf16.mxu0 %v4934
    %6777 = vmatpush1.bf16.msra.mxu0 %v4933
    %6778 = vmatprep.subr.bf16.mxu0 %v4930
    %6779 = vmatpush1.bf16.msra.mxu0 %v4929
    %6780 = vmatprep.subr.bf16.mxu0 %v4926
    %6781 = vmatpush1.bf16.msra.mxu0 %v4925
    %6782 = vmatprep.subr.bf16.mxu0 %v4986
    %6783 = vmatpush2.bf16.msra.mxu0 %v4985
    %6784 = vmatprep.subr.bf16.mxu0 %v4982
    %6785 = vmatpush2.bf16.msra.mxu0 %v4981
    %6786 = vmatprep.subr.bf16.mxu0 %v4978
    %6787 = vmatpush2.bf16.msra.mxu0 %v4977
    %6788 = vmatprep.subr.bf16.mxu0 %v4974
    %6789 = vmatpush2.bf16.msra.mxu0 %v4973
    %6790 = vmatprep.subr.bf16.mxu0 %v4970
    %6791 = vmatpush2.bf16.msra.mxu0 %v4969
    %6792 = vmatprep.subr.bf16.mxu0 %v4966
    %6793 = vmatpush2.bf16.msra.mxu0 %v4965
    %6794 = vmatprep.subr.bf16.mxu0 %v4962
    %6795 = vmatpush2.bf16.msra.mxu0 %v4961
    %6796 = vmatprep.subr.bf16.mxu0 %v4958
    %6797 = vmatpush2.bf16.msra.mxu0 %v4957
    %6798 = vmatprep.mubr.bf16.mxu0 %v218
    %6799 = vmatmul.mubr.bf16.gmra.mxu0 %v217
    %v6800 = vpop.f32.mrf.mxu0
    %v6801 = vadd.f32 %v6760, %v6800
    %v6802 = vpop.f32.mrf.mxu0
    %v6803 = vadd.f32 %v6762, %v6802
    %v6804 = vpop.f32.mrf.mxu0
    %v6805 = vpop.f32.mrf.mxu0
    %6806 = vdwg.mxu0
    %6807 = vmatprep.subr.bf16.mxu0 %v5018
    %6808 = vmatpush1.bf16.msra.mxu0 %v5017
    %6809 = vmatprep.subr.bf16.mxu0 %v5014
    %6810 = vmatpush1.bf16.msra.mxu0 %v5013
    %6811 = vmatprep.subr.bf16.mxu0 %v5010
    %6812 = vmatpush1.bf16.msra.mxu0 %v5009
    %6813 = vmatprep.subr.bf16.mxu0 %v5006
    %6814 = vmatpush1.bf16.msra.mxu0 %v5005
    %6815 = vmatprep.subr.bf16.mxu0 %v5002
    %6816 = vmatpush1.bf16.msra.mxu0 %v5001
    %6817 = vmatprep.subr.bf16.mxu0 %v4998
    %6818 = vmatpush1.bf16.msra.mxu0 %v4997
    %6819 = vmatprep.subr.bf16.mxu0 %v4994
    %6820 = vmatpush1.bf16.msra.mxu0 %v4993
    %6821 = vmatprep.subr.bf16.mxu0 %v4990
    %6822 = vmatpush1.bf16.msra.mxu0 %v4989
    %6823 = vmatprep.subr.bf16.mxu0 %v5050
    %6824 = vmatpush2.bf16.msra.mxu0 %v5049
    %6825 = vmatprep.subr.bf16.mxu0 %v5046
    %6826 = vmatpush2.bf16.msra.mxu0 %v5045
    %6827 = vmatprep.subr.bf16.mxu0 %v5042
    %6828 = vmatpush2.bf16.msra.mxu0 %v5041
    %6829 = vmatprep.subr.bf16.mxu0 %v5038
    %6830 = vmatpush2.bf16.msra.mxu0 %v5037
    %6831 = vmatprep.subr.bf16.mxu0 %v5034
    %6832 = vmatpush2.bf16.msra.mxu0 %v5033
    %6833 = vmatprep.subr.bf16.mxu0 %v5030
    %6834 = vmatpush2.bf16.msra.mxu0 %v5029
    %6835 = vmatprep.subr.bf16.mxu0 %v5026
    %6836 = vmatpush2.bf16.msra.mxu0 %v5025
    %6837 = vmatprep.subr.bf16.mxu0 %v5022
    %6838 = vmatpush2.bf16.msra.mxu0 %v5021
    %6839 = vmatprep.mubr.bf16.mxu0 %v220
    %6840 = vmatmul.mubr.bf16.gmra.mxu0 %v219
    %v6841 = vpop.f32.mrf.mxu0
    %v6842 = vadd.f32 %v6801, %v6841
    %v6843 = vpop.f32.mrf.mxu0
    %v6844 = vadd.f32 %v6803, %v6843
    %v6845 = vpop.f32.mrf.mxu0
    %v6846 = vpop.f32.mrf.mxu0
    %6847 = vdwg.mxu0
    %6848 = vmatprep.subr.bf16.mxu0 %v5082
    %6849 = vmatpush1.bf16.msra.mxu0 %v5081
    %6850 = vmatprep.subr.bf16.mxu0 %v5078
    %6851 = vmatpush1.bf16.msra.mxu0 %v5077
    %6852 = vmatprep.subr.bf16.mxu0 %v5074
    %6853 = vmatpush1.bf16.msra.mxu0 %v5073
    %6854 = vmatprep.subr.bf16.mxu0 %v5070
    %6855 = vmatpush1.bf16.msra.mxu0 %v5069
    %6856 = vmatprep.subr.bf16.mxu0 %v5066
    %6857 = vmatpush1.bf16.msra.mxu0 %v5065
    %6858 = vmatprep.subr.bf16.mxu0 %v5062
    %6859 = vmatpush1.bf16.msra.mxu0 %v5061
    %6860 = vmatprep.subr.bf16.mxu0 %v5058
    %6861 = vmatpush1.bf16.msra.mxu0 %v5057
    %6862 = vmatprep.subr.bf16.mxu0 %v5054
    %6863 = vmatpush1.bf16.msra.mxu0 %v5053
    %6864 = vmatprep.subr.bf16.mxu0 %v5114
    %6865 = vmatpush2.bf16.msra.mxu0 %v5113
    %6866 = vmatprep.subr.bf16.mxu0 %v5110
    %6867 = vmatpush2.bf16.msra.mxu0 %v5109
    %6868 = vmatprep.subr.bf16.mxu0 %v5106
    %6869 = vmatpush2.bf16.msra.mxu0 %v5105
    %6870 = vmatprep.subr.bf16.mxu0 %v5102
    %6871 = vmatpush2.bf16.msra.mxu0 %v5101
    %6872 = vmatprep.subr.bf16.mxu0 %v5098
    %6873 = vmatpush2.bf16.msra.mxu0 %v5097
    %6874 = vmatprep.subr.bf16.mxu0 %v5094
    %6875 = vmatpush2.bf16.msra.mxu0 %v5093
    %6876 = vmatprep.subr.bf16.mxu0 %v5090
    %6877 = vmatpush2.bf16.msra.mxu0 %v5089
    %6878 = vmatprep.subr.bf16.mxu0 %v5086
    %6879 = vmatpush2.bf16.msra.mxu0 %v5085
    %6880 = vmatprep.mubr.bf16.mxu0 %v222
    %6881 = vmatmul.mubr.bf16.gmra.mxu0 %v221
    %v6882 = vpop.f32.mrf.mxu0
    %v6883 = vadd.f32 %v6842, %v6882
    %v6884 = vpop.f32.mrf.mxu0
    %v6885 = vadd.f32 %v6844, %v6884
    %v6886 = vpop.f32.mrf.mxu0
    %v6887 = vpop.f32.mrf.mxu0
    %6888 = vdwg.mxu0
    %6889 = vmatprep.subr.bf16.mxu0 %v5146
    %6890 = vmatpush1.bf16.msra.mxu0 %v5145
    %6891 = vmatprep.subr.bf16.mxu0 %v5142
    %6892 = vmatpush1.bf16.msra.mxu0 %v5141
    %6893 = vmatprep.subr.bf16.mxu0 %v5138
    %6894 = vmatpush1.bf16.msra.mxu0 %v5137
    %6895 = vmatprep.subr.bf16.mxu0 %v5134
    %6896 = vmatpush1.bf16.msra.mxu0 %v5133
    %6897 = vmatprep.subr.bf16.mxu0 %v5130
    %6898 = vmatpush1.bf16.msra.mxu0 %v5129
    %6899 = vmatprep.subr.bf16.mxu0 %v5126
    %6900 = vmatpush1.bf16.msra.mxu0 %v5125
    %6901 = vmatprep.subr.bf16.mxu0 %v5122
    %6902 = vmatpush1.bf16.msra.mxu0 %v5121
    %6903 = vmatprep.subr.bf16.mxu0 %v5118
    %6904 = vmatpush1.bf16.msra.mxu0 %v5117
    %6905 = vmatprep.subr.bf16.mxu0 %v5178
    %6906 = vmatpush2.bf16.msra.mxu0 %v5177
    %6907 = vmatprep.subr.bf16.mxu0 %v5174
    %6908 = vmatpush2.bf16.msra.mxu0 %v5173
    %6909 = vmatprep.subr.bf16.mxu0 %v5170
    %6910 = vmatpush2.bf16.msra.mxu0 %v5169
    %6911 = vmatprep.subr.bf16.mxu0 %v5166
    %6912 = vmatpush2.bf16.msra.mxu0 %v5165
    %6913 = vmatprep.subr.bf16.mxu0 %v5162
    %6914 = vmatpush2.bf16.msra.mxu0 %v5161
    %6915 = vmatprep.subr.bf16.mxu0 %v5158
    %6916 = vmatpush2.bf16.msra.mxu0 %v5157
    %6917 = vmatprep.subr.bf16.mxu0 %v5154
    %6918 = vmatpush2.bf16.msra.mxu0 %v5153
    %6919 = vmatprep.subr.bf16.mxu0 %v5150
    %6920 = vmatpush2.bf16.msra.mxu0 %v5149
    %6921 = vmatprep.mubr.bf16.mxu0 %v224
    %6922 = vmatmul.mubr.bf16.gmra.mxu0 %v223
    %v6923 = vpop.f32.mrf.mxu0
    %v6924 = vadd.f32 %v6883, %v6923
    %v6925 = vpop.f32.mrf.mxu0
    %v6926 = vadd.f32 %v6885, %v6925
    %v6927 = vpop.f32.mrf.mxu0
    %v6928 = vpop.f32.mrf.mxu0
    %6929 = vdwg.mxu0
    %6930 = vmatprep.subr.bf16.mxu0 %v5210
    %6931 = vmatpush1.bf16.msra.mxu0 %v5209
    %6932 = vmatprep.subr.bf16.mxu0 %v5206
    %6933 = vmatpush1.bf16.msra.mxu0 %v5205
    %6934 = vmatprep.subr.bf16.mxu0 %v5202
    %6935 = vmatpush1.bf16.msra.mxu0 %v5201
    %6936 = vmatprep.subr.bf16.mxu0 %v5198
    %6937 = vmatpush1.bf16.msra.mxu0 %v5197
    %6938 = vmatprep.subr.bf16.mxu0 %v5194
    %6939 = vmatpush1.bf16.msra.mxu0 %v5193
    %6940 = vmatprep.subr.bf16.mxu0 %v5190
    %6941 = vmatpush1.bf16.msra.mxu0 %v5189
    %6942 = vmatprep.subr.bf16.mxu0 %v5186
    %6943 = vmatpush1.bf16.msra.mxu0 %v5185
    %6944 = vmatprep.subr.bf16.mxu0 %v5182
    %6945 = vmatpush1.bf16.msra.mxu0 %v5181
    %6946 = vmatprep.subr.bf16.mxu0 %v5242
    %6947 = vmatpush2.bf16.msra.mxu0 %v5241
    %6948 = vmatprep.subr.bf16.mxu0 %v5238
    %6949 = vmatpush2.bf16.msra.mxu0 %v5237
    %6950 = vmatprep.subr.bf16.mxu0 %v5234
    %6951 = vmatpush2.bf16.msra.mxu0 %v5233
    %6952 = vmatprep.subr.bf16.mxu0 %v5230
    %6953 = vmatpush2.bf16.msra.mxu0 %v5229
    %6954 = vmatprep.subr.bf16.mxu0 %v5226
    %6955 = vmatpush2.bf16.msra.mxu0 %v5225
    %6956 = vmatprep.subr.bf16.mxu0 %v5222
    %6957 = vmatpush2.bf16.msra.mxu0 %v5221
    %6958 = vmatprep.subr.bf16.mxu0 %v5218
    %6959 = vmatpush2.bf16.msra.mxu0 %v5217
    %6960 = vmatprep.subr.bf16.mxu0 %v5214
    %6961 = vmatpush2.bf16.msra.mxu0 %v5213
    %6962 = vmatprep.mubr.bf16.mxu0 %v226
    %6963 = vmatmul.mubr.bf16.gmra.mxu0 %v225
    %v6964 = vpop.f32.mrf.mxu0
    %v6965 = vadd.f32 %v6924, %v6964
    %v6966 = vpop.f32.mrf.mxu0
    %v6967 = vadd.f32 %v6926, %v6966
    %v6968 = vpop.f32.mrf.mxu0
    %v6969 = vpop.f32.mrf.mxu0
    %6970 = vdwg.mxu0
    %6971 = vmatprep.subr.bf16.mxu0 %v5274
    %6972 = vmatpush1.bf16.msra.mxu0 %v5273
    %6973 = vmatprep.subr.bf16.mxu0 %v5270
    %6974 = vmatpush1.bf16.msra.mxu0 %v5269
    %6975 = vmatprep.subr.bf16.mxu0 %v5266
    %6976 = vmatpush1.bf16.msra.mxu0 %v5265
    %6977 = vmatprep.subr.bf16.mxu0 %v5262
    %6978 = vmatpush1.bf16.msra.mxu0 %v5261
    %6979 = vmatprep.subr.bf16.mxu0 %v5258
    %6980 = vmatpush1.bf16.msra.mxu0 %v5257
    %6981 = vmatprep.subr.bf16.mxu0 %v5254
    %6982 = vmatpush1.bf16.msra.mxu0 %v5253
    %6983 = vmatprep.subr.bf16.mxu0 %v5250
    %6984 = vmatpush1.bf16.msra.mxu0 %v5249
    %6985 = vmatprep.subr.bf16.mxu0 %v5246
    %6986 = vmatpush1.bf16.msra.mxu0 %v5245
    %6987 = vmatprep.subr.bf16.mxu0 %v5306
    %6988 = vmatpush2.bf16.msra.mxu0 %v5305
    %6989 = vmatprep.subr.bf16.mxu0 %v5302
    %6990 = vmatpush2.bf16.msra.mxu0 %v5301
    %6991 = vmatprep.subr.bf16.mxu0 %v5298
    %6992 = vmatpush2.bf16.msra.mxu0 %v5297
    %6993 = vmatprep.subr.bf16.mxu0 %v5294
    %6994 = vmatpush2.bf16.msra.mxu0 %v5293
    %6995 = vmatprep.subr.bf16.mxu0 %v5290
    %6996 = vmatpush2.bf16.msra.mxu0 %v5289
    %6997 = vmatprep.subr.bf16.mxu0 %v5286
    %6998 = vmatpush2.bf16.msra.mxu0 %v5285
    %6999 = vmatprep.subr.bf16.mxu0 %v5282
    %7000 = vmatpush2.bf16.msra.mxu0 %v5281
    %7001 = vmatprep.subr.bf16.mxu0 %v5278
    %7002 = vmatpush2.bf16.msra.mxu0 %v5277
    %7003 = vmatprep.mubr.bf16.mxu0 %v228
    %7004 = vmatmul.mubr.bf16.gmra.mxu0 %v227
    %v7005 = vpop.f32.mrf.mxu0
    %v7006 = vadd.f32 %v6965, %v7005
    %v7007 = vpop.f32.mrf.mxu0
    %v7008 = vadd.f32 %v6967, %v7007
    %v7009 = vpop.f32.mrf.mxu0
    %v7010 = vpop.f32.mrf.mxu0
    %7011 = vdwg.mxu0
    %7012 = vmatprep.subr.bf16.mxu0 %v5338
    %7013 = vmatpush1.bf16.msra.mxu0 %v5337
    %7014 = vmatprep.subr.bf16.mxu0 %v5334
    %7015 = vmatpush1.bf16.msra.mxu0 %v5333
    %7016 = vmatprep.subr.bf16.mxu0 %v5330
    %7017 = vmatpush1.bf16.msra.mxu0 %v5329
    %7018 = vmatprep.subr.bf16.mxu0 %v5326
    %7019 = vmatpush1.bf16.msra.mxu0 %v5325
    %7020 = vmatprep.subr.bf16.mxu0 %v5322
    %7021 = vmatpush1.bf16.msra.mxu0 %v5321
    %7022 = vmatprep.subr.bf16.mxu0 %v5318
    %7023 = vmatpush1.bf16.msra.mxu0 %v5317
    %7024 = vmatprep.subr.bf16.mxu0 %v5314
    %7025 = vmatpush1.bf16.msra.mxu0 %v5313
    %7026 = vmatprep.subr.bf16.mxu0 %v5310
    %7027 = vmatpush1.bf16.msra.mxu0 %v5309
    %7028 = vmatprep.subr.bf16.mxu0 %v5370
    %7029 = vmatpush2.bf16.msra.mxu0 %v5369
    %7030 = vmatprep.subr.bf16.mxu0 %v5366
    %7031 = vmatpush2.bf16.msra.mxu0 %v5365
    %7032 = vmatprep.subr.bf16.mxu0 %v5362
    %7033 = vmatpush2.bf16.msra.mxu0 %v5361
    %7034 = vmatprep.subr.bf16.mxu0 %v5358
    %7035 = vmatpush2.bf16.msra.mxu0 %v5357
    %7036 = vmatprep.subr.bf16.mxu0 %v5354
    %7037 = vmatpush2.bf16.msra.mxu0 %v5353
    %7038 = vmatprep.subr.bf16.mxu0 %v5350
    %7039 = vmatpush2.bf16.msra.mxu0 %v5349
    %7040 = vmatprep.subr.bf16.mxu0 %v5346
    %7041 = vmatpush2.bf16.msra.mxu0 %v5345
    %7042 = vmatprep.subr.bf16.mxu0 %v5342
    %7043 = vmatpush2.bf16.msra.mxu0 %v5341
    %7044 = vmatprep.mubr.bf16.mxu0 %v230
    %7045 = vmatmul.mubr.bf16.gmra.mxu0 %v229
    %v7046 = vpop.f32.mrf.mxu0
    %v7047 = vadd.f32 %v7006, %v7046
    %v7048 = vpop.f32.mrf.mxu0
    %v7049 = vadd.f32 %v7008, %v7048
    %v7050 = vpop.f32.mrf.mxu0
    %v7051 = vpop.f32.mrf.mxu0
    %7052 = vdwg.mxu0
    %7053 = vmatprep.subr.bf16.mxu0 %v4380
    %7054 = vmatpush1.bf16.msra.mxu0 %v4379
    %7055 = vmatprep.subr.bf16.mxu0 %v4376
    %7056 = vmatpush1.bf16.msra.mxu0 %v4375
    %7057 = vmatprep.subr.bf16.mxu0 %v4372
    %7058 = vmatpush1.bf16.msra.mxu0 %v4371
    %7059 = vmatprep.subr.bf16.mxu0 %v4368
    %7060 = vmatpush1.bf16.msra.mxu0 %v4367
    %7061 = vmatprep.subr.bf16.mxu0 %v4364
    %7062 = vmatpush1.bf16.msra.mxu0 %v4363
    %7063 = vmatprep.subr.bf16.mxu0 %v4360
    %7064 = vmatpush1.bf16.msra.mxu0 %v4359
    %7065 = vmatprep.subr.bf16.mxu0 %v4356
    %7066 = vmatpush1.bf16.msra.mxu0 %v4355
    %7067 = vmatprep.subr.bf16.mxu0 %v4352
    %7068 = vmatpush1.bf16.msra.mxu0 %v4351
    %7069 = vmatprep.subr.bf16.mxu0 %v4412
    %7070 = vmatpush2.bf16.msra.mxu0 %v4411
    %7071 = vmatprep.subr.bf16.mxu0 %v4408
    %7072 = vmatpush2.bf16.msra.mxu0 %v4407
    %7073 = vmatprep.subr.bf16.mxu0 %v4404
    %7074 = vmatpush2.bf16.msra.mxu0 %v4403
    %7075 = vmatprep.subr.bf16.mxu0 %v4400
    %7076 = vmatpush2.bf16.msra.mxu0 %v4399
    %7077 = vmatprep.subr.bf16.mxu0 %v4396
    %7078 = vmatpush2.bf16.msra.mxu0 %v4395
    %7079 = vmatprep.subr.bf16.mxu0 %v4392
    %7080 = vmatpush2.bf16.msra.mxu0 %v4391
    %7081 = vmatprep.subr.bf16.mxu0 %v4388
    %7082 = vmatpush2.bf16.msra.mxu0 %v4387
    %7083 = vmatprep.subr.bf16.mxu0 %v4384
    %7084 = vmatpush2.bf16.msra.mxu0 %v4383
    %7085 = vmatprep.mubr.bf16.mxu0 %v200
    %7086 = vmatmul.mubr.bf16.gmra.mxu0 %v199
    %v7087 = vpop.f32.mrf.mxu0
    %v7088 = vadd.f32 %v1268, %v7087
    %v7089 = vpop.f32.mrf.mxu0
    %v7090 = vadd.f32 %v1272, %v7089
    %v7091 = vpop.f32.mrf.mxu0
    %v7092 = vpop.f32.mrf.mxu0
    %7093 = vdwg.mxu0
    %7094 = vmatprep.subr.bf16.mxu0 %v4444
    %7095 = vmatpush1.bf16.msra.mxu0 %v4443
    %7096 = vmatprep.subr.bf16.mxu0 %v4440
    %7097 = vmatpush1.bf16.msra.mxu0 %v4439
    %7098 = vmatprep.subr.bf16.mxu0 %v4436
    %7099 = vmatpush1.bf16.msra.mxu0 %v4435
    %7100 = vmatprep.subr.bf16.mxu0 %v4432
    %7101 = vmatpush1.bf16.msra.mxu0 %v4431
    %7102 = vmatprep.subr.bf16.mxu0 %v4428
    %7103 = vmatpush1.bf16.msra.mxu0 %v4427
    %7104 = vmatprep.subr.bf16.mxu0 %v4424
    %7105 = vmatpush1.bf16.msra.mxu0 %v4423
    %7106 = vmatprep.subr.bf16.mxu0 %v4420
    %7107 = vmatpush1.bf16.msra.mxu0 %v4419
    %7108 = vmatprep.subr.bf16.mxu0 %v4416
    %7109 = vmatpush1.bf16.msra.mxu0 %v4415
    %7110 = vmatprep.subr.bf16.mxu0 %v4476
    %7111 = vmatpush2.bf16.msra.mxu0 %v4475
    %7112 = vmatprep.subr.bf16.mxu0 %v4472
    %7113 = vmatpush2.bf16.msra.mxu0 %v4471
    %7114 = vmatprep.subr.bf16.mxu0 %v4468
    %7115 = vmatpush2.bf16.msra.mxu0 %v4467
    %7116 = vmatprep.subr.bf16.mxu0 %v4464
    %7117 = vmatpush2.bf16.msra.mxu0 %v4463
    %7118 = vmatprep.subr.bf16.mxu0 %v4460
    %7119 = vmatpush2.bf16.msra.mxu0 %v4459
    %7120 = vmatprep.subr.bf16.mxu0 %v4456
    %7121 = vmatpush2.bf16.msra.mxu0 %v4455
    %7122 = vmatprep.subr.bf16.mxu0 %v4452
    %7123 = vmatpush2.bf16.msra.mxu0 %v4451
    %7124 = vmatprep.subr.bf16.mxu0 %v4448
    %7125 = vmatpush2.bf16.msra.mxu0 %v4447
    %7126 = vmatprep.mubr.bf16.mxu0 %v202
    %7127 = vmatmul.mubr.bf16.gmra.mxu0 %v201
    %v7128 = vpop.f32.mrf.mxu0
    %v7129 = vadd.f32 %v7088, %v7128
    %v7130 = vpop.f32.mrf.mxu0
    %v7131 = vadd.f32 %v7090, %v7130
    %v7132 = vpop.f32.mrf.mxu0
    %v7133 = vpop.f32.mrf.mxu0
    %7134 = vdwg.mxu0
    %7135 = vmatprep.subr.bf16.mxu0 %v4508
    %7136 = vmatpush1.bf16.msra.mxu0 %v4507
    %7137 = vmatprep.subr.bf16.mxu0 %v4504
    %7138 = vmatpush1.bf16.msra.mxu0 %v4503
    %7139 = vmatprep.subr.bf16.mxu0 %v4500
    %7140 = vmatpush1.bf16.msra.mxu0 %v4499
    %7141 = vmatprep.subr.bf16.mxu0 %v4496
    %7142 = vmatpush1.bf16.msra.mxu0 %v4495
    %7143 = vmatprep.subr.bf16.mxu0 %v4492
    %7144 = vmatpush1.bf16.msra.mxu0 %v4491
    %7145 = vmatprep.subr.bf16.mxu0 %v4488
    %7146 = vmatpush1.bf16.msra.mxu0 %v4487
    %7147 = vmatprep.subr.bf16.mxu0 %v4484
    %7148 = vmatpush1.bf16.msra.mxu0 %v4483
    %7149 = vmatprep.subr.bf16.mxu0 %v4480
    %7150 = vmatpush1.bf16.msra.mxu0 %v4479
    %7151 = vmatprep.subr.bf16.mxu0 %v4540
    %7152 = vmatpush2.bf16.msra.mxu0 %v4539
    %7153 = vmatprep.subr.bf16.mxu0 %v4536
    %7154 = vmatpush2.bf16.msra.mxu0 %v4535
    %7155 = vmatprep.subr.bf16.mxu0 %v4532
    %7156 = vmatpush2.bf16.msra.mxu0 %v4531
    %7157 = vmatprep.subr.bf16.mxu0 %v4528
    %7158 = vmatpush2.bf16.msra.mxu0 %v4527
    %7159 = vmatprep.subr.bf16.mxu0 %v4524
    %7160 = vmatpush2.bf16.msra.mxu0 %v4523
    %7161 = vmatprep.subr.bf16.mxu0 %v4520
    %7162 = vmatpush2.bf16.msra.mxu0 %v4519
    %7163 = vmatprep.subr.bf16.mxu0 %v4516
    %7164 = vmatpush2.bf16.msra.mxu0 %v4515
    %7165 = vmatprep.subr.bf16.mxu0 %v4512
    %7166 = vmatpush2.bf16.msra.mxu0 %v4511
    %7167 = vmatprep.mubr.bf16.mxu0 %v204
    %7168 = vmatmul.mubr.bf16.gmra.mxu0 %v203
    %v7169 = vpop.f32.mrf.mxu0
    %v7170 = vadd.f32 %v7129, %v7169
    %v7171 = vpop.f32.mrf.mxu0
    %v7172 = vadd.f32 %v7131, %v7171
    %v7173 = vpop.f32.mrf.mxu0
    %v7174 = vpop.f32.mrf.mxu0
    %7175 = vdwg.mxu0
    %7176 = vmatprep.subr.bf16.mxu0 %v4572
    %7177 = vmatpush1.bf16.msra.mxu0 %v4571
    %7178 = vmatprep.subr.bf16.mxu0 %v4568
    %7179 = vmatpush1.bf16.msra.mxu0 %v4567
    %7180 = vmatprep.subr.bf16.mxu0 %v4564
    %7181 = vmatpush1.bf16.msra.mxu0 %v4563
    %7182 = vmatprep.subr.bf16.mxu0 %v4560
    %7183 = vmatpush1.bf16.msra.mxu0 %v4559
    %7184 = vmatprep.subr.bf16.mxu0 %v4556
    %7185 = vmatpush1.bf16.msra.mxu0 %v4555
    %7186 = vmatprep.subr.bf16.mxu0 %v4552
    %7187 = vmatpush1.bf16.msra.mxu0 %v4551
    %7188 = vmatprep.subr.bf16.mxu0 %v4548
    %7189 = vmatpush1.bf16.msra.mxu0 %v4547
    %7190 = vmatprep.subr.bf16.mxu0 %v4544
    %7191 = vmatpush1.bf16.msra.mxu0 %v4543
    %7192 = vmatprep.subr.bf16.mxu0 %v4604
    %7193 = vmatpush2.bf16.msra.mxu0 %v4603
    %7194 = vmatprep.subr.bf16.mxu0 %v4600
    %7195 = vmatpush2.bf16.msra.mxu0 %v4599
    %7196 = vmatprep.subr.bf16.mxu0 %v4596
    %7197 = vmatpush2.bf16.msra.mxu0 %v4595
    %7198 = vmatprep.subr.bf16.mxu0 %v4592
    %7199 = vmatpush2.bf16.msra.mxu0 %v4591
    %7200 = vmatprep.subr.bf16.mxu0 %v4588
    %7201 = vmatpush2.bf16.msra.mxu0 %v4587
    %7202 = vmatprep.subr.bf16.mxu0 %v4584
    %7203 = vmatpush2.bf16.msra.mxu0 %v4583
    %7204 = vmatprep.subr.bf16.mxu0 %v4580
    %7205 = vmatpush2.bf16.msra.mxu0 %v4579
    %7206 = vmatprep.subr.bf16.mxu0 %v4576
    %7207 = vmatpush2.bf16.msra.mxu0 %v4575
    %7208 = vmatprep.mubr.bf16.mxu0 %v206
    %7209 = vmatmul.mubr.bf16.gmra.mxu0 %v205
    %v7210 = vpop.f32.mrf.mxu0
    %v7211 = vadd.f32 %v7170, %v7210
    %v7212 = vpop.f32.mrf.mxu0
    %v7213 = vadd.f32 %v7172, %v7212
    %v7214 = vpop.f32.mrf.mxu0
    %v7215 = vpop.f32.mrf.mxu0
    %7216 = vdwg.mxu0
    %7217 = vmatprep.subr.bf16.mxu0 %v4636
    %7218 = vmatpush1.bf16.msra.mxu0 %v4635
    %7219 = vmatprep.subr.bf16.mxu0 %v4632
    %7220 = vmatpush1.bf16.msra.mxu0 %v4631
    %7221 = vmatprep.subr.bf16.mxu0 %v4628
    %7222 = vmatpush1.bf16.msra.mxu0 %v4627
    %7223 = vmatprep.subr.bf16.mxu0 %v4624
    %7224 = vmatpush1.bf16.msra.mxu0 %v4623
    %7225 = vmatprep.subr.bf16.mxu0 %v4620
    %7226 = vmatpush1.bf16.msra.mxu0 %v4619
    %7227 = vmatprep.subr.bf16.mxu0 %v4616
    %7228 = vmatpush1.bf16.msra.mxu0 %v4615
    %7229 = vmatprep.subr.bf16.mxu0 %v4612
    %7230 = vmatpush1.bf16.msra.mxu0 %v4611
    %7231 = vmatprep.subr.bf16.mxu0 %v4608
    %7232 = vmatpush1.bf16.msra.mxu0 %v4607
    %7233 = vmatprep.subr.bf16.mxu0 %v4668
    %7234 = vmatpush2.bf16.msra.mxu0 %v4667
    %7235 = vmatprep.subr.bf16.mxu0 %v4664
    %7236 = vmatpush2.bf16.msra.mxu0 %v4663
    %7237 = vmatprep.subr.bf16.mxu0 %v4660
    %7238 = vmatpush2.bf16.msra.mxu0 %v4659
    %7239 = vmatprep.subr.bf16.mxu0 %v4656
    %7240 = vmatpush2.bf16.msra.mxu0 %v4655
    %7241 = vmatprep.subr.bf16.mxu0 %v4652
    %7242 = vmatpush2.bf16.msra.mxu0 %v4651
    %7243 = vmatprep.subr.bf16.mxu0 %v4648
    %7244 = vmatpush2.bf16.msra.mxu0 %v4647
    %7245 = vmatprep.subr.bf16.mxu0 %v4644
    %7246 = vmatpush2.bf16.msra.mxu0 %v4643
    %7247 = vmatprep.subr.bf16.mxu0 %v4640
    %7248 = vmatpush2.bf16.msra.mxu0 %v4639
    %7249 = vmatprep.mubr.bf16.mxu0 %v208
    %7250 = vmatmul.mubr.bf16.gmra.mxu0 %v207
    %v7251 = vpop.f32.mrf.mxu0
    %v7252 = vadd.f32 %v7211, %v7251
    %v7253 = vpop.f32.mrf.mxu0
    %v7254 = vadd.f32 %v7213, %v7253
    %v7255 = vpop.f32.mrf.mxu0
    %v7256 = vpop.f32.mrf.mxu0
    %7257 = vdwg.mxu0
    %7258 = vmatprep.subr.bf16.mxu0 %v4700
    %7259 = vmatpush1.bf16.msra.mxu0 %v4699
    %7260 = vmatprep.subr.bf16.mxu0 %v4696
    %7261 = vmatpush1.bf16.msra.mxu0 %v4695
    %7262 = vmatprep.subr.bf16.mxu0 %v4692
    %7263 = vmatpush1.bf16.msra.mxu0 %v4691
    %7264 = vmatprep.subr.bf16.mxu0 %v4688
    %7265 = vmatpush1.bf16.msra.mxu0 %v4687
    %7266 = vmatprep.subr.bf16.mxu0 %v4684
    %7267 = vmatpush1.bf16.msra.mxu0 %v4683
    %7268 = vmatprep.subr.bf16.mxu0 %v4680
    %7269 = vmatpush1.bf16.msra.mxu0 %v4679
    %7270 = vmatprep.subr.bf16.mxu0 %v4676
    %7271 = vmatpush1.bf16.msra.mxu0 %v4675
    %7272 = vmatprep.subr.bf16.mxu0 %v4672
    %7273 = vmatpush1.bf16.msra.mxu0 %v4671
    %7274 = vmatprep.subr.bf16.mxu0 %v4732
    %7275 = vmatpush2.bf16.msra.mxu0 %v4731
    %7276 = vmatprep.subr.bf16.mxu0 %v4728
    %7277 = vmatpush2.bf16.msra.mxu0 %v4727
    %7278 = vmatprep.subr.bf16.mxu0 %v4724
    %7279 = vmatpush2.bf16.msra.mxu0 %v4723
    %7280 = vmatprep.subr.bf16.mxu0 %v4720
    %7281 = vmatpush2.bf16.msra.mxu0 %v4719
    %7282 = vmatprep.subr.bf16.mxu0 %v4716
    %7283 = vmatpush2.bf16.msra.mxu0 %v4715
    %7284 = vmatprep.subr.bf16.mxu0 %v4712
    %7285 = vmatpush2.bf16.msra.mxu0 %v4711
    %7286 = vmatprep.subr.bf16.mxu0 %v4708
    %7287 = vmatpush2.bf16.msra.mxu0 %v4707
    %7288 = vmatprep.subr.bf16.mxu0 %v4704
    %7289 = vmatpush2.bf16.msra.mxu0 %v4703
    %7290 = vmatprep.mubr.bf16.mxu0 %v210
    %7291 = vmatmul.mubr.bf16.gmra.mxu0 %v209
    %v7292 = vpop.f32.mrf.mxu0
    %v7293 = vadd.f32 %v7252, %v7292
    %v7294 = vpop.f32.mrf.mxu0
    %v7295 = vadd.f32 %v7254, %v7294
    %v7296 = vpop.f32.mrf.mxu0
    %v7297 = vpop.f32.mrf.mxu0
    %7298 = vdwg.mxu0
    %7299 = vmatprep.subr.bf16.mxu0 %v4764
    %7300 = vmatpush1.bf16.msra.mxu0 %v4763
    %7301 = vmatprep.subr.bf16.mxu0 %v4760
    %7302 = vmatpush1.bf16.msra.mxu0 %v4759
    %7303 = vmatprep.subr.bf16.mxu0 %v4756
    %7304 = vmatpush1.bf16.msra.mxu0 %v4755
    %7305 = vmatprep.subr.bf16.mxu0 %v4752
    %7306 = vmatpush1.bf16.msra.mxu0 %v4751
    %7307 = vmatprep.subr.bf16.mxu0 %v4748
    %7308 = vmatpush1.bf16.msra.mxu0 %v4747
    %7309 = vmatprep.subr.bf16.mxu0 %v4744
    %7310 = vmatpush1.bf16.msra.mxu0 %v4743
    %7311 = vmatprep.subr.bf16.mxu0 %v4740
    %7312 = vmatpush1.bf16.msra.mxu0 %v4739
    %7313 = vmatprep.subr.bf16.mxu0 %v4736
    %7314 = vmatpush1.bf16.msra.mxu0 %v4735
    %7315 = vmatprep.subr.bf16.mxu0 %v4796
    %7316 = vmatpush2.bf16.msra.mxu0 %v4795
    %7317 = vmatprep.subr.bf16.mxu0 %v4792
    %7318 = vmatpush2.bf16.msra.mxu0 %v4791
    %7319 = vmatprep.subr.bf16.mxu0 %v4788
    %7320 = vmatpush2.bf16.msra.mxu0 %v4787
    %7321 = vmatprep.subr.bf16.mxu0 %v4784
    %7322 = vmatpush2.bf16.msra.mxu0 %v4783
    %7323 = vmatprep.subr.bf16.mxu0 %v4780
    %7324 = vmatpush2.bf16.msra.mxu0 %v4779
    %7325 = vmatprep.subr.bf16.mxu0 %v4776
    %7326 = vmatpush2.bf16.msra.mxu0 %v4775
    %7327 = vmatprep.subr.bf16.mxu0 %v4772
    %7328 = vmatpush2.bf16.msra.mxu0 %v4771
    %7329 = vmatprep.subr.bf16.mxu0 %v4768
    %7330 = vmatpush2.bf16.msra.mxu0 %v4767
    %7331 = vmatprep.mubr.bf16.mxu0 %v212
    %7332 = vmatmul.mubr.bf16.gmra.mxu0 %v211
    %v7333 = vpop.f32.mrf.mxu0
    %v7334 = vadd.f32 %v7293, %v7333
    %v7335 = vpop.f32.mrf.mxu0
    %v7336 = vadd.f32 %v7295, %v7335
    %v7337 = vpop.f32.mrf.mxu0
    %v7338 = vpop.f32.mrf.mxu0
    %7339 = vdwg.mxu0
    %7340 = vmatprep.subr.bf16.mxu0 %v4828
    %7341 = vmatpush1.bf16.msra.mxu0 %v4827
    %7342 = vmatprep.subr.bf16.mxu0 %v4824
    %7343 = vmatpush1.bf16.msra.mxu0 %v4823
    %7344 = vmatprep.subr.bf16.mxu0 %v4820
    %7345 = vmatpush1.bf16.msra.mxu0 %v4819
    %7346 = vmatprep.subr.bf16.mxu0 %v4816
    %7347 = vmatpush1.bf16.msra.mxu0 %v4815
    %7348 = vmatprep.subr.bf16.mxu0 %v4812
    %7349 = vmatpush1.bf16.msra.mxu0 %v4811
    %7350 = vmatprep.subr.bf16.mxu0 %v4808
    %7351 = vmatpush1.bf16.msra.mxu0 %v4807
    %7352 = vmatprep.subr.bf16.mxu0 %v4804
    %7353 = vmatpush1.bf16.msra.mxu0 %v4803
    %7354 = vmatprep.subr.bf16.mxu0 %v4800
    %7355 = vmatpush1.bf16.msra.mxu0 %v4799
    %7356 = vmatprep.subr.bf16.mxu0 %v4860
    %7357 = vmatpush2.bf16.msra.mxu0 %v4859
    %7358 = vmatprep.subr.bf16.mxu0 %v4856
    %7359 = vmatpush2.bf16.msra.mxu0 %v4855
    %7360 = vmatprep.subr.bf16.mxu0 %v4852
    %7361 = vmatpush2.bf16.msra.mxu0 %v4851
    %7362 = vmatprep.subr.bf16.mxu0 %v4848
    %7363 = vmatpush2.bf16.msra.mxu0 %v4847
    %7364 = vmatprep.subr.bf16.mxu0 %v4844
    %7365 = vmatpush2.bf16.msra.mxu0 %v4843
    %7366 = vmatprep.subr.bf16.mxu0 %v4840
    %7367 = vmatpush2.bf16.msra.mxu0 %v4839
    %7368 = vmatprep.subr.bf16.mxu0 %v4836
    %7369 = vmatpush2.bf16.msra.mxu0 %v4835
    %7370 = vmatprep.subr.bf16.mxu0 %v4832
    %7371 = vmatpush2.bf16.msra.mxu0 %v4831
    %7372 = vmatprep.mubr.bf16.mxu0 %v214
    %7373 = vmatmul.mubr.bf16.gmra.mxu0 %v213
    %v7374 = vpop.f32.mrf.mxu0
    %v7375 = vadd.f32 %v7334, %v7374
    %v7376 = vpop.f32.mrf.mxu0
    %v7377 = vadd.f32 %v7336, %v7376
    %v7378 = vpop.f32.mrf.mxu0
    %v7379 = vpop.f32.mrf.mxu0
    %7380 = vdwg.mxu0
    %7381 = vmatprep.subr.bf16.mxu0 %v4892
    %7382 = vmatpush1.bf16.msra.mxu0 %v4891
    %7383 = vmatprep.subr.bf16.mxu0 %v4888
    %7384 = vmatpush1.bf16.msra.mxu0 %v4887
    %7385 = vmatprep.subr.bf16.mxu0 %v4884
    %7386 = vmatpush1.bf16.msra.mxu0 %v4883
    %7387 = vmatprep.subr.bf16.mxu0 %v4880
    %7388 = vmatpush1.bf16.msra.mxu0 %v4879
    %7389 = vmatprep.subr.bf16.mxu0 %v4876
    %7390 = vmatpush1.bf16.msra.mxu0 %v4875
    %7391 = vmatprep.subr.bf16.mxu0 %v4872
    %7392 = vmatpush1.bf16.msra.mxu0 %v4871
    %7393 = vmatprep.subr.bf16.mxu0 %v4868
    %7394 = vmatpush1.bf16.msra.mxu0 %v4867
    %7395 = vmatprep.subr.bf16.mxu0 %v4864
    %7396 = vmatpush1.bf16.msra.mxu0 %v4863
    %7397 = vmatprep.subr.bf16.mxu0 %v4924
    %7398 = vmatpush2.bf16.msra.mxu0 %v4923
    %7399 = vmatprep.subr.bf16.mxu0 %v4920
    %7400 = vmatpush2.bf16.msra.mxu0 %v4919
    %7401 = vmatprep.subr.bf16.mxu0 %v4916
    %7402 = vmatpush2.bf16.msra.mxu0 %v4915
    %7403 = vmatprep.subr.bf16.mxu0 %v4912
    %7404 = vmatpush2.bf16.msra.mxu0 %v4911
    %7405 = vmatprep.subr.bf16.mxu0 %v4908
    %7406 = vmatpush2.bf16.msra.mxu0 %v4907
    %7407 = vmatprep.subr.bf16.mxu0 %v4904
    %7408 = vmatpush2.bf16.msra.mxu0 %v4903
    %7409 = vmatprep.subr.bf16.mxu0 %v4900
    %7410 = vmatpush2.bf16.msra.mxu0 %v4899
    %7411 = vmatprep.subr.bf16.mxu0 %v4896
    %7412 = vmatpush2.bf16.msra.mxu0 %v4895
    %7413 = vmatprep.mubr.bf16.mxu0 %v216
    %7414 = vmatmul.mubr.bf16.gmra.mxu0 %v215
    %v7415 = vpop.f32.mrf.mxu0
    %v7416 = vadd.f32 %v7375, %v7415
    %v7417 = vpop.f32.mrf.mxu0
    %v7418 = vadd.f32 %v7377, %v7417
    %v7419 = vpop.f32.mrf.mxu0
    %v7420 = vpop.f32.mrf.mxu0
    %7421 = vdwg.mxu0
    %7422 = vmatprep.subr.bf16.mxu0 %v4956
    %7423 = vmatpush1.bf16.msra.mxu0 %v4955
    %7424 = vmatprep.subr.bf16.mxu0 %v4952
    %7425 = vmatpush1.bf16.msra.mxu0 %v4951
    %7426 = vmatprep.subr.bf16.mxu0 %v4948
    %7427 = vmatpush1.bf16.msra.mxu0 %v4947
    %7428 = vmatprep.subr.bf16.mxu0 %v4944
    %7429 = vmatpush1.bf16.msra.mxu0 %v4943
    %7430 = vmatprep.subr.bf16.mxu0 %v4940
    %7431 = vmatpush1.bf16.msra.mxu0 %v4939
    %7432 = vmatprep.subr.bf16.mxu0 %v4936
    %7433 = vmatpush1.bf16.msra.mxu0 %v4935
    %7434 = vmatprep.subr.bf16.mxu0 %v4932
    %7435 = vmatpush1.bf16.msra.mxu0 %v4931
    %7436 = vmatprep.subr.bf16.mxu0 %v4928
    %7437 = vmatpush1.bf16.msra.mxu0 %v4927
    %7438 = vmatprep.subr.bf16.mxu0 %v4988
    %7439 = vmatpush2.bf16.msra.mxu0 %v4987
    %7440 = vmatprep.subr.bf16.mxu0 %v4984
    %7441 = vmatpush2.bf16.msra.mxu0 %v4983
    %7442 = vmatprep.subr.bf16.mxu0 %v4980
    %7443 = vmatpush2.bf16.msra.mxu0 %v4979
    %7444 = vmatprep.subr.bf16.mxu0 %v4976
    %7445 = vmatpush2.bf16.msra.mxu0 %v4975
    %7446 = vmatprep.subr.bf16.mxu0 %v4972
    %7447 = vmatpush2.bf16.msra.mxu0 %v4971
    %7448 = vmatprep.subr.bf16.mxu0 %v4968
    %7449 = vmatpush2.bf16.msra.mxu0 %v4967
    %7450 = vmatprep.subr.bf16.mxu0 %v4964
    %7451 = vmatpush2.bf16.msra.mxu0 %v4963
    %7452 = vmatprep.subr.bf16.mxu0 %v4960
    %7453 = vmatpush2.bf16.msra.mxu0 %v4959
    %7454 = vmatprep.mubr.bf16.mxu0 %v218
    %7455 = vmatmul.mubr.bf16.gmra.mxu0 %v217
    %v7456 = vpop.f32.mrf.mxu0
    %v7457 = vadd.f32 %v7416, %v7456
    %v7458 = vpop.f32.mrf.mxu0
    %v7459 = vadd.f32 %v7418, %v7458
    %v7460 = vpop.f32.mrf.mxu0
    %v7461 = vpop.f32.mrf.mxu0
    %7462 = vdwg.mxu0
    %7463 = vmatprep.subr.bf16.mxu0 %v5020
    %7464 = vmatpush1.bf16.msra.mxu0 %v5019
    %7465 = vmatprep.subr.bf16.mxu0 %v5016
    %7466 = vmatpush1.bf16.msra.mxu0 %v5015
    %7467 = vmatprep.subr.bf16.mxu0 %v5012
    %7468 = vmatpush1.bf16.msra.mxu0 %v5011
    %7469 = vmatprep.subr.bf16.mxu0 %v5008
    %7470 = vmatpush1.bf16.msra.mxu0 %v5007
    %7471 = vmatprep.subr.bf16.mxu0 %v5004
    %7472 = vmatpush1.bf16.msra.mxu0 %v5003
    %7473 = vmatprep.subr.bf16.mxu0 %v5000
    %7474 = vmatpush1.bf16.msra.mxu0 %v4999
    %7475 = vmatprep.subr.bf16.mxu0 %v4996
    %7476 = vmatpush1.bf16.msra.mxu0 %v4995
    %7477 = vmatprep.subr.bf16.mxu0 %v4992
    %7478 = vmatpush1.bf16.msra.mxu0 %v4991
    %7479 = vmatprep.subr.bf16.mxu0 %v5052
    %7480 = vmatpush2.bf16.msra.mxu0 %v5051
    %7481 = vmatprep.subr.bf16.mxu0 %v5048
    %7482 = vmatpush2.bf16.msra.mxu0 %v5047
    %7483 = vmatprep.subr.bf16.mxu0 %v5044
    %7484 = vmatpush2.bf16.msra.mxu0 %v5043
    %7485 = vmatprep.subr.bf16.mxu0 %v5040
    %7486 = vmatpush2.bf16.msra.mxu0 %v5039
    %7487 = vmatprep.subr.bf16.mxu0 %v5036
    %7488 = vmatpush2.bf16.msra.mxu0 %v5035
    %7489 = vmatprep.subr.bf16.mxu0 %v5032
    %7490 = vmatpush2.bf16.msra.mxu0 %v5031
    %7491 = vmatprep.subr.bf16.mxu0 %v5028
    %7492 = vmatpush2.bf16.msra.mxu0 %v5027
    %7493 = vmatprep.subr.bf16.mxu0 %v5024
    %7494 = vmatpush2.bf16.msra.mxu0 %v5023
    %7495 = vmatprep.mubr.bf16.mxu0 %v220
    %7496 = vmatmul.mubr.bf16.gmra.mxu0 %v219
    %v7497 = vpop.f32.mrf.mxu0
    %v7498 = vadd.f32 %v7457, %v7497
    %v7499 = vpop.f32.mrf.mxu0
    %v7500 = vadd.f32 %v7459, %v7499
    %v7501 = vpop.f32.mrf.mxu0
    %v7502 = vpop.f32.mrf.mxu0
    %7503 = vdwg.mxu0
    %7504 = vmatprep.subr.bf16.mxu0 %v5084
    %7505 = vmatpush1.bf16.msra.mxu0 %v5083
    %7506 = vmatprep.subr.bf16.mxu0 %v5080
    %7507 = vmatpush1.bf16.msra.mxu0 %v5079
    %7508 = vmatprep.subr.bf16.mxu0 %v5076
    %7509 = vmatpush1.bf16.msra.mxu0 %v5075
    %7510 = vmatprep.subr.bf16.mxu0 %v5072
    %7511 = vmatpush1.bf16.msra.mxu0 %v5071
    %7512 = vmatprep.subr.bf16.mxu0 %v5068
    %7513 = vmatpush1.bf16.msra.mxu0 %v5067
    %7514 = vmatprep.subr.bf16.mxu0 %v5064
    %7515 = vmatpush1.bf16.msra.mxu0 %v5063
    %7516 = vmatprep.subr.bf16.mxu0 %v5060
    %7517 = vmatpush1.bf16.msra.mxu0 %v5059
    %7518 = vmatprep.subr.bf16.mxu0 %v5056
    %7519 = vmatpush1.bf16.msra.mxu0 %v5055
    %7520 = vmatprep.subr.bf16.mxu0 %v5116
    %7521 = vmatpush2.bf16.msra.mxu0 %v5115
    %7522 = vmatprep.subr.bf16.mxu0 %v5112
    %7523 = vmatpush2.bf16.msra.mxu0 %v5111
    %7524 = vmatprep.subr.bf16.mxu0 %v5108
    %7525 = vmatpush2.bf16.msra.mxu0 %v5107
    %7526 = vmatprep.subr.bf16.mxu0 %v5104
    %7527 = vmatpush2.bf16.msra.mxu0 %v5103
    %7528 = vmatprep.subr.bf16.mxu0 %v5100
    %7529 = vmatpush2.bf16.msra.mxu0 %v5099
    %7530 = vmatprep.subr.bf16.mxu0 %v5096
    %7531 = vmatpush2.bf16.msra.mxu0 %v5095
    %7532 = vmatprep.subr.bf16.mxu0 %v5092
    %7533 = vmatpush2.bf16.msra.mxu0 %v5091
    %7534 = vmatprep.subr.bf16.mxu0 %v5088
    %7535 = vmatpush2.bf16.msra.mxu0 %v5087
    %7536 = vmatprep.mubr.bf16.mxu0 %v222
    %7537 = vmatmul.mubr.bf16.gmra.mxu0 %v221
    %v7538 = vpop.f32.mrf.mxu0
    %v7539 = vadd.f32 %v7498, %v7538
    %v7540 = vpop.f32.mrf.mxu0
    %v7541 = vadd.f32 %v7500, %v7540
    %v7542 = vpop.f32.mrf.mxu0
    %v7543 = vpop.f32.mrf.mxu0
    %7544 = vdwg.mxu0
    %7545 = vmatprep.subr.bf16.mxu0 %v5148
    %7546 = vmatpush1.bf16.msra.mxu0 %v5147
    %7547 = vmatprep.subr.bf16.mxu0 %v5144
    %7548 = vmatpush1.bf16.msra.mxu0 %v5143
    %7549 = vmatprep.subr.bf16.mxu0 %v5140
    %7550 = vmatpush1.bf16.msra.mxu0 %v5139
    %7551 = vmatprep.subr.bf16.mxu0 %v5136
    %7552 = vmatpush1.bf16.msra.mxu0 %v5135
    %7553 = vmatprep.subr.bf16.mxu0 %v5132
    %7554 = vmatpush1.bf16.msra.mxu0 %v5131
    %7555 = vmatprep.subr.bf16.mxu0 %v5128
    %7556 = vmatpush1.bf16.msra.mxu0 %v5127
    %7557 = vmatprep.subr.bf16.mxu0 %v5124
    %7558 = vmatpush1.bf16.msra.mxu0 %v5123
    %7559 = vmatprep.subr.bf16.mxu0 %v5120
    %7560 = vmatpush1.bf16.msra.mxu0 %v5119
    %7561 = vmatprep.subr.bf16.mxu0 %v5180
    %7562 = vmatpush2.bf16.msra.mxu0 %v5179
    %7563 = vmatprep.subr.bf16.mxu0 %v5176
    %7564 = vmatpush2.bf16.msra.mxu0 %v5175
    %7565 = vmatprep.subr.bf16.mxu0 %v5172
    %7566 = vmatpush2.bf16.msra.mxu0 %v5171
    %7567 = vmatprep.subr.bf16.mxu0 %v5168
    %7568 = vmatpush2.bf16.msra.mxu0 %v5167
    %7569 = vmatprep.subr.bf16.mxu0 %v5164
    %7570 = vmatpush2.bf16.msra.mxu0 %v5163
    %7571 = vmatprep.subr.bf16.mxu0 %v5160
    %7572 = vmatpush2.bf16.msra.mxu0 %v5159
    %7573 = vmatprep.subr.bf16.mxu0 %v5156
    %7574 = vmatpush2.bf16.msra.mxu0 %v5155
    %7575 = vmatprep.subr.bf16.mxu0 %v5152
    %7576 = vmatpush2.bf16.msra.mxu0 %v5151
    %7577 = vmatprep.mubr.bf16.mxu0 %v224
    %7578 = vmatmul.mubr.bf16.gmra.mxu0 %v223
    %v7579 = vpop.f32.mrf.mxu0
    %v7580 = vadd.f32 %v7539, %v7579
    %v7581 = vpop.f32.mrf.mxu0
    %v7582 = vadd.f32 %v7541, %v7581
    %v7583 = vpop.f32.mrf.mxu0
    %v7584 = vpop.f32.mrf.mxu0
    %7585 = vdwg.mxu0
    %7586 = vmatprep.subr.bf16.mxu0 %v5212
    %7587 = vmatpush1.bf16.msra.mxu0 %v5211
    %7588 = vmatprep.subr.bf16.mxu0 %v5208
    %7589 = vmatpush1.bf16.msra.mxu0 %v5207
    %7590 = vmatprep.subr.bf16.mxu0 %v5204
    %7591 = vmatpush1.bf16.msra.mxu0 %v5203
    %7592 = vmatprep.subr.bf16.mxu0 %v5200
    %7593 = vmatpush1.bf16.msra.mxu0 %v5199
    %7594 = vmatprep.subr.bf16.mxu0 %v5196
    %7595 = vmatpush1.bf16.msra.mxu0 %v5195
    %7596 = vmatprep.subr.bf16.mxu0 %v5192
    %7597 = vmatpush1.bf16.msra.mxu0 %v5191
    %7598 = vmatprep.subr.bf16.mxu0 %v5188
    %7599 = vmatpush1.bf16.msra.mxu0 %v5187
    %7600 = vmatprep.subr.bf16.mxu0 %v5184
    %7601 = vmatpush1.bf16.msra.mxu0 %v5183
    %7602 = vmatprep.subr.bf16.mxu0 %v5244
    %7603 = vmatpush2.bf16.msra.mxu0 %v5243
    %7604 = vmatprep.subr.bf16.mxu0 %v5240
    %7605 = vmatpush2.bf16.msra.mxu0 %v5239
    %7606 = vmatprep.subr.bf16.mxu0 %v5236
    %7607 = vmatpush2.bf16.msra.mxu0 %v5235
    %7608 = vmatprep.subr.bf16.mxu0 %v5232
    %7609 = vmatpush2.bf16.msra.mxu0 %v5231
    %7610 = vmatprep.subr.bf16.mxu0 %v5228
    %7611 = vmatpush2.bf16.msra.mxu0 %v5227
    %7612 = vmatprep.subr.bf16.mxu0 %v5224
    %7613 = vmatpush2.bf16.msra.mxu0 %v5223
    %7614 = vmatprep.subr.bf16.mxu0 %v5220
    %7615 = vmatpush2.bf16.msra.mxu0 %v5219
    %7616 = vmatprep.subr.bf16.mxu0 %v5216
    %7617 = vmatpush2.bf16.msra.mxu0 %v5215
    %7618 = vmatprep.mubr.bf16.mxu0 %v226
    %7619 = vmatmul.mubr.bf16.gmra.mxu0 %v225
    %v7620 = vpop.f32.mrf.mxu0
    %v7621 = vadd.f32 %v7580, %v7620
    %v7622 = vpop.f32.mrf.mxu0
    %v7623 = vadd.f32 %v7582, %v7622
    %v7624 = vpop.f32.mrf.mxu0
    %v7625 = vpop.f32.mrf.mxu0
    %7626 = vdwg.mxu0
    %7627 = vmatprep.subr.bf16.mxu0 %v5276
    %7628 = vmatpush1.bf16.msra.mxu0 %v5275
    %7629 = vmatprep.subr.bf16.mxu0 %v5272
    %7630 = vmatpush1.bf16.msra.mxu0 %v5271
    %7631 = vmatprep.subr.bf16.mxu0 %v5268
    %7632 = vmatpush1.bf16.msra.mxu0 %v5267
    %7633 = vmatprep.subr.bf16.mxu0 %v5264
    %7634 = vmatpush1.bf16.msra.mxu0 %v5263
    %7635 = vmatprep.subr.bf16.mxu0 %v5260
    %7636 = vmatpush1.bf16.msra.mxu0 %v5259
    %7637 = vmatprep.subr.bf16.mxu0 %v5256
    %7638 = vmatpush1.bf16.msra.mxu0 %v5255
    %7639 = vmatprep.subr.bf16.mxu0 %v5252
    %7640 = vmatpush1.bf16.msra.mxu0 %v5251
    %7641 = vmatprep.subr.bf16.mxu0 %v5248
    %7642 = vmatpush1.bf16.msra.mxu0 %v5247
    %7643 = vmatprep.subr.bf16.mxu0 %v5308
    %7644 = vmatpush2.bf16.msra.mxu0 %v5307
    %7645 = vmatprep.subr.bf16.mxu0 %v5304
    %7646 = vmatpush2.bf16.msra.mxu0 %v5303
    %7647 = vmatprep.subr.bf16.mxu0 %v5300
    %7648 = vmatpush2.bf16.msra.mxu0 %v5299
    %7649 = vmatprep.subr.bf16.mxu0 %v5296
    %7650 = vmatpush2.bf16.msra.mxu0 %v5295
    %7651 = vmatprep.subr.bf16.mxu0 %v5292
    %7652 = vmatpush2.bf16.msra.mxu0 %v5291
    %7653 = vmatprep.subr.bf16.mxu0 %v5288
    %7654 = vmatpush2.bf16.msra.mxu0 %v5287
    %7655 = vmatprep.subr.bf16.mxu0 %v5284
    %7656 = vmatpush2.bf16.msra.mxu0 %v5283
    %7657 = vmatprep.subr.bf16.mxu0 %v5280
    %7658 = vmatpush2.bf16.msra.mxu0 %v5279
    %7659 = vmatprep.mubr.bf16.mxu0 %v228
    %7660 = vmatmul.mubr.bf16.gmra.mxu0 %v227
    %v7661 = vpop.f32.mrf.mxu0
    %v7662 = vadd.f32 %v7621, %v7661
    %v7663 = vpop.f32.mrf.mxu0
    %v7664 = vadd.f32 %v7623, %v7663
    %v7665 = vpop.f32.mrf.mxu0
    %v7666 = vpop.f32.mrf.mxu0
    %7667 = vdwg.mxu0
    %7668 = vmatprep.subr.bf16.mxu0 %v5340
    %7669 = vmatpush1.bf16.msra.mxu0 %v5339
    %7670 = vmatprep.subr.bf16.mxu0 %v5336
    %7671 = vmatpush1.bf16.msra.mxu0 %v5335
    %7672 = vmatprep.subr.bf16.mxu0 %v5332
    %7673 = vmatpush1.bf16.msra.mxu0 %v5331
    %7674 = vmatprep.subr.bf16.mxu0 %v5328
    %7675 = vmatpush1.bf16.msra.mxu0 %v5327
    %7676 = vmatprep.subr.bf16.mxu0 %v5324
    %7677 = vmatpush1.bf16.msra.mxu0 %v5323
    %7678 = vmatprep.subr.bf16.mxu0 %v5320
    %7679 = vmatpush1.bf16.msra.mxu0 %v5319
    %7680 = vmatprep.subr.bf16.mxu0 %v5316
    %7681 = vmatpush1.bf16.msra.mxu0 %v5315
    %7682 = vmatprep.subr.bf16.mxu0 %v5312
    %7683 = vmatpush1.bf16.msra.mxu0 %v5311
    %7684 = vmatprep.subr.bf16.mxu0 %v5372
    %7685 = vmatpush2.bf16.msra.mxu0 %v5371
    %7686 = vmatprep.subr.bf16.mxu0 %v5368
    %7687 = vmatpush2.bf16.msra.mxu0 %v5367
    %7688 = vmatprep.subr.bf16.mxu0 %v5364
    %7689 = vmatpush2.bf16.msra.mxu0 %v5363
    %7690 = vmatprep.subr.bf16.mxu0 %v5360
    %7691 = vmatpush2.bf16.msra.mxu0 %v5359
    %7692 = vmatprep.subr.bf16.mxu0 %v5356
    %7693 = vmatpush2.bf16.msra.mxu0 %v5355
    %7694 = vmatprep.subr.bf16.mxu0 %v5352
    %7695 = vmatpush2.bf16.msra.mxu0 %v5351
    %7696 = vmatprep.subr.bf16.mxu0 %v5348
    %7697 = vmatpush2.bf16.msra.mxu0 %v5347
    %7698 = vmatprep.subr.bf16.mxu0 %v5344
    %7699 = vmatpush2.bf16.msra.mxu0 %v5343
    %7700 = vmatprep.mubr.bf16.mxu0 %v230
    %7701 = vmatmul.mubr.bf16.gmra.mxu0 %v229
    %v7702 = vpop.f32.mrf.mxu0
    %v7703 = vadd.f32 %v7662, %v7702
    %v7704 = vpop.f32.mrf.mxu0
    %v7705 = vadd.f32 %v7664, %v7704
    %v7706 = vpop.f32.mrf.mxu0
    %v7707 = vpop.f32.mrf.mxu0
    %7708 = vdwg.mxu0
    %v7713 = vcombine.low %v7047, %v7049
    %v7714 = vcombine.low %v7703, %v7705
    %v7716 = vunpack.c.l.s4 1983009808
    %v7717 = vunpack.c.0.s8 %v7716
    %v7718 = vlaneseq
    %v7719 = vshrl.u32 %v7718, 7
    %v7720 = vsub.s32 %v7717, %v7719
    %v7721 = vrot.slane %v7713, %v7720
    %v7723 = vunpack.c.l.s4 1983009808
    %v7724 = vunpack.c.0.s8 %v7723
    %v7725 = vlaneseq
    %v7726 = vshrl.u32 %v7725, 7
    %v7727 = vsub.s32 %v7724, %v7726
    %v7728 = vrot.slane %v7714, %v7727
    %v7729 = vcombine.low %v7721, %v7728
    %vm7731 = vcmask 1041408
    %vm7732 = vcmask 1043458
    %vm7733 = vmor %vm7732, %vm7731
    %vm7734 = vcmask 1045508
    %vm7735 = vmor %vm7734, %vm7733
    %vm7736 = vcmask 162822
    %vm7737 = vmor %vm7736, %vm7735
    %7738 = vst.msk [vmem:[#allocation2] sm:$0xff] %vm7737, %v7729
    // Predicated region
    $region14: #{fc_forward.1} parent=1 // pred_check
      _
    $region15: #{fc_forward.1} parent=1 // pred_check_branch
      %7740 = sbr.rel (0) target = $region17
    $region16: #{fc_forward.1} parent=1 // pred_region
      %s7742 = ssub.s32 128, 128
      %7743 = vsyncadd [#allocation3], %s7742
      %s7745 = sshll.u32 [#allocation2], 4
      %s7746 = int_to_ptr.vmem [resolvable:$true] %s7745
      %7748 = dma.vmem_to_hbm [thread:$0]  %s7746, 128, %s3, [#allocation3]
    $region17: #{fc_forward.1} parent=1 // pred_fallthru
      _
    // Predicated region
    $region18: #{fc_forward.1} parent=1 // pred_check
      _
    $region19: #{fc_forward.1} parent=1 // pred_check_branch
      %7750 = sbr.rel (0) target = $region21
    $region20: #{fc_forward.1} parent=1 // pred_region
      %7751 = dma.done [#allocation3], 128
    $region21: #{fc_forward.1} parent=1 // pred_fallthru
      _
    %7752 = vsyncpa [#allocation3], 1

</llo_original>
